<compile_context>
chip_gen: v5e
topology: v5e:2x2
jax: 0.10.0
libtpu: 0.0.40
codegen_flags: <defaults>
</compile_context>

<pallas_src>
import math
import jax
import jax.numpy as jnp
from jax.experimental import pallas as pl
from jax.experimental.pallas import tpu as pltpu


# ----------------------------------------------------------------------------
# Pallas kernel: whole mixing hot path for one lane-tile of the flattened batch.
# All per-sample tensors are (features, block_b): batch on lanes, features on sublanes.
# ----------------------------------------------------------------------------
def _graphmix_kernel(
    qs_ref, st_ref, alive_ref, hid_ref, rew_ref,
    encbd_w_ref, encbd_b_ref, wqk_ref,            # block-diag obs encoder + fused Q/K projection
    hcat_w_ref, hcat_b_ref,                       # fused hypernet/V first layers (2HE+2E, S)
    w2bd_ref, b2_ref,                             # fused (block-diag) hypernet second layers
    vw2c_ref, vb2_ref,                            # V(s) second layer as (E,1) column + scalar
    out_ref):
  f32 = jnp.float32

  n = qs_ref.shape[0]
  nd = wqk_ref.shape[1]                 # n * enc_dim
  d = nd // n                           # enc_dim
  E = vw2c_ref.shape[0]                 # embed_dim
  HE2 = w2bd_ref.shape[1]               # 2 * hypernet_embed
  Bb = qs_ref.shape[1]
  inv_sqrt_d = 1.0 / math.sqrt(float(d))

  qs = qs_ref[...]                      # (n, Bb)
  s = st_ref[...]                       # (S, Bb)
  alive = alive_ref[...]                # (n, Bb)
  rew = rew_ref[...]                    # (1, Bb)

  # --- obs encoder + attention projections: 2 fused block-diagonal matmuls, bf16 MXU feed ---
  enc = jnp.maximum(
      jnp.dot(encbd_w_ref[...], hid_ref[...], preferred_element_type=f32)
      + encbd_b_ref[...], 0.0)                                      # (n*d, Bb) f32
  qk = jnp.dot(wqk_ref[...], enc, preferred_element_type=f32)       # (2*n*d, Bb)
  q3 = qk[0:nd, :].reshape(n, d, Bb)                                # (n, d, Bb)
  k3 = qk[nd:2 * nd, :].reshape(n, d, Bb)                           # (n, d, Bb)

  # --- state-conditioned hypernetworks: fused first layer, fused block-diag second layer ---
  hcat = jnp.dot(hcat_w_ref[...], s, preferred_element_type=f32) + hcat_b_ref[...]
  gh_fh = jnp.maximum(hcat[0:HE2, :], 0.0)                          # relu(g_h ; f_h)  (2HE, Bb)
  b1 = hcat[HE2:HE2 + E, :]                                         # GNN layer bias (no relu)
  v_h = jnp.maximum(hcat[HE2 + E:HE2 + 2 * E, :], 0.0)              # V(s) hidden
  w1wf = jnp.abs(jnp.dot(w2bd_ref[...], gh_fh, preferred_element_type=f32) + b2_ref[...])
  w1 = w1wf[0:E, :]                                                 # |GNN layer weight| (E, Bb)
  wf = w1wf[E:2 * E, :]                                             # |readout weight|   (E, Bb)
  v = jnp.sum(v_h * vw2c_ref[...], axis=0, keepdims=True) + vb2_ref[...]   # (1, Bb)

  # --- masked attention -> adjacency -> GIN aggregation + abs-weight readout ---------------
  # (n, Bb)/(n, d, Bb)-dense blocks; reductions go to the XLU on axis 0/1.
  neg = -1.0e10
  per_agent_rows = []
  for i in range(n):
    qi = q3[i]                                                      # (d, Bb)
    logits = jnp.sum(k3 * qi, axis=1) * inv_sqrt_d                  # (n, Bb): logits over j
    mask = alive * alive[i:i + 1, :]                                # (n, Bb)
    logits = logits + neg * (1.0 - mask)
    m = jnp.max(logits, axis=0, keepdims=True)                      # (1, Bb)
    ex = jnp.exp(logits - m)
    adj = ex * (1.0 / jnp.sum(ex, axis=0, keepdims=True)) * mask    # (n, Bb)
    agg = qs[i:i + 1, :] + jnp.sum(adj * qs, axis=0, keepdims=True) # (1, Bb)
    h = agg * w1 + b1                                               # (E, Bb)
    h = jnp.where(h > 0.0, h, 0.01 * h)                             # leaky_relu
    per_agent_rows.append(jnp.sum(h * wf, axis=0, keepdims=True))   # (1, Bb)
  per_agent = jnp.concatenate(per_agent_rows, axis=0)               # (n, Bb)

  y = jnp.sum(per_agent, axis=0, keepdims=True)                     # (1, Bb)
  pm = jnp.max(per_agent, axis=0, keepdims=True)
  pe = jnp.exp(per_agent - pm)
  frac = pe * (1.0 / jnp.sum(pe, axis=0, keepdims=True))            # (n, Bb)

  # --- single lane-dense output slab: row 0 = q_tot, rows 1..n = local_rewards -------------
  out_ref[...] = jnp.concatenate([y + v, frac * rew], axis=0).astype(out_ref.dtype)


# ----------------------------------------------------------------------------
# Weight packing: block-diagonal / concatenated fusions done once in the wrapper.
# ----------------------------------------------------------------------------
def _block_diag(blocks):
  rows = sum(b.shape[0] for b in blocks)
  cols = sum(b.shape[1] for b in blocks)
  out = jnp.zeros((rows, cols), jnp.float32)
  r = c = 0
  for b in blocks:
    out = out.at[r:r + b.shape[0], c:c + b.shape[1]].set(b.astype(jnp.float32))
    r += b.shape[0]
    c += b.shape[1]
  return out


def _pack_kernel_params(params, n_agents):
  (enc_w, enc_b, wq, wk, gw1, gb1, gw2, gb2, bw, bb,
   fw1, fb1, fw2, fb2, vw1, vb1, vw2, vb2) = params
  f32 = jnp.float32
  col = lambda b: b.reshape(-1, 1).astype(f32)

  # Block-diag encoder (bf16 -> fed straight to the MXU against the bf16 hid tile).
  enc_bd = _block_diag([enc_w] * n_agents).astype(jnp.bfloat16)            # (n*d, n*rnn)
  enc_b_rep = jnp.tile(enc_b.reshape(-1, 1), (n_agents, 1)).astype(f32)    # (n*d, 1)
  # Fused [Q; K] projection, each block-diagonal over agents.
  wqk = jnp.concatenate([_block_diag([wq] * n_agents),
                         _block_diag([wk] * n_agents)], axis=0).astype(f32)  # (2*n*d, n*d)
  # Fuse the four state-conditioned first layers into one (2HE + 2E, S) matmul.
  hcat_w = jnp.concatenate([gw1, fw1, bw, vw1], axis=0).astype(f32)
  hcat_b = jnp.concatenate([col(gb1), col(fb1), col(bb), col(vb1)], axis=0)
  # Fuse the two second-layer hypernets into one block-diagonal (2E, 2HE) matmul.
  w2_bd = _block_diag([gw2, fw2])                                           # (2E, 2HE)
  b2 = jnp.concatenate([col(gb2), col(fb2)], axis=0)                        # (2E, 1)
  return (enc_bd, enc_b_rep, wqk, hcat_w, hcat_b, w2_bd, b2,
          jnp.transpose(vw2).astype(f32), col(vb2))


# ----------------------------------------------------------------------------
# Wrapper: transpose inputs to (feat, B), tile B over the grid.
# ----------------------------------------------------------------------------
def graphmix_forward(params, agent_qs, states, agent_obs, hidden_states,
                     team_rewards, *, block_b=2048):
  bs, T, n = agent_qs.shape
  state_dim = states.shape[-1]
  rnn_dim = hidden_states.shape[-1]
  B = bs * T
  f32 = jnp.float32

  # alive mask is tiny -> compute it here, ship only (n, B) instead of (n*obs_dim, B).
  # (Semantics match the module: alive iff sum of obs features > 0.)
  alive = (jnp.sum(agent_obs, axis=-1) > 0.0).astype(f32)                   # (bs, T, n)

  # Lane-dense tiling: B lives on the 128-lane axis. Use big tiles (VMEM is not the
  # constraint); keep the grid an even number of steps when it has >1 step (v7x: 2 TCs).
  b_ceil = 128 * ((B + 127) // 128)
  blk = max(128, min(int(block_b), b_ceil))
  blk = (blk // 128) * 128
  nblk = (b_ceil + blk - 1) // blk
  if nblk > 1 and nblk % 2 == 1:
    blk = 128 * (-(-b_ceil // (128 * (nblk + 1))))
    nblk = (b_ceil + blk - 1) // blk
  B_pad = nblk * blk

  def to_kernel(x, feat, dtype=f32):
    x = x.reshape(B, feat).T.astype(dtype)                  # (feat, B): batch on lanes
    if B_pad != B:
      x = jnp.pad(x, ((0, 0), (0, B_pad - B)))              # zero-pad -> alive=0, finite math
    return x

  qs_t = to_kernel(agent_qs, n)
  st_t = to_kernel(states, state_dim)
  al_t = to_kernel(alive, n)
  hid_t = to_kernel(hidden_states, n * rnn_dim, jnp.bfloat16)  # biggest input -> bf16 DMA + MXU
  rew_t = to_kernel(team_rewards, 1)

  kparams = _pack_kernel_params(params, n)

  data_specs = [
      pl.BlockSpec((n, blk), lambda i: (0, i)),
      pl.BlockSpec((state_dim, blk), lambda i: (0, i)),
      pl.BlockSpec((n, blk), lambda i: (0, i)),
      pl.BlockSpec((n * rnn_dim, blk), lambda i: (0, i)),
      pl.BlockSpec((1, blk), lambda i: (0, i)),
  ]
  # Constant block index -> Pallas keeps the (small) weights resident across the grid.
  weight_specs = [pl.BlockSpec(w.shape, lambda i: (0, 0)) for w in kparams]

  out = pl.pallas_call(
      _graphmix_kernel,
      out_shape=jax.ShapeDtypeStruct((1 + n, B_pad), f32),    # [q_tot ; local_rewards] slab
      grid=(nblk,),
      in_specs=data_specs + weight_specs,
      out_specs=pl.BlockSpec((1 + n, blk), lambda i: (0, i)),
      compiler_params=pltpu.CompilerParams(
          dimension_semantics=("parallel",),
          vmem_limit_bytes=48 * 1024 * 1024),
  )(qs_t, st_t, al_t, hid_t, rew_t, *kparams)

  q_tot = out[0, :B].reshape(bs, T, 1)
  local_rewards = out[1:1 + n, :B].T.reshape(bs, T, n)
  return q_tot, local_rewards, alive


# ----------------------------------------------------------------------------
# Deterministic parameter init (PyTorch nn.Linear-style uniform bounds).
# ----------------------------------------------------------------------------
def init_params(key, *, n_agents, state_dim, rnn_hidden_dim, embed_dim,
                hypernet_embed, obs_enc_dim=16):
  def lin(k, out_f, in_f):
    k1, k2 = jax.random.split(k)
    bound = 1.0 / math.sqrt(in_f)
    w = jax.random.uniform(k1, (out_f, in_f), jnp.float32, -bound, bound)
    b = jax.random.uniform(k2, (1, out_f), jnp.float32, -bound, bound)
    return w, b

  ks = jax.random.split(key, 10)
  enc_w, enc_b = lin(ks[0], obs_enc_dim, rnn_hidden_dim)        # obs_encoder
  wq, _ = lin(ks[1], obs_enc_dim, obs_enc_dim)                  # W_attn_query (no bias)
  wk, _ = lin(ks[2], obs_enc_dim, obs_enc_dim)                  # W_attn_key   (no bias)
  gw1, gb1 = lin(ks[3], hypernet_embed, state_dim)              # hyper -> layer weight
  gw2, gb2 = lin(ks[4], 1 * embed_dim, hypernet_embed)
  bw, bb = lin(ks[5], embed_dim, state_dim)                     # hyper -> layer bias
  fw1, fb1 = lin(ks[6], hypernet_embed, state_dim)              # hyper -> readout weight
  fw2, fb2 = lin(ks[7], embed_dim * 1, hypernet_embed)
  vw1, vb1 = lin(ks[8], embed_dim, state_dim)                   # V(s)
  vw2, vb2 = lin(ks[9], 1, embed_dim)
  return (enc_w, enc_b, wq, wk, gw1, gb1, gw2, gb2, bw, bb,
          fw1, fb1, fw2, fb2, vw1, vb1, vw2, vb2)


# ----------------------------------------------------------------------------
# Pure-JAX reference (same math, original batch-major layout) for a sanity check.
# ----------------------------------------------------------------------------
def graphmix_reference(params, agent_qs, states, agent_obs, hidden_states, team_rewards):
  (enc_w, enc_b, wq, wk, gw1, gb1, gw2, gb2, bw, bb,
   fw1, fb1, fw2, fb2, vw1, vb1, vw2, vb2) = params
  bs, T, n = agent_qs.shape
  B = bs * T
  qs = agent_qs.reshape(B, n)
  st = states.reshape(B, -1)
  obs = agent_obs.reshape(B, n, -1)
  hid = hidden_states.reshape(B, n, -1)
  rew = team_rewards.reshape(B, 1)

  lin = lambda x, w, b: x @ w.T + b
  alive = (jnp.sum(obs, axis=2) > 0).astype(jnp.float32)
  mask = alive[:, :, None] * alive[:, None, :]
  enc = jnp.maximum(jnp.einsum('bnr,er->bne', hid, enc_w) + enc_b[:, None, :], 0.0)
  q = jnp.einsum('bne,oe->bno', enc, wq)
  k = jnp.einsum('bne,oe->bno', enc, wk)
  logits = jnp.einsum('bno,bmo->bnm', q, k) / math.sqrt(q.shape[-1])
  attn = jax.nn.softmax(logits + (-1.0e10) * (1.0 - mask), axis=2)
  adj = attn * mask
  w1 = jnp.abs(lin(jnp.maximum(lin(st, gw1, gb1), 0.0), gw2, gb2))
  b1 = lin(st, bw, bb)
  wf = jnp.abs(lin(jnp.maximum(lin(st, fw1, fb1), 0.0), fw2, fb2))
  agg = jnp.sum(adj * qs[:, None, :], axis=2) + qs
  h = agg[:, :, None] * w1[:, None, :] + b1[:, None, :]
  h = jnp.where(h > 0.0, h, 0.01 * h)
  per_agent = jnp.sum(h * wf[:, None, :], axis=2)
  y = jnp.sum(per_agent, axis=1, keepdims=True)
  frac = jax.nn.softmax(per_agent, axis=1)
  v = lin(jnp.maximum(lin(st, vw1, vb1), 0.0), vw2, vb2)
  return ((y + v).reshape(bs, T, 1),
          (frac * rew).reshape(bs, T, n),
          alive.reshape(bs, T, n))


if __name__ == "__main__":
  n_agents, state_dim, obs_dim = 4, 32, 16
  rnn_hidden_dim, embed_dim, hypernet_embed = 32, 32, 64
  bs, T = 4, 128   # flattened batch B = 512 -> one lane-dense 512-wide tile

  key = jax.random.PRNGKey(0)
  k = jax.random.split(key, 6)
  agent_qs = jax.random.normal(k[0], (bs, T, n_agents), jnp.float32)
  states = jax.random.normal(k[1], (bs, T, state_dim), jnp.float32)
  agent_obs = jax.random.uniform(k[2], (bs, T, n_agents, obs_dim), jnp.float32, -0.5, 1.0)
  hidden_states = jax.random.normal(k[3], (bs, T, n_agents, rnn_hidden_dim), jnp.float32)
  team_rewards = jax.random.normal(k[4], (bs, T, 1), jnp.float32)

  params = init_params(k[5], n_agents=n_agents, state_dim=state_dim,
                       rnn_hidden_dim=rnn_hidden_dim, embed_dim=embed_dim,
                       hypernet_embed=hypernet_embed)

  q_tot, local_rewards, alive = graphmix_forward(
      params, agent_qs, states, agent_obs, hidden_states, team_rewards)
  jax.block_until_ready((q_tot, local_rewards, alive))

  # The kernel intentionally feeds hidden_states and the encoder weight to the MXU in bf16;
  # give the reference the same quantized values so the comparison isolates kernel correctness
  # from the intentional input/weight cast.
  bf = lambda x: x.astype(jnp.bfloat16).astype(jnp.float32)
  hid_q = bf(hidden_states)
  params_ref = (bf(params[0]),) + params[1:]
  q_ref, lr_ref, al_ref = graphmix_reference(
      params_ref, agent_qs, states, agent_obs, hid_q, team_rewards)

  assert q_tot.shape == (bs, T, 1) and local_rewards.shape == (bs, T, n_agents)
  assert jnp.allclose(q_tot, q_ref, atol=1e-2, rtol=1e-2)
  assert jnp.allclose(local_rewards, lr_ref, atol=1e-2, rtol=1e-2)
  assert jnp.allclose(alive, al_ref)
  print("KERNEL_OK")
</pallas_src>

<mosaic_0001>
module attributes {stable_mosaic.version = 11 : i64} {
  func.func @_graphmix_kernel(%arg0: i32, %arg1: memref<4x512xf32, #tpu.memory_space<vmem>>, %arg2: memref<32x512xf32, #tpu.memory_space<vmem>>, %arg3: memref<4x512xf32, #tpu.memory_space<vmem>>, %arg4: memref<128x512xbf16, #tpu.memory_space<vmem>>, %arg5: memref<1x512xf32, #tpu.memory_space<vmem>>, %arg6: memref<64x128xbf16, #tpu.memory_space<vmem>>, %arg7: memref<64x1xf32, #tpu.memory_space<vmem>>, %arg8: memref<128x64xf32, #tpu.memory_space<vmem>>, %arg9: memref<192x32xf32, #tpu.memory_space<vmem>>, %arg10: memref<192x1xf32, #tpu.memory_space<vmem>>, %arg11: memref<64x128xf32, #tpu.memory_space<vmem>>, %arg12: memref<64x1xf32, #tpu.memory_space<vmem>>, %arg13: memref<32x1xf32, #tpu.memory_space<vmem>>, %arg14: memref<1x1xf32, #tpu.memory_space<vmem>>, %arg15: memref<5x512xf32, #tpu.memory_space<vmem>>) attributes {dimension_semantics = [#tpu.dimension_semantics<parallel>], iteration_bounds = array<i64: 1>, scalar_prefetch = 0 : i64, scratch_operands = 0 : i64, tpu.core_type = #tpu.core_type<tc>, window_params = [{transform_indices = @transform_0, window_bounds = array<i64: 4, 512>}, {transform_indices = @transform_1, window_bounds = array<i64: 32, 512>}, {transform_indices = @transform_2, window_bounds = array<i64: 4, 512>}, {transform_indices = @transform_3, window_bounds = array<i64: 128, 512>}, {transform_indices = @transform_4, window_bounds = array<i64: 1, 512>}, {pipeline_mode = #tpu.pipeline_mode<synchronous>, transform_indices = @transform_5, window_bounds = array<i64: 64, 128>}, {pipeline_mode = #tpu.pipeline_mode<synchronous>, transform_indices = @transform_6, window_bounds = array<i64: 64, 1>}, {pipeline_mode = #tpu.pipeline_mode<synchronous>, transform_indices = @transform_7, window_bounds = array<i64: 128, 64>}, {pipeline_mode = #tpu.pipeline_mode<synchronous>, transform_indices = @transform_8, window_bounds = array<i64: 192, 32>}, {pipeline_mode = #tpu.pipeline_mode<synchronous>, transform_indices = @transform_9, window_bounds = array<i64: 192, 1>}, {pipeline_mode = #tpu.pipeline_mode<synchronous>, transform_indices = @transform_10, window_bounds = array<i64: 64, 128>}, {pipeline_mode = #tpu.pipeline_mode<synchronous>, transform_indices = @transform_11, window_bounds = array<i64: 64, 1>}, {pipeline_mode = #tpu.pipeline_mode<synchronous>, transform_indices = @transform_12, window_bounds = array<i64: 32, 1>}, {pipeline_mode = #tpu.pipeline_mode<synchronous>, transform_indices = @transform_13, window_bounds = array<i64: 1, 1>}, {transform_indices = @transform_14, window_bounds = array<i64: 5, 512>}]} {
    %c0 = arith.constant 0 : index
    %c0_0 = arith.constant 0 : index
    %0 = vector.load %arg1[%c0, %c0_0] : memref<4x512xf32, #tpu.memory_space<vmem>>, vector<4x512xf32>
    %c0_1 = arith.constant 0 : index
    %c0_2 = arith.constant 0 : index
    %1 = vector.load %arg2[%c0_1, %c0_2] : memref<32x512xf32, #tpu.memory_space<vmem>>, vector<32x512xf32>
    %c0_3 = arith.constant 0 : index
    %c0_4 = arith.constant 0 : index
    %2 = vector.load %arg3[%c0_3, %c0_4] : memref<4x512xf32, #tpu.memory_space<vmem>>, vector<4x512xf32>
    %c0_5 = arith.constant 0 : index
    %c0_6 = arith.constant 0 : index
    %3 = vector.load %arg5[%c0_5, %c0_6] : memref<1x512xf32, #tpu.memory_space<vmem>>, vector<1x512xf32>
    %c0_7 = arith.constant 0 : index
    %c0_8 = arith.constant 0 : index
    %4 = vector.load %arg6[%c0_7, %c0_8] : memref<64x128xbf16, #tpu.memory_space<vmem>>, vector<64x128xbf16>
    %c0_9 = arith.constant 0 : index
    %c0_10 = arith.constant 0 : index
    %5 = vector.load %arg4[%c0_9, %c0_10] : memref<128x512xbf16, #tpu.memory_space<vmem>>, vector<128x512xbf16>
    %cst = arith.constant dense<0.000000e+00> : vector<64x512xf32>
    %6 = tpu.matmul %4, %5, %cst {dimension_numbers = #tpu.dot_dimension_numbers<[1], [0], [0], [1], [0, 0, 1, 1], [], []>} : vector<64x128xbf16>, vector<128x512xbf16>, vector<64x512xf32> -> vector<64x512xf32>
    %c0_11 = arith.constant 0 : index
    %c0_12 = arith.constant 0 : index
    %7 = vector.load %arg7[%c0_11, %c0_12] : memref<64x1xf32, #tpu.memory_space<vmem>>, vector<64x1xf32>
    %8 = vector.broadcast %7 : vector<64x1xf32> to vector<64x512xf32>
    %9 = arith.addf %6, %8 : vector<64x512xf32>
    %cst_13 = arith.constant 0.000000e+00 : f32
    %10 = vector.broadcast %cst_13 : f32 to vector<64x512xf32>
    %11 = arith.maximumf %9, %10 : vector<64x512xf32>
    %c0_14 = arith.constant 0 : index
    %c0_15 = arith.constant 0 : index
    %12 = vector.load %arg8[%c0_14, %c0_15] : memref<128x64xf32, #tpu.memory_space<vmem>>, vector<128x64xf32>
    %cst_16 = arith.constant dense<0.000000e+00> : vector<128x512xf32>
    %13 = tpu.matmul %12, %11, %cst_16 {dimension_numbers = #tpu.dot_dimension_numbers<[1], [0], [0], [1], [0, 0, 1, 1], [], []>} : vector<128x64xf32>, vector<64x512xf32>, vector<128x512xf32> -> vector<128x512xf32>
    %14 = vector.extract_strided_slice %13 {offsets = [0, 0], sizes = [64, 512], strides = [1, 1]} : vector<128x512xf32> to vector<64x512xf32>
    %15 = vector.shape_cast %14 : vector<64x512xf32> to vector<4x16x512xf32>
    %16 = vector.extract_strided_slice %13 {offsets = [64, 0], sizes = [64, 512], strides = [1, 1]} : vector<128x512xf32> to vector<64x512xf32>
    %17 = vector.shape_cast %16 : vector<64x512xf32> to vector<4x16x512xf32>
    %c0_17 = arith.constant 0 : index
    %c0_18 = arith.constant 0 : index
    %18 = vector.load %arg9[%c0_17, %c0_18] : memref<192x32xf32, #tpu.memory_space<vmem>>, vector<192x32xf32>
    %cst_19 = arith.constant dense<0.000000e+00> : vector<192x512xf32>
    %19 = tpu.matmul %18, %1, %cst_19 {dimension_numbers = #tpu.dot_dimension_numbers<[1], [0], [0], [1], [0, 0, 1, 1], [], []>} : vector<192x32xf32>, vector<32x512xf32>, vector<192x512xf32> -> vector<192x512xf32>
    %c0_20 = arith.constant 0 : index
    %c0_21 = arith.constant 0 : index
    %20 = vector.load %arg10[%c0_20, %c0_21] : memref<192x1xf32, #tpu.memory_space<vmem>>, vector<192x1xf32>
    %21 = vector.broadcast %20 : vector<192x1xf32> to vector<192x512xf32>
    %22 = arith.addf %19, %21 : vector<192x512xf32>
    %23 = vector.extract_strided_slice %22 {offsets = [0, 0], sizes = [128, 512], strides = [1, 1]} : vector<192x512xf32> to vector<128x512xf32>
    %cst_22 = arith.constant 0.000000e+00 : f32
    %24 = vector.broadcast %cst_22 : f32 to vector<128x512xf32>
    %25 = arith.maximumf %23, %24 : vector<128x512xf32>
    %26 = vector.extract_strided_slice %22 {offsets = [128, 0], sizes = [32, 512], strides = [1, 1]} : vector<192x512xf32> to vector<32x512xf32>
    %27 = vector.extract_strided_slice %22 {offsets = [160, 0], sizes = [32, 512], strides = [1, 1]} : vector<192x512xf32> to vector<32x512xf32>
    %cst_23 = arith.constant 0.000000e+00 : f32
    %28 = vector.broadcast %cst_23 : f32 to vector<32x512xf32>
    %29 = arith.maximumf %27, %28 : vector<32x512xf32>
    %c0_24 = arith.constant 0 : index
    %c0_25 = arith.constant 0 : index
    %30 = vector.load %arg11[%c0_24, %c0_25] : memref<64x128xf32, #tpu.memory_space<vmem>>, vector<64x128xf32>
    %cst_26 = arith.constant dense<0.000000e+00> : vector<64x512xf32>
    %31 = tpu.matmul %30, %25, %cst_26 {dimension_numbers = #tpu.dot_dimension_numbers<[1], [0], [0], [1], [0, 0, 1, 1], [], []>} : vector<64x128xf32>, vector<128x512xf32>, vector<64x512xf32> -> vector<64x512xf32>
    %c0_27 = arith.constant 0 : index
    %c0_28 = arith.constant 0 : index
    %32 = vector.load %arg12[%c0_27, %c0_28] : memref<64x1xf32, #tpu.memory_space<vmem>>, vector<64x1xf32>
    %33 = vector.broadcast %32 : vector<64x1xf32> to vector<64x512xf32>
    %34 = arith.addf %31, %33 : vector<64x512xf32>
    %35 = math.absf %34 : vector<64x512xf32>
    %36 = vector.extract_strided_slice %35 {offsets = [0, 0], sizes = [32, 512], strides = [1, 1]} : vector<64x512xf32> to vector<32x512xf32>
    %37 = vector.extract_strided_slice %35 {offsets = [32, 0], sizes = [32, 512], strides = [1, 1]} : vector<64x512xf32> to vector<32x512xf32>
    %c0_29 = arith.constant 0 : index
    %c0_30 = arith.constant 0 : index
    %38 = vector.load %arg13[%c0_29, %c0_30] : memref<32x1xf32, #tpu.memory_space<vmem>>, vector<32x1xf32>
    %39 = vector.broadcast %38 : vector<32x1xf32> to vector<32x512xf32>
    %40 = arith.mulf %29, %39 : vector<32x512xf32>
    %cst_31 = arith.constant dense<0.000000e+00> : vector<512xf32>
    %41 = vector.multi_reduction <add>, %40, %cst_31 [0] : vector<32x512xf32> to vector<512xf32>
    %42 = vector.shape_cast %41 : vector<512xf32> to vector<1x512xf32>
    %c0_32 = arith.constant 0 : index
    %c0_33 = arith.constant 0 : index
    %43 = vector.load %arg14[%c0_32, %c0_33] : memref<1x1xf32, #tpu.memory_space<vmem>>, vector<1x1xf32>
    %44 = vector.broadcast %43 : vector<1x1xf32> to vector<1x512xf32>
    %45 = arith.addf %42, %44 : vector<1x512xf32>
    %46 = vector.extract_strided_slice %15 {offsets = [0, 0, 0], sizes = [1, 16, 512], strides = [1, 1, 1]} : vector<4x16x512xf32> to vector<1x16x512xf32>
    %47 = vector.shape_cast %46 : vector<1x16x512xf32> to vector<16x512xf32>
    %48 = vector.shape_cast %47 : vector<16x512xf32> to vector<1x16x512xf32>
    %49 = vector.broadcast %48 : vector<1x16x512xf32> to vector<4x16x512xf32>
    %50 = arith.mulf %17, %49 : vector<4x16x512xf32>
    %cst_34 = arith.constant dense<0.000000e+00> : vector<4x512xf32>
    %51 = vector.multi_reduction <add>, %50, %cst_34 [1] : vector<4x16x512xf32> to vector<4x512xf32>
    %cst_35 = arith.constant 2.500000e-01 : f32
    %52 = vector.broadcast %cst_35 : f32 to vector<4x512xf32>
    %53 = arith.mulf %51, %52 : vector<4x512xf32>
    %54 = vector.extract_strided_slice %2 {offsets = [0, 0], sizes = [1, 512], strides = [1, 1]} : vector<4x512xf32> to vector<1x512xf32>
    %55 = vector.broadcast %54 : vector<1x512xf32> to vector<4x512xf32>
    %56 = arith.mulf %2, %55 : vector<4x512xf32>
    %cst_36 = arith.constant 1.000000e+00 : f32
    %57 = vector.broadcast %cst_36 : f32 to vector<4x512xf32>
    %58 = arith.subf %57, %56 : vector<4x512xf32>
    %cst_37 = arith.constant -1.000000e+10 : f32
    %59 = vector.broadcast %cst_37 : f32 to vector<4x512xf32>
    %60 = arith.mulf %59, %58 : vector<4x512xf32>
    %61 = arith.addf %53, %60 : vector<4x512xf32>
    %cst_38 = arith.constant dense<0xFF800000> : vector<512xf32>
    %62 = vector.multi_reduction <maximumf>, %61, %cst_38 [0] : vector<4x512xf32> to vector<512xf32>
    %63 = vector.shape_cast %62 : vector<512xf32> to vector<1x512xf32>
    %64 = vector.broadcast %63 : vector<1x512xf32> to vector<4x512xf32>
    %65 = arith.subf %61, %64 : vector<4x512xf32>
    %66 = math.exp %65 : vector<4x512xf32>
    %cst_39 = arith.constant dense<0.000000e+00> : vector<512xf32>
    %67 = vector.multi_reduction <add>, %66, %cst_39 [0] : vector<4x512xf32> to vector<512xf32>
    %68 = vector.shape_cast %67 : vector<512xf32> to vector<1x512xf32>
    %cst_40 = arith.constant 1.000000e+00 : f32
    %69 = vector.broadcast %cst_40 : f32 to vector<1x512xf32>
    %70 = arith.divf %69, %68 : vector<1x512xf32>
    %71 = vector.broadcast %70 : vector<1x512xf32> to vector<4x512xf32>
    %72 = arith.mulf %66, %71 : vector<4x512xf32>
    %73 = arith.mulf %72, %56 : vector<4x512xf32>
    %74 = vector.extract_strided_slice %0 {offsets = [0, 0], sizes = [1, 512], strides = [1, 1]} : vector<4x512xf32> to vector<1x512xf32>
    %75 = arith.mulf %73, %0 : vector<4x512xf32>
    %cst_41 = arith.constant dense<0.000000e+00> : vector<512xf32>
    %76 = vector.multi_reduction <add>, %75, %cst_41 [0] : vector<4x512xf32> to vector<512xf32>
    %77 = vector.shape_cast %76 : vector<512xf32> to vector<1x512xf32>
    %78 = arith.addf %74, %77 : vector<1x512xf32>
    %79 = vector.broadcast %78 : vector<1x512xf32> to vector<32x512xf32>
    %80 = arith.mulf %79, %36 : vector<32x512xf32>
    %81 = arith.addf %80, %26 : vector<32x512xf32>
    %cst_42 = arith.constant 0.000000e+00 : f32
    %82 = vector.broadcast %cst_42 : f32 to vector<32x512xf32>
    %83 = arith.cmpf ogt, %81, %82 : vector<32x512xf32>
    %cst_43 = arith.constant 0.00999999977 : f32
    %84 = vector.broadcast %cst_43 : f32 to vector<32x512xf32>
    %85 = arith.mulf %84, %81 : vector<32x512xf32>
    %86 = arith.select %83, %81, %85 : vector<32x512xi1>, vector<32x512xf32>
    %87 = arith.mulf %86, %37 : vector<32x512xf32>
    %cst_44 = arith.constant dense<0.000000e+00> : vector<512xf32>
    %88 = vector.multi_reduction <add>, %87, %cst_44 [0] : vector<32x512xf32> to vector<512xf32>
    %89 = vector.shape_cast %88 : vector<512xf32> to vector<1x512xf32>
    %90 = vector.extract_strided_slice %15 {offsets = [1, 0, 0], sizes = [1, 16, 512], strides = [1, 1, 1]} : vector<4x16x512xf32> to vector<1x16x512xf32>
    %91 = vector.shape_cast %90 : vector<1x16x512xf32> to vector<16x512xf32>
    %92 = vector.shape_cast %91 : vector<16x512xf32> to vector<1x16x512xf32>
    %93 = vector.broadcast %92 : vector<1x16x512xf32> to vector<4x16x512xf32>
    %94 = arith.mulf %17, %93 : vector<4x16x512xf32>
    %cst_45 = arith.constant dense<0.000000e+00> : vector<4x512xf32>
    %95 = vector.multi_reduction <add>, %94, %cst_45 [1] : vector<4x16x512xf32> to vector<4x512xf32>
    %cst_46 = arith.constant 2.500000e-01 : f32
    %96 = vector.broadcast %cst_46 : f32 to vector<4x512xf32>
    %97 = arith.mulf %95, %96 : vector<4x512xf32>
    %98 = vector.extract_strided_slice %2 {offsets = [1, 0], sizes = [1, 512], strides = [1, 1]} : vector<4x512xf32> to vector<1x512xf32>
    %99 = vector.broadcast %98 : vector<1x512xf32> to vector<4x512xf32>
    %100 = arith.mulf %2, %99 : vector<4x512xf32>
    %cst_47 = arith.constant 1.000000e+00 : f32
    %101 = vector.broadcast %cst_47 : f32 to vector<4x512xf32>
    %102 = arith.subf %101, %100 : vector<4x512xf32>
    %cst_48 = arith.constant -1.000000e+10 : f32
    %103 = vector.broadcast %cst_48 : f32 to vector<4x512xf32>
    %104 = arith.mulf %103, %102 : vector<4x512xf32>
    %105 = arith.addf %97, %104 : vector<4x512xf32>
    %cst_49 = arith.constant dense<0xFF800000> : vector<512xf32>
    %106 = vector.multi_reduction <maximumf>, %105, %cst_49 [0] : vector<4x512xf32> to vector<512xf32>
    %107 = vector.shape_cast %106 : vector<512xf32> to vector<1x512xf32>
    %108 = vector.broadcast %107 : vector<1x512xf32> to vector<4x512xf32>
    %109 = arith.subf %105, %108 : vector<4x512xf32>
    %110 = math.exp %109 : vector<4x512xf32>
    %cst_50 = arith.constant dense<0.000000e+00> : vector<512xf32>
    %111 = vector.multi_reduction <add>, %110, %cst_50 [0] : vector<4x512xf32> to vector<512xf32>
    %112 = vector.shape_cast %111 : vector<512xf32> to vector<1x512xf32>
    %cst_51 = arith.constant 1.000000e+00 : f32
    %113 = vector.broadcast %cst_51 : f32 to vector<1x512xf32>
    %114 = arith.divf %113, %112 : vector<1x512xf32>
    %115 = vector.broadcast %114 : vector<1x512xf32> to vector<4x512xf32>
    %116 = arith.mulf %110, %115 : vector<4x512xf32>
    %117 = arith.mulf %116, %100 : vector<4x512xf32>
    %118 = vector.extract_strided_slice %0 {offsets = [1, 0], sizes = [1, 512], strides = [1, 1]} : vector<4x512xf32> to vector<1x512xf32>
    %119 = arith.mulf %117, %0 : vector<4x512xf32>
    %cst_52 = arith.constant dense<0.000000e+00> : vector<512xf32>
    %120 = vector.multi_reduction <add>, %119, %cst_52 [0] : vector<4x512xf32> to vector<512xf32>
    %121 = vector.shape_cast %120 : vector<512xf32> to vector<1x512xf32>
    %122 = arith.addf %118, %121 : vector<1x512xf32>
    %123 = vector.broadcast %122 : vector<1x512xf32> to vector<32x512xf32>
    %124 = arith.mulf %123, %36 : vector<32x512xf32>
    %125 = arith.addf %124, %26 : vector<32x512xf32>
    %cst_53 = arith.constant 0.000000e+00 : f32
    %126 = vector.broadcast %cst_53 : f32 to vector<32x512xf32>
    %127 = arith.cmpf ogt, %125, %126 : vector<32x512xf32>
    %cst_54 = arith.constant 0.00999999977 : f32
    %128 = vector.broadcast %cst_54 : f32 to vector<32x512xf32>
    %129 = arith.mulf %128, %125 : vector<32x512xf32>
    %130 = arith.select %127, %125, %129 : vector<32x512xi1>, vector<32x512xf32>
    %131 = arith.mulf %130, %37 : vector<32x512xf32>
    %cst_55 = arith.constant dense<0.000000e+00> : vector<512xf32>
    %132 = vector.multi_reduction <add>, %131, %cst_55 [0] : vector<32x512xf32> to vector<512xf32>
    %133 = vector.shape_cast %132 : vector<512xf32> to vector<1x512xf32>
    %134 = vector.extract_strided_slice %15 {offsets = [2, 0, 0], sizes = [1, 16, 512], strides = [1, 1, 1]} : vector<4x16x512xf32> to vector<1x16x512xf32>
    %135 = vector.shape_cast %134 : vector<1x16x512xf32> to vector<16x512xf32>
    %136 = vector.shape_cast %135 : vector<16x512xf32> to vector<1x16x512xf32>
    %137 = vector.broadcast %136 : vector<1x16x512xf32> to vector<4x16x512xf32>
    %138 = arith.mulf %17, %137 : vector<4x16x512xf32>
    %cst_56 = arith.constant dense<0.000000e+00> : vector<4x512xf32>
    %139 = vector.multi_reduction <add>, %138, %cst_56 [1] : vector<4x16x512xf32> to vector<4x512xf32>
    %cst_57 = arith.constant 2.500000e-01 : f32
    %140 = vector.broadcast %cst_57 : f32 to vector<4x512xf32>
    %141 = arith.mulf %139, %140 : vector<4x512xf32>
    %142 = vector.extract_strided_slice %2 {offsets = [2, 0], sizes = [1, 512], strides = [1, 1]} : vector<4x512xf32> to vector<1x512xf32>
    %143 = vector.broadcast %142 : vector<1x512xf32> to vector<4x512xf32>
    %144 = arith.mulf %2, %143 : vector<4x512xf32>
    %cst_58 = arith.constant 1.000000e+00 : f32
    %145 = vector.broadcast %cst_58 : f32 to vector<4x512xf32>
    %146 = arith.subf %145, %144 : vector<4x512xf32>
    %cst_59 = arith.constant -1.000000e+10 : f32
    %147 = vector.broadcast %cst_59 : f32 to vector<4x512xf32>
    %148 = arith.mulf %147, %146 : vector<4x512xf32>
    %149 = arith.addf %141, %148 : vector<4x512xf32>
    %cst_60 = arith.constant dense<0xFF800000> : vector<512xf32>
    %150 = vector.multi_reduction <maximumf>, %149, %cst_60 [0] : vector<4x512xf32> to vector<512xf32>
    %151 = vector.shape_cast %150 : vector<512xf32> to vector<1x512xf32>
    %152 = vector.broadcast %151 : vector<1x512xf32> to vector<4x512xf32>
    %153 = arith.subf %149, %152 : vector<4x512xf32>
    %154 = math.exp %153 : vector<4x512xf32>
    %cst_61 = arith.constant dense<0.000000e+00> : vector<512xf32>
    %155 = vector.multi_reduction <add>, %154, %cst_61 [0] : vector<4x512xf32> to vector<512xf32>
    %156 = vector.shape_cast %155 : vector<512xf32> to vector<1x512xf32>
    %cst_62 = arith.constant 1.000000e+00 : f32
    %157 = vector.broadcast %cst_62 : f32 to vector<1x512xf32>
    %158 = arith.divf %157, %156 : vector<1x512xf32>
    %159 = vector.broadcast %158 : vector<1x512xf32> to vector<4x512xf32>
    %160 = arith.mulf %154, %159 : vector<4x512xf32>
    %161 = arith.mulf %160, %144 : vector<4x512xf32>
    %162 = vector.extract_strided_slice %0 {offsets = [2, 0], sizes = [1, 512], strides = [1, 1]} : vector<4x512xf32> to vector<1x512xf32>
    %163 = arith.mulf %161, %0 : vector<4x512xf32>
    %cst_63 = arith.constant dense<0.000000e+00> : vector<512xf32>
    %164 = vector.multi_reduction <add>, %163, %cst_63 [0] : vector<4x512xf32> to vector<512xf32>
    %165 = vector.shape_cast %164 : vector<512xf32> to vector<1x512xf32>
    %166 = arith.addf %162, %165 : vector<1x512xf32>
    %167 = vector.broadcast %166 : vector<1x512xf32> to vector<32x512xf32>
    %168 = arith.mulf %167, %36 : vector<32x512xf32>
    %169 = arith.addf %168, %26 : vector<32x512xf32>
    %cst_64 = arith.constant 0.000000e+00 : f32
    %170 = vector.broadcast %cst_64 : f32 to vector<32x512xf32>
    %171 = arith.cmpf ogt, %169, %170 : vector<32x512xf32>
    %cst_65 = arith.constant 0.00999999977 : f32
    %172 = vector.broadcast %cst_65 : f32 to vector<32x512xf32>
    %173 = arith.mulf %172, %169 : vector<32x512xf32>
    %174 = arith.select %171, %169, %173 : vector<32x512xi1>, vector<32x512xf32>
    %175 = arith.mulf %174, %37 : vector<32x512xf32>
    %cst_66 = arith.constant dense<0.000000e+00> : vector<512xf32>
    %176 = vector.multi_reduction <add>, %175, %cst_66 [0] : vector<32x512xf32> to vector<512xf32>
    %177 = vector.shape_cast %176 : vector<512xf32> to vector<1x512xf32>
    %178 = vector.extract_strided_slice %15 {offsets = [3, 0, 0], sizes = [1, 16, 512], strides = [1, 1, 1]} : vector<4x16x512xf32> to vector<1x16x512xf32>
    %179 = vector.shape_cast %178 : vector<1x16x512xf32> to vector<16x512xf32>
    %180 = vector.shape_cast %179 : vector<16x512xf32> to vector<1x16x512xf32>
    %181 = vector.broadcast %180 : vector<1x16x512xf32> to vector<4x16x512xf32>
    %182 = arith.mulf %17, %181 : vector<4x16x512xf32>
    %cst_67 = arith.constant dense<0.000000e+00> : vector<4x512xf32>
    %183 = vector.multi_reduction <add>, %182, %cst_67 [1] : vector<4x16x512xf32> to vector<4x512xf32>
    %cst_68 = arith.constant 2.500000e-01 : f32
    %184 = vector.broadcast %cst_68 : f32 to vector<4x512xf32>
    %185 = arith.mulf %183, %184 : vector<4x512xf32>
    %186 = vector.extract_strided_slice %2 {offsets = [3, 0], sizes = [1, 512], strides = [1, 1]} : vector<4x512xf32> to vector<1x512xf32>
    %187 = vector.broadcast %186 : vector<1x512xf32> to vector<4x512xf32>
    %188 = arith.mulf %2, %187 : vector<4x512xf32>
    %cst_69 = arith.constant 1.000000e+00 : f32
    %189 = vector.broadcast %cst_69 : f32 to vector<4x512xf32>
    %190 = arith.subf %189, %188 : vector<4x512xf32>
    %cst_70 = arith.constant -1.000000e+10 : f32
    %191 = vector.broadcast %cst_70 : f32 to vector<4x512xf32>
    %192 = arith.mulf %191, %190 : vector<4x512xf32>
    %193 = arith.addf %185, %192 : vector<4x512xf32>
    %cst_71 = arith.constant dense<0xFF800000> : vector<512xf32>
    %194 = vector.multi_reduction <maximumf>, %193, %cst_71 [0] : vector<4x512xf32> to vector<512xf32>
    %195 = vector.shape_cast %194 : vector<512xf32> to vector<1x512xf32>
    %196 = vector.broadcast %195 : vector<1x512xf32> to vector<4x512xf32>
    %197 = arith.subf %193, %196 : vector<4x512xf32>
    %198 = math.exp %197 : vector<4x512xf32>
    %cst_72 = arith.constant dense<0.000000e+00> : vector<512xf32>
    %199 = vector.multi_reduction <add>, %198, %cst_72 [0] : vector<4x512xf32> to vector<512xf32>
    %200 = vector.shape_cast %199 : vector<512xf32> to vector<1x512xf32>
    %cst_73 = arith.constant 1.000000e+00 : f32
    %201 = vector.broadcast %cst_73 : f32 to vector<1x512xf32>
    %202 = arith.divf %201, %200 : vector<1x512xf32>
    %203 = vector.broadcast %202 : vector<1x512xf32> to vector<4x512xf32>
    %204 = arith.mulf %198, %203 : vector<4x512xf32>
    %205 = arith.mulf %204, %188 : vector<4x512xf32>
    %206 = vector.extract_strided_slice %0 {offsets = [3, 0], sizes = [1, 512], strides = [1, 1]} : vector<4x512xf32> to vector<1x512xf32>
    %207 = arith.mulf %205, %0 : vector<4x512xf32>
    %cst_74 = arith.constant dense<0.000000e+00> : vector<512xf32>
    %208 = vector.multi_reduction <add>, %207, %cst_74 [0] : vector<4x512xf32> to vector<512xf32>
    %209 = vector.shape_cast %208 : vector<512xf32> to vector<1x512xf32>
    %210 = arith.addf %206, %209 : vector<1x512xf32>
    %211 = vector.broadcast %210 : vector<1x512xf32> to vector<32x512xf32>
    %212 = arith.mulf %211, %36 : vector<32x512xf32>
    %213 = arith.addf %212, %26 : vector<32x512xf32>
    %cst_75 = arith.constant 0.000000e+00 : f32
    %214 = vector.broadcast %cst_75 : f32 to vector<32x512xf32>
    %215 = arith.cmpf ogt, %213, %214 : vector<32x512xf32>
    %cst_76 = arith.constant 0.00999999977 : f32
    %216 = vector.broadcast %cst_76 : f32 to vector<32x512xf32>
    %217 = arith.mulf %216, %213 : vector<32x512xf32>
    %218 = arith.select %215, %213, %217 : vector<32x512xi1>, vector<32x512xf32>
    %219 = arith.mulf %218, %37 : vector<32x512xf32>
    %cst_77 = arith.constant dense<0.000000e+00> : vector<512xf32>
    %220 = vector.multi_reduction <add>, %219, %cst_77 [0] : vector<32x512xf32> to vector<512xf32>
    %221 = vector.shape_cast %220 : vector<512xf32> to vector<1x512xf32>
    %222 = tpu.concatenate %89, %133, %177, %221 in 0 : vector<1x512xf32>, vector<1x512xf32>, vector<1x512xf32>, vector<1x512xf32> -> vector<4x512xf32>
    %cst_78 = arith.constant dense<0.000000e+00> : vector<512xf32>
    %223 = vector.multi_reduction <add>, %222, %cst_78 [0] : vector<4x512xf32> to vector<512xf32>
    %224 = vector.shape_cast %223 : vector<512xf32> to vector<1x512xf32>
    %cst_79 = arith.constant dense<0xFF800000> : vector<512xf32>
    %225 = vector.multi_reduction <maximumf>, %222, %cst_79 [0] : vector<4x512xf32> to vector<512xf32>
    %226 = vector.shape_cast %225 : vector<512xf32> to vector<1x512xf32>
    %227 = vector.broadcast %226 : vector<1x512xf32> to vector<4x512xf32>
    %228 = arith.subf %222, %227 : vector<4x512xf32>
    %229 = math.exp %228 : vector<4x512xf32>
    %cst_80 = arith.constant dense<0.000000e+00> : vector<512xf32>
    %230 = vector.multi_reduction <add>, %229, %cst_80 [0] : vector<4x512xf32> to vector<512xf32>
    %231 = vector.shape_cast %230 : vector<512xf32> to vector<1x512xf32>
    %cst_81 = arith.constant 1.000000e+00 : f32
    %232 = vector.broadcast %cst_81 : f32 to vector<1x512xf32>
    %233 = arith.divf %232, %231 : vector<1x512xf32>
    %234 = vector.broadcast %233 : vector<1x512xf32> to vector<4x512xf32>
    %235 = arith.mulf %229, %234 : vector<4x512xf32>
    %236 = arith.addf %224, %45 : vector<1x512xf32>
    %237 = vector.broadcast %3 : vector<1x512xf32> to vector<4x512xf32>
    %238 = arith.mulf %235, %237 : vector<4x512xf32>
    %239 = tpu.concatenate %236, %238 in 0 : vector<1x512xf32>, vector<4x512xf32> -> vector<5x512xf32>
    %c0_82 = arith.constant 0 : index
    %c0_83 = arith.constant 0 : index
    %240 = vector.load %arg15[%c0_82, %c0_83] : memref<5x512xf32, #tpu.memory_space<vmem>>, vector<5x512xf32>
    tpu.vector_store %arg15[%c0_82, %c0_83], %239 {strides = array<i32>} : memref<5x512xf32, #tpu.memory_space<vmem>>, vector<5x512xf32>,
    return
  }
  func.func @transform_0(%arg0: i32) -> (i32, i32) {
    %c0_i32 = arith.constant 0 : i32
    %c0_i32_0 = arith.constant 0 : i32
    return %c0_i32, %arg0 : i32, i32
  }
  func.func @transform_1(%arg0: i32) -> (i32, i32) {
    %c0_i32 = arith.constant 0 : i32
    %c0_i32_0 = arith.constant 0 : i32
    return %c0_i32, %arg0 : i32, i32
  }
  func.func @transform_2(%arg0: i32) -> (i32, i32) {
    %c0_i32 = arith.constant 0 : i32
    %c0_i32_0 = arith.constant 0 : i32
    return %c0_i32, %arg0 : i32, i32
  }
  func.func @transform_3(%arg0: i32) -> (i32, i32) {
    %c0_i32 = arith.constant 0 : i32
    %c0_i32_0 = arith.constant 0 : i32
    return %c0_i32, %arg0 : i32, i32
  }
  func.func @transform_4(%arg0: i32) -> (i32, i32) {
    %c0_i32 = arith.constant 0 : i32
    %c0_i32_0 = arith.constant 0 : i32
    return %c0_i32, %arg0 : i32, i32
  }
  func.func @transform_5(%arg0: i32) -> (i32, i32) {
    %c0_i32 = arith.constant 0 : i32
    %c0_i32_0 = arith.constant 0 : i32
    %c0_i32_1 = arith.constant 0 : i32
    return %c0_i32, %c0_i32_0 : i32, i32
  }
  func.func @transform_6(%arg0: i32) -> (i32, i32) {
    %c0_i32 = arith.constant 0 : i32
    %c0_i32_0 = arith.constant 0 : i32
    %c0_i32_1 = arith.constant 0 : i32
    return %c0_i32, %c0_i32_0 : i32, i32
  }
  func.func @transform_7(%arg0: i32) -> (i32, i32) {
    %c0_i32 = arith.constant 0 : i32
    %c0_i32_0 = arith.constant 0 : i32
    %c0_i32_1 = arith.constant 0 : i32
    return %c0_i32, %c0_i32_0 : i32, i32
  }
  func.func @transform_8(%arg0: i32) -> (i32, i32) {
    %c0_i32 = arith.constant 0 : i32
    %c0_i32_0 = arith.constant 0 : i32
    %c0_i32_1 = arith.constant 0 : i32
    return %c0_i32, %c0_i32_0 : i32, i32
  }
  func.func @transform_9(%arg0: i32) -> (i32, i32) {
    %c0_i32 = arith.constant 0 : i32
    %c0_i32_0 = arith.constant 0 : i32
    %c0_i32_1 = arith.constant 0 : i32
    return %c0_i32, %c0_i32_0 : i32, i32
  }
  func.func @transform_10(%arg0: i32) -> (i32, i32) {
    %c0_i32 = arith.constant 0 : i32
    %c0_i32_0 = arith.constant 0 : i32
    %c0_i32_1 = arith.constant 0 : i32
    return %c0_i32, %c0_i32_0 : i32, i32
  }
  func.func @transform_11(%arg0: i32) -> (i32, i32) {
    %c0_i32 = arith.constant 0 : i32
    %c0_i32_0 = arith.constant 0 : i32
    %c0_i32_1 = arith.constant 0 : i32
    return %c0_i32, %c0_i32_0 : i32, i32
  }
  func.func @transform_12(%arg0: i32) -> (i32, i32) {
    %c0_i32 = arith.constant 0 : i32
    %c0_i32_0 = arith.constant 0 : i32
    %c0_i32_1 = arith.constant 0 : i32
    return %c0_i32, %c0_i32_0 : i32, i32
  }
  func.func @transform_13(%arg0: i32) -> (i32, i32) {
    %c0_i32 = arith.constant 0 : i32
    %c0_i32_0 = arith.constant 0 : i32
    %c0_i32_1 = arith.constant 0 : i32
    return %c0_i32, %c0_i32_0 : i32, i32
  }
  func.func @transform_14(%arg0: i32) -> (i32, i32) {
    %c0_i32 = arith.constant 0 : i32
    %c0_i32_0 = arith.constant 0 : i32
    return %c0_i32, %arg0 : i32, i32
  }
}

</mosaic_0001>

<llo_original>
// kernel: tpu_custom_call.1
$region0: #{tpu_custom_call.1}
  #allocation0 [shape = 'u32[]', space=smem, size = 0x4, offset = 0x4, fixed_abs, tag = 'smem constant byte address 0x4 - core index']
  #allocation1 [shape = 'u32[72,128]{1,0:T(1,128)}', space=vmem, size = 0x9000, scoped, tag = 'internal scratch']
  #allocation2 [shape = 'f32[1,1]{1,0:T(1,128)S(1)}', space=vmem, size = 0x200, scoped, tag = 'scoped memory for tpu_custom_call.1']
  %s0 = inlined_call_operand.vmem [shape: f32[4,512], index: 0, kind: input, shape index: {}]
  %s1 = inlined_call_operand.vmem [shape: f32[32,512], index: 1, kind: input, shape index: {}]
  %s2 = inlined_call_operand.vmem [shape: f32[4,512], index: 2, kind: input, shape index: {}]
  %s3 = inlined_call_operand.vmem [shape: bf16[128,512], index: 3, kind: input, shape index: {}]
  %s4 = inlined_call_operand.vmem [shape: f32[1,512], index: 4, kind: input, shape index: {}]
  %s5 = inlined_call_operand.vmem [shape: bf16[64,128], index: 5, kind: input, shape index: {}]
  %s6 = inlined_call_operand.vmem [shape: f32[64,1], index: 6, kind: input, shape index: {}]
  %s7 = inlined_call_operand.vmem [shape: f32[128,64], index: 7, kind: input, shape index: {}]
  %s8 = inlined_call_operand.vmem [shape: f32[192,32], index: 8, kind: input, shape index: {}]
  %s9 = inlined_call_operand.vmem [shape: f32[192,1], index: 9, kind: input, shape index: {}]
  %s10 = inlined_call_operand.vmem [shape: f32[64,128], index: 10, kind: input, shape index: {}]
  %s11 = inlined_call_operand.vmem [shape: f32[64,1], index: 11, kind: input, shape index: {}]
  %s12 = inlined_call_operand.vmem [shape: f32[32,1], index: 12, kind: input, shape index: {}]
  %s13 = inlined_call_operand.<no memory space> [shape: f32[1,1], index: 13, kind: input, shape index: {}]
  %s14 = inlined_call_operand.hbm [shape: f32[5,512], index: 14, kind: output, shape index: {}]
  %s15 = sld [smem:[#allocation0]]
  $region66: #{tpu_custom_call.1} parent=0
    _
  %s17 = ssub.s32 1, %s15
  %s18 = scalar_select 0, %s17, %s15
  %v19 = vstv %s13
  %20 = vst [vmem:[#allocation2] sm:$0x1] %v19
  $region1: #{tpu_custom_call.1} parent=0
    #allocation3 [shape = 'u8[16384]{0}', space=vmem, size = 0x4000, scoped, tag = 'output window, operand 0, single buffered']
    #allocation4 [shape = 's32[1]{0}', space=sflag, size = 0x4, scoped, tag = 'scoped memory for tpu_custom_call.1']
    %21 = vsyncpa [#allocation4], 0
    // Predicated region
    $region2: #{tpu_custom_call.1} parent=1 // pred_check
      _
    $region3: #{tpu_custom_call.1} parent=1 // pred_check_branch
      %23 = sbr.rel (0) target = $region5
    $region4: #{tpu_custom_call.1} parent=1 // pred_region
      _
    $region5: #{tpu_custom_call.1} parent=1 // pred_fallthru
      _
    // Predicated region
    $region6: #{tpu_custom_call.1} parent=1 // pred_check
      _
    $region7: #{tpu_custom_call.1} parent=1 // pred_check_branch
      %25 = sbr.rel (0) target = $region9
    $region8: #{tpu_custom_call.1} parent=1 // pred_region
      _
    $region9: #{tpu_custom_call.1} parent=1 // pred_fallthru
      _
    // Predicated region
    $region10: #{tpu_custom_call.1} parent=1 // pred_check
      _
    $region11: #{tpu_custom_call.1} parent=1 // pred_check_branch
      %27 = sbr.rel (0) target = $region13
    $region12: #{tpu_custom_call.1} parent=1 // pred_region
      _
    $region13: #{tpu_custom_call.1} parent=1 // pred_fallthru
      _
    // Predicated region
    $region14: #{tpu_custom_call.1} parent=1 // pred_check
      _
    $region15: #{tpu_custom_call.1} parent=1 // pred_check_branch
      %29 = sbr.rel (0) target = $region17
    $region16: #{tpu_custom_call.1} parent=1 // pred_region
      _
    $region17: #{tpu_custom_call.1} parent=1 // pred_fallthru
      _
    // Predicated region
    $region18: #{tpu_custom_call.1} parent=1 // pred_check
      _
    $region19: #{tpu_custom_call.1} parent=1 // pred_check_branch
      %31 = sbr.rel (0) target = $region21
    $region20: #{tpu_custom_call.1} parent=1 // pred_region
      _
    $region21: #{tpu_custom_call.1} parent=1 // pred_fallthru
      _
    // Predicated region
    $region22: #{tpu_custom_call.1} parent=1 // pred_check
      _
    $region23: #{tpu_custom_call.1} parent=1 // pred_check_branch
      %33 = sbr.rel (0) target = $region25
    $region24: #{tpu_custom_call.1} parent=1 // pred_region
      _
    $region25: #{tpu_custom_call.1} parent=1 // pred_fallthru
      _
    // Predicated region
    $region26: #{tpu_custom_call.1} parent=1 // pred_check
      _
    $region27: #{tpu_custom_call.1} parent=1 // pred_check_branch
      %35 = sbr.rel (0) target = $region29
    $region28: #{tpu_custom_call.1} parent=1 // pred_region
      _
    $region29: #{tpu_custom_call.1} parent=1 // pred_fallthru
      _
    // Predicated region
    $region30: #{tpu_custom_call.1} parent=1 // pred_check
      _
    $region31: #{tpu_custom_call.1} parent=1 // pred_check_branch
      %37 = sbr.rel (0) target = $region33
    $region32: #{tpu_custom_call.1} parent=1 // pred_region
      _
    $region33: #{tpu_custom_call.1} parent=1 // pred_fallthru
      _
    // Predicated region
    $region34: #{tpu_custom_call.1} parent=1 // pred_check
      _
    $region35: #{tpu_custom_call.1} parent=1 // pred_check_branch
      %39 = sbr.rel (0) target = $region37
    $region36: #{tpu_custom_call.1} parent=1 // pred_region
      _
    $region37: #{tpu_custom_call.1} parent=1 // pred_fallthru
      _
    // Predicated region
    $region38: #{tpu_custom_call.1} parent=1 // pred_check
      _
    $region39: #{tpu_custom_call.1} parent=1 // pred_check_branch
      %41 = sbr.rel (0) target = $region41
    $region40: #{tpu_custom_call.1} parent=1 // pred_region
      _
    $region41: #{tpu_custom_call.1} parent=1 // pred_fallthru
      _
    // Predicated region
    $region42: #{tpu_custom_call.1} parent=1 // pred_check
      _
    $region43: #{tpu_custom_call.1} parent=1 // pred_check_branch
      %43 = sbr.rel (0) target = $region45
    $region44: #{tpu_custom_call.1} parent=1 // pred_region
      _
    $region45: #{tpu_custom_call.1} parent=1 // pred_fallthru
      _
    // Predicated region
    $region46: #{tpu_custom_call.1} parent=1 // pred_check
      _
    $region47: #{tpu_custom_call.1} parent=1 // pred_check_branch
      %45 = sbr.rel (0) target = $region49
    $region48: #{tpu_custom_call.1} parent=1 // pred_region
      _
    $region49: #{tpu_custom_call.1} parent=1 // pred_fallthru
      _
    // Predicated region
    $region50: #{tpu_custom_call.1} parent=1 // pred_check
      _
    $region51: #{tpu_custom_call.1} parent=1 // pred_check_branch
      %47 = sbr.rel (0) target = $region53
    $region52: #{tpu_custom_call.1} parent=1 // pred_region
      _
    $region53: #{tpu_custom_call.1} parent=1 // pred_fallthru
      _
    // Predicated region
    $region54: #{tpu_custom_call.1} parent=1 // pred_check
      _
    $region55: #{tpu_custom_call.1} parent=1 // pred_check_branch
      %49 = sbr.rel (0) target = $region57
    $region56: #{tpu_custom_call.1} parent=1 // pred_region
      _
    $region57: #{tpu_custom_call.1} parent=1 // pred_fallthru
      _
    %v50 = vld [vmem:[%s0] sm:$0xff]
    %v51 = vld [vmem:[%s0 + $0x8] sm:$0xff]
    %v52 = vld [vmem:[%s1] sm:$0xff]
    %v53 = vld [vmem:[%s1 + $0x8] sm:$0xff]
    %v54 = vld [vmem:[%s1 + $0x10] sm:$0xff]
    %v55 = vld [vmem:[%s1 + $0x18] sm:$0xff]
    %v56 = vld [vmem:[%s1 + $0x20] sm:$0xff]
    %v57 = vld [vmem:[%s1 + $0x28] sm:$0xff]
    %v58 = vld [vmem:[%s1 + $0x30] sm:$0xff]
    %v59 = vld [vmem:[%s1 + $0x38] sm:$0xff]
    %v60 = vld [vmem:[%s1 + $0x40] sm:$0xff]
    %v61 = vld [vmem:[%s1 + $0x48] sm:$0xff]
    %v62 = vld [vmem:[%s1 + $0x50] sm:$0xff]
    %v63 = vld [vmem:[%s1 + $0x58] sm:$0xff]
    %v64 = vld [vmem:[%s1 + $0x60] sm:$0xff]
    %v65 = vld [vmem:[%s1 + $0x68] sm:$0xff]
    %v66 = vld [vmem:[%s1 + $0x70] sm:$0xff]
    %v67 = vld [vmem:[%s1 + $0x78] sm:$0xff]
    %v68 = vld [vmem:[%s2] sm:$0xff]
    %v69 = vld [vmem:[%s2 + $0x8] sm:$0xff]
    %v70 = vld [vmem:[%s4] sm:$0xf]
    %v71 = vld [vmem:[%s5] sm:$0xf]
    %v72 = vld [vmem:[%s5 + $0x4] sm:$0xf]
    %v73 = vld [vmem:[%s5 + $0x8] sm:$0xf]
    %v74 = vld [vmem:[%s5 + $0xc] sm:$0xf]
    %v75 = vld [vmem:[%s5 + $0x10] sm:$0xf]
    %v76 = vld [vmem:[%s5 + $0x14] sm:$0xf]
    %v77 = vld [vmem:[%s5 + $0x18] sm:$0xf]
    %v78 = vld [vmem:[%s5 + $0x1c] sm:$0xf]
    %v79 = vld [vmem:[%s3] sm:$0xff]
    %v80 = vld [vmem:[%s3 + $0x8] sm:$0xff]
    %v81 = vld [vmem:[%s3 + $0x10] sm:$0xff]
    %v82 = vld [vmem:[%s3 + $0x18] sm:$0xff]
    %v83 = vld [vmem:[%s3 + $0x20] sm:$0xff]
    %v84 = vld [vmem:[%s3 + $0x28] sm:$0xff]
    %v85 = vld [vmem:[%s3 + $0x30] sm:$0xff]
    %v86 = vld [vmem:[%s3 + $0x38] sm:$0xff]
    %v87 = vld [vmem:[%s3 + $0x40] sm:$0xff]
    %v88 = vld [vmem:[%s3 + $0x48] sm:$0xff]
    %v89 = vld [vmem:[%s3 + $0x50] sm:$0xff]
    %v90 = vld [vmem:[%s3 + $0x58] sm:$0xff]
    %v91 = vld [vmem:[%s3 + $0x60] sm:$0xff]
    %v92 = vld [vmem:[%s3 + $0x68] sm:$0xff]
    %v93 = vld [vmem:[%s3 + $0x70] sm:$0xff]
    %v94 = vld [vmem:[%s3 + $0x78] sm:$0xff]
    %v95 = vld [vmem:[%s3 + $0x80] sm:$0xff]
    %v96 = vld [vmem:[%s3 + $0x88] sm:$0xff]
    %v97 = vld [vmem:[%s3 + $0x90] sm:$0xff]
    %v98 = vld [vmem:[%s3 + $0x98] sm:$0xff]
    %v99 = vld [vmem:[%s3 + $0xa0] sm:$0xff]
    %v100 = vld [vmem:[%s3 + $0xa8] sm:$0xff]
    %v101 = vld [vmem:[%s3 + $0xb0] sm:$0xff]
    %v102 = vld [vmem:[%s3 + $0xb8] sm:$0xff]
    %v103 = vld [vmem:[%s3 + $0xc0] sm:$0xff]
    %v104 = vld [vmem:[%s3 + $0xc8] sm:$0xff]
    %v105 = vld [vmem:[%s3 + $0xd0] sm:$0xff]
    %v106 = vld [vmem:[%s3 + $0xd8] sm:$0xff]
    %v107 = vld [vmem:[%s3 + $0xe0] sm:$0xff]
    %v108 = vld [vmem:[%s3 + $0xe8] sm:$0xff]
    %v109 = vld [vmem:[%s3 + $0xf0] sm:$0xff]
    %v110 = vld [vmem:[%s3 + $0xf8] sm:$0xff]
    %v111 = vld [vmem:[%s6] sm:$0xff]
    %v112 = vld [vmem:[%s6 + $0x8] sm:$0xff]
    %v113 = vld [vmem:[%s6 + $0x10] sm:$0xff]
    %v114 = vld [vmem:[%s6 + $0x18] sm:$0xff]
    %v115 = vld [vmem:[%s6 + $0x20] sm:$0xff]
    %v116 = vld [vmem:[%s6 + $0x28] sm:$0xff]
    %v117 = vld [vmem:[%s6 + $0x30] sm:$0xff]
    %v118 = vld [vmem:[%s6 + $0x38] sm:$0xff]
    %120 = vset.pattern.permute.xlu0 0
    %121 = vperm.xlu0 %120, %v111
    %v122 = vpop.permute.xlu0 %121
    %125 = vset.pattern.permute.xlu0 0
    %126 = vperm.xlu0 %125, %v112
    %v127 = vpop.permute.xlu0 %126
    %130 = vset.pattern.permute.xlu0 0
    %131 = vperm.xlu0 %130, %v113
    %v132 = vpop.permute.xlu0 %131
    %135 = vset.pattern.permute.xlu0 0
    %136 = vperm.xlu0 %135, %v114
    %v137 = vpop.permute.xlu0 %136
    %140 = vset.pattern.permute.xlu0 0
    %141 = vperm.xlu0 %140, %v115
    %v142 = vpop.permute.xlu0 %141
    %145 = vset.pattern.permute.xlu0 0
    %146 = vperm.xlu0 %145, %v116
    %v147 = vpop.permute.xlu0 %146
    %150 = vset.pattern.permute.xlu0 0
    %151 = vperm.xlu0 %150, %v117
    %v152 = vpop.permute.xlu0 %151
    %155 = vset.pattern.permute.xlu0 0
    %156 = vperm.xlu0 %155, %v118
    %v157 = vpop.permute.xlu0 %156
    %v167 = vunpack.c.l.b16 %v71
    %v168 = vunpack.c.l.b16 %v72
    %v169 = vunpack.c.l.b16 %v73
    %v170 = vunpack.c.l.b16 %v74
    %v171 = vunpack.c.l.b16 %v75
    %v172 = vunpack.c.l.b16 %v76
    %v173 = vunpack.c.l.b16 %v77
    %v174 = vunpack.c.l.b16 %v78
    %v175 = vpack.c.b16 %v168, %v167
    %v176 = vpack.c.b16 %v170, %v169
    %v177 = vpack.c.b16 %v172, %v171
    %v178 = vpack.c.b16 %v174, %v173
    %v215 = vunpack.c.l.b16 %v79
    %v216 = vunpack.c.h.b16 %v79
    %v217 = vunpack.c.l.b16 %v80
    %v218 = vunpack.c.h.b16 %v80
    %v219 = vunpack.c.l.b16 %v81
    %v220 = vunpack.c.h.b16 %v81
    %v221 = vunpack.c.l.b16 %v82
    %v222 = vunpack.c.h.b16 %v82
    %v223 = vunpack.c.l.b16 %v83
    %v224 = vunpack.c.h.b16 %v83
    %v225 = vunpack.c.l.b16 %v84
    %v226 = vunpack.c.h.b16 %v84
    %v227 = vunpack.c.l.b16 %v85
    %v228 = vunpack.c.h.b16 %v85
    %v229 = vunpack.c.l.b16 %v86
    %v230 = vunpack.c.h.b16 %v86
    %v231 = vunpack.c.l.b16 %v87
    %v232 = vunpack.c.h.b16 %v87
    %v233 = vunpack.c.l.b16 %v88
    %v234 = vunpack.c.h.b16 %v88
    %v235 = vunpack.c.l.b16 %v89
    %v236 = vunpack.c.h.b16 %v89
    %v237 = vunpack.c.l.b16 %v90
    %v238 = vunpack.c.h.b16 %v90
    %v239 = vunpack.c.l.b16 %v91
    %v240 = vunpack.c.h.b16 %v91
    %v241 = vunpack.c.l.b16 %v92
    %v242 = vunpack.c.h.b16 %v92
    %v243 = vunpack.c.l.b16 %v93
    %v244 = vunpack.c.h.b16 %v93
    %v245 = vunpack.c.l.b16 %v94
    %v246 = vunpack.c.h.b16 %v94
    %v247 = vunpack.c.l.b16 %v95
    %v248 = vunpack.c.h.b16 %v95
    %v249 = vunpack.c.l.b16 %v96
    %v250 = vunpack.c.h.b16 %v96
    %v251 = vunpack.c.l.b16 %v97
    %v252 = vunpack.c.h.b16 %v97
    %v253 = vunpack.c.l.b16 %v98
    %v254 = vunpack.c.h.b16 %v98
    %v255 = vunpack.c.l.b16 %v99
    %v256 = vunpack.c.h.b16 %v99
    %v257 = vunpack.c.l.b16 %v100
    %v258 = vunpack.c.h.b16 %v100
    %v259 = vunpack.c.l.b16 %v101
    %v260 = vunpack.c.h.b16 %v101
    %v261 = vunpack.c.l.b16 %v102
    %v262 = vunpack.c.h.b16 %v102
    %v263 = vunpack.c.l.b16 %v103
    %v264 = vunpack.c.h.b16 %v103
    %v265 = vunpack.c.l.b16 %v104
    %v266 = vunpack.c.h.b16 %v104
    %v267 = vunpack.c.l.b16 %v105
    %v268 = vunpack.c.h.b16 %v105
    %v269 = vunpack.c.l.b16 %v106
    %v270 = vunpack.c.h.b16 %v106
    %v271 = vunpack.c.l.b16 %v107
    %v272 = vunpack.c.h.b16 %v107
    %v273 = vunpack.c.l.b16 %v108
    %v274 = vunpack.c.h.b16 %v108
    %v275 = vunpack.c.l.b16 %v109
    %v276 = vunpack.c.h.b16 %v109
    %v277 = vunpack.c.l.b16 %v110
    %v278 = vunpack.c.h.b16 %v110
    %v279 = vpack.c.b16 %v219, %v215
    %v280 = vpack.c.b16 %v220, %v216
    %v281 = vpack.c.b16 %v221, %v217
    %v282 = vpack.c.b16 %v222, %v218
    %v283 = vpack.c.b16 %v227, %v223
    %v284 = vpack.c.b16 %v228, %v224
    %v285 = vpack.c.b16 %v229, %v225
    %v286 = vpack.c.b16 %v230, %v226
    %v287 = vpack.c.b16 %v235, %v231
    %v288 = vpack.c.b16 %v236, %v232
    %v289 = vpack.c.b16 %v237, %v233
    %v290 = vpack.c.b16 %v238, %v234
    %v291 = vpack.c.b16 %v243, %v239
    %v292 = vpack.c.b16 %v244, %v240
    %v293 = vpack.c.b16 %v245, %v241
    %v294 = vpack.c.b16 %v246, %v242
    %v295 = vpack.c.b16 %v251, %v247
    %v296 = vpack.c.b16 %v252, %v248
    %v297 = vpack.c.b16 %v253, %v249
    %v298 = vpack.c.b16 %v254, %v250
    %v299 = vpack.c.b16 %v259, %v255
    %v300 = vpack.c.b16 %v260, %v256
    %v301 = vpack.c.b16 %v261, %v257
    %v302 = vpack.c.b16 %v262, %v258
    %v303 = vpack.c.b16 %v267, %v263
    %v304 = vpack.c.b16 %v268, %v264
    %v305 = vpack.c.b16 %v269, %v265
    %v306 = vpack.c.b16 %v270, %v266
    %v307 = vpack.c.b16 %v275, %v271
    %v308 = vpack.c.b16 %v276, %v272
    %v309 = vpack.c.b16 %v277, %v273
    %v310 = vpack.c.b16 %v278, %v274
    %343 = vmatpush.bf16.msra.mxu0 %v307
    %344 = vmatpush.bf16.msra.mxu0 %v303
    %345 = vmatpush.bf16.msra.mxu0 %v299
    %346 = vmatpush.bf16.msra.mxu0 %v295
    %347 = vmatpush.bf16.msra.mxu0 %v291
    %348 = vmatpush.bf16.msra.mxu0 %v287
    %349 = vmatpush.bf16.msra.mxu0 %v283
    %350 = vmatpush.bf16.msra.mxu0 %v279
    %351 = vmatmul.bf16.gmra.mxu0 %v175
    %v352 = vpop.f32.mrf.mxu0
    %v353 = vadd.f32 %v122, %v352
    %v354 = vpop.f32.mrf.mxu0
    %v355 = vadd.f32 %v127, %v354
    %356 = vmatmul.bf16.gmra.mxu0 %v176
    %v357 = vpop.f32.mrf.mxu0
    %v358 = vadd.f32 %v132, %v357
    %v359 = vpop.f32.mrf.mxu0
    %v360 = vadd.f32 %v137, %v359
    %361 = vmatmul.bf16.gmra.mxu0 %v177
    %v362 = vpop.f32.mrf.mxu0
    %v363 = vadd.f32 %v142, %v362
    %v364 = vpop.f32.mrf.mxu0
    %v365 = vadd.f32 %v147, %v364
    %366 = vmatmul.bf16.gmra.mxu0 %v178
    %v367 = vpop.f32.mrf.mxu0
    %v368 = vadd.f32 %v152, %v367
    %v369 = vpop.f32.mrf.mxu0
    %v370 = vadd.f32 %v157, %v369
    %371 = vdwg.mxu0
    %372 = vmatpush.bf16.msra.mxu0 %v308
    %373 = vmatpush.bf16.msra.mxu0 %v304
    %374 = vmatpush.bf16.msra.mxu0 %v300
    %375 = vmatpush.bf16.msra.mxu0 %v296
    %376 = vmatpush.bf16.msra.mxu0 %v292
    %377 = vmatpush.bf16.msra.mxu0 %v288
    %378 = vmatpush.bf16.msra.mxu0 %v284
    %379 = vmatpush.bf16.msra.mxu0 %v280
    %380 = vmatmul.bf16.gmra.mxu0 %v175
    %v381 = vpop.f32.mrf.mxu0
    %v382 = vadd.f32 %v122, %v381
    %v383 = vpop.f32.mrf.mxu0
    %v384 = vadd.f32 %v127, %v383
    %385 = vmatmul.bf16.gmra.mxu0 %v176
    %v386 = vpop.f32.mrf.mxu0
    %v387 = vadd.f32 %v132, %v386
    %v388 = vpop.f32.mrf.mxu0
    %v389 = vadd.f32 %v137, %v388
    %390 = vmatmul.bf16.gmra.mxu0 %v177
    %v391 = vpop.f32.mrf.mxu0
    %v392 = vadd.f32 %v142, %v391
    %v393 = vpop.f32.mrf.mxu0
    %v394 = vadd.f32 %v147, %v393
    %395 = vmatmul.bf16.gmra.mxu0 %v178
    %v396 = vpop.f32.mrf.mxu0
    %v397 = vadd.f32 %v152, %v396
    %v398 = vpop.f32.mrf.mxu0
    %v399 = vadd.f32 %v157, %v398
    %400 = vdwg.mxu0
    %401 = vmatpush.bf16.msra.mxu0 %v309
    %402 = vmatpush.bf16.msra.mxu0 %v305
    %403 = vmatpush.bf16.msra.mxu0 %v301
    %404 = vmatpush.bf16.msra.mxu0 %v297
    %405 = vmatpush.bf16.msra.mxu0 %v293
    %406 = vmatpush.bf16.msra.mxu0 %v289
    %407 = vmatpush.bf16.msra.mxu0 %v285
    %408 = vmatpush.bf16.msra.mxu0 %v281
    %409 = vmatmul.bf16.gmra.mxu0 %v175
    %v410 = vpop.f32.mrf.mxu0
    %v411 = vadd.f32 %v122, %v410
    %v412 = vpop.f32.mrf.mxu0
    %v413 = vadd.f32 %v127, %v412
    %414 = vmatmul.bf16.gmra.mxu0 %v176
    %v415 = vpop.f32.mrf.mxu0
    %v416 = vadd.f32 %v132, %v415
    %v417 = vpop.f32.mrf.mxu0
    %v418 = vadd.f32 %v137, %v417
    %419 = vmatmul.bf16.gmra.mxu0 %v177
    %v420 = vpop.f32.mrf.mxu0
    %v421 = vadd.f32 %v142, %v420
    %v422 = vpop.f32.mrf.mxu0
    %v423 = vadd.f32 %v147, %v422
    %424 = vmatmul.bf16.gmra.mxu0 %v178
    %v425 = vpop.f32.mrf.mxu0
    %v426 = vadd.f32 %v152, %v425
    %v427 = vpop.f32.mrf.mxu0
    %v428 = vadd.f32 %v157, %v427
    %429 = vdwg.mxu0
    %430 = vmatpush.bf16.msra.mxu0 %v310
    %431 = vmatpush.bf16.msra.mxu0 %v306
    %432 = vmatpush.bf16.msra.mxu0 %v302
    %433 = vmatpush.bf16.msra.mxu0 %v298
    %434 = vmatpush.bf16.msra.mxu0 %v294
    %435 = vmatpush.bf16.msra.mxu0 %v290
    %436 = vmatpush.bf16.msra.mxu0 %v286
    %437 = vmatpush.bf16.msra.mxu0 %v282
    %438 = vmatmul.bf16.gmra.mxu0 %v175
    %v439 = vpop.f32.mrf.mxu0
    %v440 = vadd.f32 %v122, %v439
    %v441 = vpop.f32.mrf.mxu0
    %v442 = vadd.f32 %v127, %v441
    %443 = vmatmul.bf16.gmra.mxu0 %v176
    %v444 = vpop.f32.mrf.mxu0
    %v445 = vadd.f32 %v132, %v444
    %v446 = vpop.f32.mrf.mxu0
    %v447 = vadd.f32 %v137, %v446
    %448 = vmatmul.bf16.gmra.mxu0 %v177
    %v449 = vpop.f32.mrf.mxu0
    %v450 = vadd.f32 %v142, %v449
    %v451 = vpop.f32.mrf.mxu0
    %v452 = vadd.f32 %v147, %v451
    %453 = vmatmul.bf16.gmra.mxu0 %v178
    %v454 = vpop.f32.mrf.mxu0
    %v455 = vadd.f32 %v152, %v454
    %v456 = vpop.f32.mrf.mxu0
    %v457 = vadd.f32 %v157, %v456
    %458 = vdwg.mxu0
    %v459 = vmax.f32 %v353, 0.0
    %v460 = vmax.f32 %v382, 0.0
    %v461 = vmax.f32 %v411, 0.0
    %v462 = vmax.f32 %v440, 0.0
    %v463 = vmax.f32 %v355, 0.0
    %v464 = vmax.f32 %v384, 0.0
    %v465 = vmax.f32 %v413, 0.0
    %v466 = vmax.f32 %v442, 0.0
    %v467 = vmax.f32 %v358, 0.0
    %v468 = vmax.f32 %v387, 0.0
    %v469 = vmax.f32 %v416, 0.0
    %v470 = vmax.f32 %v445, 0.0
    %v471 = vmax.f32 %v360, 0.0
    %v472 = vmax.f32 %v389, 0.0
    %v473 = vmax.f32 %v418, 0.0
    %v474 = vmax.f32 %v447, 0.0
    %v475 = vmax.f32 %v363, 0.0
    %v476 = vmax.f32 %v392, 0.0
    %v477 = vmax.f32 %v421, 0.0
    %v478 = vmax.f32 %v450, 0.0
    %v479 = vmax.f32 %v365, 0.0
    %v480 = vmax.f32 %v394, 0.0
    %v481 = vmax.f32 %v423, 0.0
    %v482 = vmax.f32 %v452, 0.0
    %v483 = vmax.f32 %v368, 0.0
    %v484 = vmax.f32 %v397, 0.0
    %v485 = vmax.f32 %v426, 0.0
    %v486 = vmax.f32 %v455, 0.0
    %v487 = vmax.f32 %v370, 0.0
    %v488 = vmax.f32 %v399, 0.0
    %v489 = vmax.f32 %v428, 0.0
    %v490 = vmax.f32 %v457, 0.0
    %v491 = vld [vmem:[%s7] sm:$0xff]
    %v492 = vld [vmem:[%s7 + $0x8] sm:$0xff]
    %v493 = vld [vmem:[%s7 + $0x10] sm:$0xff]
    %v494 = vld [vmem:[%s7 + $0x18] sm:$0xff]
    %v495 = vld [vmem:[%s7 + $0x20] sm:$0xff]
    %v496 = vld [vmem:[%s7 + $0x28] sm:$0xff]
    %v497 = vld [vmem:[%s7 + $0x30] sm:$0xff]
    %v498 = vld [vmem:[%s7 + $0x38] sm:$0xff]
    %v499 = vld [vmem:[%s7 + $0x40] sm:$0xff]
    %v500 = vld [vmem:[%s7 + $0x48] sm:$0xff]
    %v501 = vld [vmem:[%s7 + $0x50] sm:$0xff]
    %v502 = vld [vmem:[%s7 + $0x58] sm:$0xff]
    %v503 = vld [vmem:[%s7 + $0x60] sm:$0xff]
    %v504 = vld [vmem:[%s7 + $0x68] sm:$0xff]
    %v505 = vld [vmem:[%s7 + $0x70] sm:$0xff]
    %v506 = vld [vmem:[%s7 + $0x78] sm:$0xff]
    %vm507 = vcmask 523264
    %v509 = vsel %vm507, %v491, 0
    %v512 = vsel %vm507, %v492, 0
    %v515 = vsel %vm507, %v493, 0
    %v518 = vsel %vm507, %v494, 0
    %v521 = vsel %vm507, %v495, 0
    %v524 = vsel %vm507, %v496, 0
    %v527 = vsel %vm507, %v497, 0
    %v530 = vsel %vm507, %v498, 0
    %v533 = vsel %vm507, %v499, 0
    %v536 = vsel %vm507, %v500, 0
    %v539 = vsel %vm507, %v501, 0
    %v542 = vsel %vm507, %v502, 0
    %v545 = vsel %vm507, %v503, 0
    %v548 = vsel %vm507, %v504, 0
    %v551 = vsel %vm507, %v505, 0
    %v554 = vsel %vm507, %v506, 0
    %556 = vmatpush.msra.mxu0 0.0
    %557 = vmatpush.msra.mxu0 0.0
    %558 = vmatpush.msra.mxu0 0.0
    %559 = vmatpush.msra.mxu0 0.0
    %560 = vmatpush.msra.mxu0 0.0
    %561 = vmatpush.msra.mxu0 0.0
    %562 = vmatpush.msra.mxu0 0.0
    %563 = vmatpush.msra.mxu0 0.0
    %564 = vmatpush.msra.mxu0 %v487
    %565 = vmatpush.msra.mxu0 %v483
    %566 = vmatpush.msra.mxu0 %v479
    %567 = vmatpush.msra.mxu0 %v475
    %568 = vmatpush.msra.mxu0 %v471
    %569 = vmatpush.msra.mxu0 %v467
    %570 = vmatpush.msra.mxu0 %v463
    %571 = vmatpush.msra.mxu0 %v459
    %572 = vmatmul.f32.gmra.mxu0 %v509
    %v573 = vpop.f32.mrf.mxu0
    %v574 = vadd.f32 0.0, %v573
    %575 = vmatmul.f32.gmra.mxu0 %v512
    %v576 = vpop.f32.mrf.mxu0
    %v577 = vadd.f32 0.0, %v576
    %578 = vmatmul.f32.gmra.mxu0 %v515
    %v579 = vpop.f32.mrf.mxu0
    %v580 = vadd.f32 0.0, %v579
    %581 = vmatmul.f32.gmra.mxu0 %v518
    %v582 = vpop.f32.mrf.mxu0
    %v583 = vadd.f32 0.0, %v582
    %584 = vmatmul.f32.gmra.mxu0 %v521
    %v585 = vpop.f32.mrf.mxu0
    %v586 = vadd.f32 0.0, %v585
    %587 = vmatmul.f32.gmra.mxu0 %v524
    %v588 = vpop.f32.mrf.mxu0
    %v589 = vadd.f32 0.0, %v588
    %590 = vmatmul.f32.gmra.mxu0 %v527
    %v591 = vpop.f32.mrf.mxu0
    %v592 = vadd.f32 0.0, %v591
    %593 = vmatmul.f32.gmra.mxu0 %v530
    %v594 = vpop.f32.mrf.mxu0
    %v595 = vadd.f32 0.0, %v594
    %596 = vmatmul.f32.gmra.mxu0 %v533
    %v597 = vpop.f32.mrf.mxu0
    %v598 = vadd.f32 0.0, %v597
    %599 = vmatmul.f32.gmra.mxu0 %v536
    %v600 = vpop.f32.mrf.mxu0
    %v601 = vadd.f32 0.0, %v600
    %602 = vmatmul.f32.gmra.mxu0 %v539
    %v603 = vpop.f32.mrf.mxu0
    %v604 = vadd.f32 0.0, %v603
    %605 = vmatmul.f32.gmra.mxu0 %v542
    %v606 = vpop.f32.mrf.mxu0
    %v607 = vadd.f32 0.0, %v606
    %608 = vmatmul.f32.gmra.mxu0 %v545
    %v609 = vpop.f32.mrf.mxu0
    %v610 = vadd.f32 0.0, %v609
    %611 = vmatmul.f32.gmra.mxu0 %v548
    %v612 = vpop.f32.mrf.mxu0
    %v613 = vadd.f32 0.0, %v612
    %614 = vmatmul.f32.gmra.mxu0 %v551
    %v615 = vpop.f32.mrf.mxu0
    %v616 = vadd.f32 0.0, %v615
    %617 = vmatmul.f32.gmra.mxu0 %v554
    %v618 = vpop.f32.mrf.mxu0
    %v619 = vadd.f32 0.0, %v618
    %620 = vdwg.mxu0
    %621 = vmatpush.msra.mxu0 0.0
    %622 = vmatpush.msra.mxu0 0.0
    %623 = vmatpush.msra.mxu0 0.0
    %624 = vmatpush.msra.mxu0 0.0
    %625 = vmatpush.msra.mxu0 0.0
    %626 = vmatpush.msra.mxu0 0.0
    %627 = vmatpush.msra.mxu0 0.0
    %628 = vmatpush.msra.mxu0 0.0
    %629 = vmatpush.msra.mxu0 %v488
    %630 = vmatpush.msra.mxu0 %v484
    %631 = vmatpush.msra.mxu0 %v480
    %632 = vmatpush.msra.mxu0 %v476
    %633 = vmatpush.msra.mxu0 %v472
    %634 = vmatpush.msra.mxu0 %v468
    %635 = vmatpush.msra.mxu0 %v464
    %636 = vmatpush.msra.mxu0 %v460
    %637 = vmatmul.f32.gmra.mxu0 %v509
    %v638 = vpop.f32.mrf.mxu0
    %v639 = vadd.f32 0.0, %v638
    %640 = vmatmul.f32.gmra.mxu0 %v512
    %v641 = vpop.f32.mrf.mxu0
    %v642 = vadd.f32 0.0, %v641
    %643 = vmatmul.f32.gmra.mxu0 %v515
    %v644 = vpop.f32.mrf.mxu0
    %v645 = vadd.f32 0.0, %v644
    %646 = vmatmul.f32.gmra.mxu0 %v518
    %v647 = vpop.f32.mrf.mxu0
    %v648 = vadd.f32 0.0, %v647
    %649 = vmatmul.f32.gmra.mxu0 %v521
    %v650 = vpop.f32.mrf.mxu0
    %v651 = vadd.f32 0.0, %v650
    %652 = vmatmul.f32.gmra.mxu0 %v524
    %v653 = vpop.f32.mrf.mxu0
    %v654 = vadd.f32 0.0, %v653
    %655 = vmatmul.f32.gmra.mxu0 %v527
    %v656 = vpop.f32.mrf.mxu0
    %v657 = vadd.f32 0.0, %v656
    %658 = vmatmul.f32.gmra.mxu0 %v530
    %v659 = vpop.f32.mrf.mxu0
    %v660 = vadd.f32 0.0, %v659
    %661 = vmatmul.f32.gmra.mxu0 %v533
    %v662 = vpop.f32.mrf.mxu0
    %v663 = vadd.f32 0.0, %v662
    %664 = vmatmul.f32.gmra.mxu0 %v536
    %v665 = vpop.f32.mrf.mxu0
    %v666 = vadd.f32 0.0, %v665
    %667 = vmatmul.f32.gmra.mxu0 %v539
    %v668 = vpop.f32.mrf.mxu0
    %v669 = vadd.f32 0.0, %v668
    %670 = vmatmul.f32.gmra.mxu0 %v542
    %v671 = vpop.f32.mrf.mxu0
    %v672 = vadd.f32 0.0, %v671
    %673 = vmatmul.f32.gmra.mxu0 %v545
    %v674 = vpop.f32.mrf.mxu0
    %v675 = vadd.f32 0.0, %v674
    %676 = vmatmul.f32.gmra.mxu0 %v548
    %v677 = vpop.f32.mrf.mxu0
    %v678 = vadd.f32 0.0, %v677
    %679 = vmatmul.f32.gmra.mxu0 %v551
    %v680 = vpop.f32.mrf.mxu0
    %v681 = vadd.f32 0.0, %v680
    %682 = vmatmul.f32.gmra.mxu0 %v554
    %v683 = vpop.f32.mrf.mxu0
    %v684 = vadd.f32 0.0, %v683
    %685 = vdwg.mxu0
    %686 = vmatpush.msra.mxu0 0.0
    %687 = vmatpush.msra.mxu0 0.0
    %688 = vmatpush.msra.mxu0 0.0
    %689 = vmatpush.msra.mxu0 0.0
    %690 = vmatpush.msra.mxu0 0.0
    %691 = vmatpush.msra.mxu0 0.0
    %692 = vmatpush.msra.mxu0 0.0
    %693 = vmatpush.msra.mxu0 0.0
    %694 = vmatpush.msra.mxu0 %v489
    %695 = vmatpush.msra.mxu0 %v485
    %696 = vmatpush.msra.mxu0 %v481
    %697 = vmatpush.msra.mxu0 %v477
    %698 = vmatpush.msra.mxu0 %v473
    %699 = vmatpush.msra.mxu0 %v469
    %700 = vmatpush.msra.mxu0 %v465
    %701 = vmatpush.msra.mxu0 %v461
    %702 = vmatmul.f32.gmra.mxu0 %v509
    %v703 = vpop.f32.mrf.mxu0
    %v704 = vadd.f32 0.0, %v703
    %705 = vmatmul.f32.gmra.mxu0 %v512
    %v706 = vpop.f32.mrf.mxu0
    %v707 = vadd.f32 0.0, %v706
    %708 = vmatmul.f32.gmra.mxu0 %v515
    %v709 = vpop.f32.mrf.mxu0
    %v710 = vadd.f32 0.0, %v709
    %711 = vmatmul.f32.gmra.mxu0 %v518
    %v712 = vpop.f32.mrf.mxu0
    %v713 = vadd.f32 0.0, %v712
    %714 = vmatmul.f32.gmra.mxu0 %v521
    %v715 = vpop.f32.mrf.mxu0
    %v716 = vadd.f32 0.0, %v715
    %717 = vmatmul.f32.gmra.mxu0 %v524
    %v718 = vpop.f32.mrf.mxu0
    %v719 = vadd.f32 0.0, %v718
    %720 = vmatmul.f32.gmra.mxu0 %v527
    %v721 = vpop.f32.mrf.mxu0
    %v722 = vadd.f32 0.0, %v721
    %723 = vmatmul.f32.gmra.mxu0 %v530
    %v724 = vpop.f32.mrf.mxu0
    %v725 = vadd.f32 0.0, %v724
    %726 = vmatmul.f32.gmra.mxu0 %v533
    %v727 = vpop.f32.mrf.mxu0
    %v728 = vadd.f32 0.0, %v727
    %729 = vmatmul.f32.gmra.mxu0 %v536
    %v730 = vpop.f32.mrf.mxu0
    %v731 = vadd.f32 0.0, %v730
    %732 = vmatmul.f32.gmra.mxu0 %v539
    %v733 = vpop.f32.mrf.mxu0
    %v734 = vadd.f32 0.0, %v733
    %735 = vmatmul.f32.gmra.mxu0 %v542
    %v736 = vpop.f32.mrf.mxu0
    %v737 = vadd.f32 0.0, %v736
    %738 = vmatmul.f32.gmra.mxu0 %v545
    %v739 = vpop.f32.mrf.mxu0
    %v740 = vadd.f32 0.0, %v739
    %741 = vmatmul.f32.gmra.mxu0 %v548
    %v742 = vpop.f32.mrf.mxu0
    %v743 = vadd.f32 0.0, %v742
    %744 = vmatmul.f32.gmra.mxu0 %v551
    %v745 = vpop.f32.mrf.mxu0
    %v746 = vadd.f32 0.0, %v745
    %747 = vmatmul.f32.gmra.mxu0 %v554
    %v748 = vpop.f32.mrf.mxu0
    %v749 = vadd.f32 0.0, %v748
    %750 = vdwg.mxu0
    %751 = vmatpush.msra.mxu0 0.0
    %752 = vmatpush.msra.mxu0 0.0
    %753 = vmatpush.msra.mxu0 0.0
    %754 = vmatpush.msra.mxu0 0.0
    %755 = vmatpush.msra.mxu0 0.0
    %756 = vmatpush.msra.mxu0 0.0
    %757 = vmatpush.msra.mxu0 0.0
    %758 = vmatpush.msra.mxu0 0.0
    %759 = vmatpush.msra.mxu0 %v490
    %760 = vmatpush.msra.mxu0 %v486
    %761 = vmatpush.msra.mxu0 %v482
    %762 = vmatpush.msra.mxu0 %v478
    %763 = vmatpush.msra.mxu0 %v474
    %764 = vmatpush.msra.mxu0 %v470
    %765 = vmatpush.msra.mxu0 %v466
    %766 = vmatpush.msra.mxu0 %v462
    %767 = vmatmul.f32.gmra.mxu0 %v509
    %v768 = vpop.f32.mrf.mxu0
    %v769 = vadd.f32 0.0, %v768
    %770 = vmatmul.f32.gmra.mxu0 %v512
    %v771 = vpop.f32.mrf.mxu0
    %v772 = vadd.f32 0.0, %v771
    %773 = vmatmul.f32.gmra.mxu0 %v515
    %v774 = vpop.f32.mrf.mxu0
    %v775 = vadd.f32 0.0, %v774
    %776 = vmatmul.f32.gmra.mxu0 %v518
    %v777 = vpop.f32.mrf.mxu0
    %v778 = vadd.f32 0.0, %v777
    %779 = vmatmul.f32.gmra.mxu0 %v521
    %v780 = vpop.f32.mrf.mxu0
    %v781 = vadd.f32 0.0, %v780
    %782 = vmatmul.f32.gmra.mxu0 %v524
    %v783 = vpop.f32.mrf.mxu0
    %v784 = vadd.f32 0.0, %v783
    %785 = vmatmul.f32.gmra.mxu0 %v527
    %v786 = vpop.f32.mrf.mxu0
    %v787 = vadd.f32 0.0, %v786
    %788 = vmatmul.f32.gmra.mxu0 %v530
    %v789 = vpop.f32.mrf.mxu0
    %v790 = vadd.f32 0.0, %v789
    %791 = vmatmul.f32.gmra.mxu0 %v533
    %v792 = vpop.f32.mrf.mxu0
    %v793 = vadd.f32 0.0, %v792
    %794 = vmatmul.f32.gmra.mxu0 %v536
    %v795 = vpop.f32.mrf.mxu0
    %v796 = vadd.f32 0.0, %v795
    %797 = vmatmul.f32.gmra.mxu0 %v539
    %v798 = vpop.f32.mrf.mxu0
    %v799 = vadd.f32 0.0, %v798
    %800 = vmatmul.f32.gmra.mxu0 %v542
    %v801 = vpop.f32.mrf.mxu0
    %v802 = vadd.f32 0.0, %v801
    %803 = vmatmul.f32.gmra.mxu0 %v545
    %v804 = vpop.f32.mrf.mxu0
    %v805 = vadd.f32 0.0, %v804
    %806 = vmatmul.f32.gmra.mxu0 %v548
    %v807 = vpop.f32.mrf.mxu0
    %v808 = vadd.f32 0.0, %v807
    %809 = vmatmul.f32.gmra.mxu0 %v551
    %v810 = vpop.f32.mrf.mxu0
    %v811 = vadd.f32 0.0, %v810
    %812 = vmatmul.f32.gmra.mxu0 %v554
    %v813 = vpop.f32.mrf.mxu0
    %v814 = vadd.f32 0.0, %v813
    %815 = vdwg.mxu0
    %v816 = vld [vmem:[%s8] sm:$0xff]
    %v817 = vld [vmem:[%s8 + $0x8] sm:$0xff]
    %v818 = vld [vmem:[%s8 + $0x10] sm:$0xff]
    %v819 = vld [vmem:[%s8 + $0x18] sm:$0xff]
    %v820 = vld [vmem:[%s8 + $0x20] sm:$0xff]
    %v821 = vld [vmem:[%s8 + $0x28] sm:$0xff]
    %v822 = vld [vmem:[%s8 + $0x30] sm:$0xff]
    %v823 = vld [vmem:[%s8 + $0x38] sm:$0xff]
    %v824 = vld [vmem:[%s8 + $0x40] sm:$0xff]
    %v825 = vld [vmem:[%s8 + $0x48] sm:$0xff]
    %v826 = vld [vmem:[%s8 + $0x50] sm:$0xff]
    %v827 = vld [vmem:[%s8 + $0x58] sm:$0xff]
    %v828 = vld [vmem:[%s8 + $0x60] sm:$0xff]
    %v829 = vld [vmem:[%s8 + $0x68] sm:$0xff]
    %v830 = vld [vmem:[%s8 + $0x70] sm:$0xff]
    %v831 = vld [vmem:[%s8 + $0x78] sm:$0xff]
    %v832 = vld [vmem:[%s8 + $0x80] sm:$0xff]
    %v833 = vld [vmem:[%s8 + $0x88] sm:$0xff]
    %v834 = vld [vmem:[%s8 + $0x90] sm:$0xff]
    %v835 = vld [vmem:[%s8 + $0x98] sm:$0xff]
    %v836 = vld [vmem:[%s8 + $0xa0] sm:$0xff]
    %v837 = vld [vmem:[%s8 + $0xa8] sm:$0xff]
    %v838 = vld [vmem:[%s8 + $0xb0] sm:$0xff]
    %v839 = vld [vmem:[%s8 + $0xb8] sm:$0xff]
    %v840 = vld [vmem:[%s9] sm:$0xff]
    %v841 = vld [vmem:[%s9 + $0x8] sm:$0xff]
    %v842 = vld [vmem:[%s9 + $0x10] sm:$0xff]
    %v843 = vld [vmem:[%s9 + $0x18] sm:$0xff]
    %v844 = vld [vmem:[%s9 + $0x20] sm:$0xff]
    %v845 = vld [vmem:[%s9 + $0x28] sm:$0xff]
    %v846 = vld [vmem:[%s9 + $0x30] sm:$0xff]
    %v847 = vld [vmem:[%s9 + $0x38] sm:$0xff]
    %v848 = vld [vmem:[%s9 + $0x40] sm:$0xff]
    %v849 = vld [vmem:[%s9 + $0x48] sm:$0xff]
    %v850 = vld [vmem:[%s9 + $0x50] sm:$0xff]
    %v851 = vld [vmem:[%s9 + $0x58] sm:$0xff]
    %v852 = vld [vmem:[%s9 + $0x60] sm:$0xff]
    %v853 = vld [vmem:[%s9 + $0x68] sm:$0xff]
    %v854 = vld [vmem:[%s9 + $0x70] sm:$0xff]
    %v855 = vld [vmem:[%s9 + $0x78] sm:$0xff]
    %v856 = vld [vmem:[%s9 + $0x80] sm:$0xff]
    %v857 = vld [vmem:[%s9 + $0x88] sm:$0xff]
    %v858 = vld [vmem:[%s9 + $0x90] sm:$0xff]
    %v859 = vld [vmem:[%s9 + $0x98] sm:$0xff]
    %v860 = vld [vmem:[%s9 + $0xa0] sm:$0xff]
    %v861 = vld [vmem:[%s9 + $0xa8] sm:$0xff]
    %v862 = vld [vmem:[%s9 + $0xb0] sm:$0xff]
    %v863 = vld [vmem:[%s9 + $0xb8] sm:$0xff]
    %865 = vset.pattern.permute.xlu0 0
    %866 = vperm.xlu0 %865, %v840
    %v867 = vpop.permute.xlu0 %866
    %870 = vset.pattern.permute.xlu0 0
    %871 = vperm.xlu0 %870, %v841
    %v872 = vpop.permute.xlu0 %871
    %875 = vset.pattern.permute.xlu0 0
    %876 = vperm.xlu0 %875, %v842
    %v877 = vpop.permute.xlu0 %876
    %880 = vset.pattern.permute.xlu0 0
    %881 = vperm.xlu0 %880, %v843
    %v882 = vpop.permute.xlu0 %881
    %885 = vset.pattern.permute.xlu0 0
    %886 = vperm.xlu0 %885, %v844
    %v887 = vpop.permute.xlu0 %886
    %890 = vset.pattern.permute.xlu0 0
    %891 = vperm.xlu0 %890, %v845
    %v892 = vpop.permute.xlu0 %891
    %895 = vset.pattern.permute.xlu0 0
    %896 = vperm.xlu0 %895, %v846
    %v897 = vpop.permute.xlu0 %896
    %900 = vset.pattern.permute.xlu0 0
    %901 = vperm.xlu0 %900, %v847
    %v902 = vpop.permute.xlu0 %901
    %905 = vset.pattern.permute.xlu0 0
    %906 = vperm.xlu0 %905, %v848
    %v907 = vpop.permute.xlu0 %906
    %910 = vset.pattern.permute.xlu0 0
    %911 = vperm.xlu0 %910, %v849
    %v912 = vpop.permute.xlu0 %911
    %915 = vset.pattern.permute.xlu0 0
    %916 = vperm.xlu0 %915, %v850
    %v917 = vpop.permute.xlu0 %916
    %920 = vset.pattern.permute.xlu0 0
    %921 = vperm.xlu0 %920, %v851
    %v922 = vpop.permute.xlu0 %921
    %925 = vset.pattern.permute.xlu0 0
    %926 = vperm.xlu0 %925, %v852
    %v927 = vpop.permute.xlu0 %926
    %930 = vset.pattern.permute.xlu0 0
    %931 = vperm.xlu0 %930, %v853
    %v932 = vpop.permute.xlu0 %931
    %935 = vset.pattern.permute.xlu0 0
    %936 = vperm.xlu0 %935, %v854
    %v937 = vpop.permute.xlu0 %936
    %940 = vset.pattern.permute.xlu0 0
    %941 = vperm.xlu0 %940, %v855
    %v942 = vpop.permute.xlu0 %941
    %945 = vset.pattern.permute.xlu0 0
    %946 = vperm.xlu0 %945, %v856
    %v947 = vpop.permute.xlu0 %946
    %950 = vset.pattern.permute.xlu0 0
    %951 = vperm.xlu0 %950, %v857
    %v952 = vpop.permute.xlu0 %951
    %955 = vset.pattern.permute.xlu0 0
    %956 = vperm.xlu0 %955, %v858
    %v957 = vpop.permute.xlu0 %956
    %960 = vset.pattern.permute.xlu0 0
    %961 = vperm.xlu0 %960, %v859
    %v962 = vpop.permute.xlu0 %961
    %965 = vset.pattern.permute.xlu0 0
    %966 = vperm.xlu0 %965, %v860
    %v967 = vpop.permute.xlu0 %966
    %970 = vset.pattern.permute.xlu0 0
    %971 = vperm.xlu0 %970, %v861
    %v972 = vpop.permute.xlu0 %971
    %975 = vset.pattern.permute.xlu0 0
    %976 = vperm.xlu0 %975, %v862
    %v977 = vpop.permute.xlu0 %976
    %980 = vset.pattern.permute.xlu0 0
    %981 = vperm.xlu0 %980, %v863
    %v982 = vpop.permute.xlu0 %981
    %vm984 = vcmask 261120
    %v986 = vsel %vm984, %v816, 0
    %v989 = vsel %vm984, %v817, 0
    %v992 = vsel %vm984, %v818, 0
    %v995 = vsel %vm984, %v819, 0
    %v998 = vsel %vm984, %v820, 0
    %v1001 = vsel %vm984, %v821, 0
    %v1004 = vsel %vm984, %v822, 0
    %v1007 = vsel %vm984, %v823, 0
    %v1010 = vsel %vm984, %v824, 0
    %v1013 = vsel %vm984, %v825, 0
    %v1016 = vsel %vm984, %v826, 0
    %v1019 = vsel %vm984, %v827, 0
    %v1022 = vsel %vm984, %v828, 0
    %v1025 = vsel %vm984, %v829, 0
    %v1028 = vsel %vm984, %v830, 0
    %v1031 = vsel %vm984, %v831, 0
    %v1034 = vsel %vm984, %v832, 0
    %v1037 = vsel %vm984, %v833, 0
    %v1040 = vsel %vm984, %v834, 0
    %v1043 = vsel %vm984, %v835, 0
    %v1046 = vsel %vm984, %v836, 0
    %v1049 = vsel %vm984, %v837, 0
    %v1052 = vsel %vm984, %v838, 0
    %v1055 = vsel %vm984, %v839, 0
    %1057 = vmatpush.msra.mxu0 0.0
    %1058 = vmatpush.msra.mxu0 0.0
    %1059 = vmatpush.msra.mxu0 0.0
    %1060 = vmatpush.msra.mxu0 0.0
    %1061 = vmatpush.msra.mxu0 0.0
    %1062 = vmatpush.msra.mxu0 0.0
    %1063 = vmatpush.msra.mxu0 0.0
    %1064 = vmatpush.msra.mxu0 0.0
    %1065 = vmatpush.msra.mxu0 0.0
    %1066 = vmatpush.msra.mxu0 0.0
    %1067 = vmatpush.msra.mxu0 0.0
    %1068 = vmatpush.msra.mxu0 0.0
    %1069 = vmatpush.msra.mxu0 %v64
    %1070 = vmatpush.msra.mxu0 %v60
    %1071 = vmatpush.msra.mxu0 %v56
    %1072 = vmatpush.msra.mxu0 %v52
    %1073 = vmatmul.f32.gmra.mxu0 %v986
    %v1074 = vpop.f32.mrf.mxu0
    %v1075 = vadd.f32 %v867, %v1074
    %1076 = vmatmul.f32.gmra.mxu0 %v989
    %v1077 = vpop.f32.mrf.mxu0
    %v1078 = vadd.f32 %v872, %v1077
    %1079 = vmatmul.f32.gmra.mxu0 %v992
    %v1080 = vpop.f32.mrf.mxu0
    %v1081 = vadd.f32 %v877, %v1080
    %1082 = vmatmul.f32.gmra.mxu0 %v995
    %v1083 = vpop.f32.mrf.mxu0
    %v1084 = vadd.f32 %v882, %v1083
    %1085 = vmatmul.f32.gmra.mxu0 %v998
    %v1086 = vpop.f32.mrf.mxu0
    %v1087 = vadd.f32 %v887, %v1086
    %1088 = vmatmul.f32.gmra.mxu0 %v1001
    %v1089 = vpop.f32.mrf.mxu0
    %v1090 = vadd.f32 %v892, %v1089
    %1091 = vmatmul.f32.gmra.mxu0 %v1004
    %v1092 = vpop.f32.mrf.mxu0
    %v1093 = vadd.f32 %v897, %v1092
    %1094 = vmatmul.f32.gmra.mxu0 %v1007
    %v1095 = vpop.f32.mrf.mxu0
    %v1096 = vadd.f32 %v902, %v1095
    %1097 = vmatmul.f32.gmra.mxu0 %v1010
    %v1098 = vpop.f32.mrf.mxu0
    %v1099 = vadd.f32 %v907, %v1098
    %1100 = vmatmul.f32.gmra.mxu0 %v1013
    %v1101 = vpop.f32.mrf.mxu0
    %v1102 = vadd.f32 %v912, %v1101
    %1103 = vmatmul.f32.gmra.mxu0 %v1016
    %v1104 = vpop.f32.mrf.mxu0
    %v1105 = vadd.f32 %v917, %v1104
    %1106 = vmatmul.f32.gmra.mxu0 %v1019
    %v1107 = vpop.f32.mrf.mxu0
    %v1108 = vadd.f32 %v922, %v1107
    %1109 = vmatmul.f32.gmra.mxu0 %v1022
    %v1110 = vpop.f32.mrf.mxu0
    %v1111 = vadd.f32 %v927, %v1110
    %1112 = vmatmul.f32.gmra.mxu0 %v1025
    %v1113 = vpop.f32.mrf.mxu0
    %v1114 = vadd.f32 %v932, %v1113
    %1115 = vmatmul.f32.gmra.mxu0 %v1028
    %v1116 = vpop.f32.mrf.mxu0
    %v1117 = vadd.f32 %v937, %v1116
    %1118 = vmatmul.f32.gmra.mxu0 %v1031
    %v1119 = vpop.f32.mrf.mxu0
    %v1120 = vadd.f32 %v942, %v1119
    %1121 = vmatmul.f32.gmra.mxu0 %v1034
    %v1122 = vpop.f32.mrf.mxu0
    %v1123 = vadd.f32 %v947, %v1122
    %1124 = vmatmul.f32.gmra.mxu0 %v1037
    %v1125 = vpop.f32.mrf.mxu0
    %v1126 = vadd.f32 %v952, %v1125
    %1127 = vmatmul.f32.gmra.mxu0 %v1040
    %v1128 = vpop.f32.mrf.mxu0
    %v1129 = vadd.f32 %v957, %v1128
    %1130 = vmatmul.f32.gmra.mxu0 %v1043
    %v1131 = vpop.f32.mrf.mxu0
    %v1132 = vadd.f32 %v962, %v1131
    %1133 = vmatmul.f32.gmra.mxu0 %v1046
    %v1134 = vpop.f32.mrf.mxu0
    %v1135 = vadd.f32 %v967, %v1134
    %1136 = vmatmul.f32.gmra.mxu0 %v1049
    %v1137 = vpop.f32.mrf.mxu0
    %v1138 = vadd.f32 %v972, %v1137
    %1139 = vmatmul.f32.gmra.mxu0 %v1052
    %v1140 = vpop.f32.mrf.mxu0
    %v1141 = vadd.f32 %v977, %v1140
    %1142 = vmatmul.f32.gmra.mxu0 %v1055
    %v1143 = vpop.f32.mrf.mxu0
    %v1144 = vadd.f32 %v982, %v1143
    %1145 = vdwg.mxu0
    %1146 = vmatpush.msra.mxu0 0.0
    %1147 = vmatpush.msra.mxu0 0.0
    %1148 = vmatpush.msra.mxu0 0.0
    %1149 = vmatpush.msra.mxu0 0.0
    %1150 = vmatpush.msra.mxu0 0.0
    %1151 = vmatpush.msra.mxu0 0.0
    %1152 = vmatpush.msra.mxu0 0.0
    %1153 = vmatpush.msra.mxu0 0.0
    %1154 = vmatpush.msra.mxu0 0.0
    %1155 = vmatpush.msra.mxu0 0.0
    %1156 = vmatpush.msra.mxu0 0.0
    %1157 = vmatpush.msra.mxu0 0.0
    %1158 = vmatpush.msra.mxu0 %v65
    %1159 = vmatpush.msra.mxu0 %v61
    %1160 = vmatpush.msra.mxu0 %v57
    %1161 = vmatpush.msra.mxu0 %v53
    %1162 = vmatmul.f32.gmra.mxu0 %v986
    %v1163 = vpop.f32.mrf.mxu0
    %v1164 = vadd.f32 %v867, %v1163
    %1165 = vmatmul.f32.gmra.mxu0 %v989
    %v1166 = vpop.f32.mrf.mxu0
    %v1167 = vadd.f32 %v872, %v1166
    %1168 = vmatmul.f32.gmra.mxu0 %v992
    %v1169 = vpop.f32.mrf.mxu0
    %v1170 = vadd.f32 %v877, %v1169
    %1171 = vmatmul.f32.gmra.mxu0 %v995
    %v1172 = vpop.f32.mrf.mxu0
    %v1173 = vadd.f32 %v882, %v1172
    %1174 = vmatmul.f32.gmra.mxu0 %v998
    %v1175 = vpop.f32.mrf.mxu0
    %v1176 = vadd.f32 %v887, %v1175
    %1177 = vmatmul.f32.gmra.mxu0 %v1001
    %v1178 = vpop.f32.mrf.mxu0
    %v1179 = vadd.f32 %v892, %v1178
    %1180 = vmatmul.f32.gmra.mxu0 %v1004
    %v1181 = vpop.f32.mrf.mxu0
    %v1182 = vadd.f32 %v897, %v1181
    %1183 = vmatmul.f32.gmra.mxu0 %v1007
    %v1184 = vpop.f32.mrf.mxu0
    %v1185 = vadd.f32 %v902, %v1184
    %1186 = vmatmul.f32.gmra.mxu0 %v1010
    %v1187 = vpop.f32.mrf.mxu0
    %v1188 = vadd.f32 %v907, %v1187
    %1189 = vmatmul.f32.gmra.mxu0 %v1013
    %v1190 = vpop.f32.mrf.mxu0
    %v1191 = vadd.f32 %v912, %v1190
    %1192 = vmatmul.f32.gmra.mxu0 %v1016
    %v1193 = vpop.f32.mrf.mxu0
    %v1194 = vadd.f32 %v917, %v1193
    %1195 = vmatmul.f32.gmra.mxu0 %v1019
    %v1196 = vpop.f32.mrf.mxu0
    %v1197 = vadd.f32 %v922, %v1196
    %1198 = vmatmul.f32.gmra.mxu0 %v1022
    %v1199 = vpop.f32.mrf.mxu0
    %v1200 = vadd.f32 %v927, %v1199
    %1201 = vmatmul.f32.gmra.mxu0 %v1025
    %v1202 = vpop.f32.mrf.mxu0
    %v1203 = vadd.f32 %v932, %v1202
    %1204 = vmatmul.f32.gmra.mxu0 %v1028
    %v1205 = vpop.f32.mrf.mxu0
    %v1206 = vadd.f32 %v937, %v1205
    %1207 = vmatmul.f32.gmra.mxu0 %v1031
    %v1208 = vpop.f32.mrf.mxu0
    %v1209 = vadd.f32 %v942, %v1208
    %1210 = vmatmul.f32.gmra.mxu0 %v1034
    %v1211 = vpop.f32.mrf.mxu0
    %v1212 = vadd.f32 %v947, %v1211
    %1213 = vmatmul.f32.gmra.mxu0 %v1037
    %v1214 = vpop.f32.mrf.mxu0
    %v1215 = vadd.f32 %v952, %v1214
    %1216 = vmatmul.f32.gmra.mxu0 %v1040
    %v1217 = vpop.f32.mrf.mxu0
    %v1218 = vadd.f32 %v957, %v1217
    %1219 = vmatmul.f32.gmra.mxu0 %v1043
    %v1220 = vpop.f32.mrf.mxu0
    %v1221 = vadd.f32 %v962, %v1220
    %1222 = vmatmul.f32.gmra.mxu0 %v1046
    %v1223 = vpop.f32.mrf.mxu0
    %v1224 = vadd.f32 %v967, %v1223
    %1225 = vmatmul.f32.gmra.mxu0 %v1049
    %v1226 = vpop.f32.mrf.mxu0
    %v1227 = vadd.f32 %v972, %v1226
    %1228 = vmatmul.f32.gmra.mxu0 %v1052
    %v1229 = vpop.f32.mrf.mxu0
    %v1230 = vadd.f32 %v977, %v1229
    %1231 = vmatmul.f32.gmra.mxu0 %v1055
    %v1232 = vpop.f32.mrf.mxu0
    %v1233 = vadd.f32 %v982, %v1232
    %1234 = vdwg.mxu0
    %1235 = vmatpush.msra.mxu0 0.0
    %1236 = vmatpush.msra.mxu0 0.0
    %1237 = vmatpush.msra.mxu0 0.0
    %1238 = vmatpush.msra.mxu0 0.0
    %1239 = vmatpush.msra.mxu0 0.0
    %1240 = vmatpush.msra.mxu0 0.0
    %1241 = vmatpush.msra.mxu0 0.0
    %1242 = vmatpush.msra.mxu0 0.0
    %1243 = vmatpush.msra.mxu0 0.0
    %1244 = vmatpush.msra.mxu0 0.0
    %1245 = vmatpush.msra.mxu0 0.0
    %1246 = vmatpush.msra.mxu0 0.0
    %1247 = vmatpush.msra.mxu0 %v66
    %1248 = vmatpush.msra.mxu0 %v62
    %1249 = vmatpush.msra.mxu0 %v58
    %1250 = vmatpush.msra.mxu0 %v54
    %1251 = vmatmul.f32.gmra.mxu0 %v986
    %v1252 = vpop.f32.mrf.mxu0
    %v1253 = vadd.f32 %v867, %v1252
    %1254 = vmatmul.f32.gmra.mxu0 %v989
    %v1255 = vpop.f32.mrf.mxu0
    %v1256 = vadd.f32 %v872, %v1255
    %1257 = vmatmul.f32.gmra.mxu0 %v992
    %v1258 = vpop.f32.mrf.mxu0
    %v1259 = vadd.f32 %v877, %v1258
    %1260 = vmatmul.f32.gmra.mxu0 %v995
    %v1261 = vpop.f32.mrf.mxu0
    %v1262 = vadd.f32 %v882, %v1261
    %1263 = vmatmul.f32.gmra.mxu0 %v998
    %v1264 = vpop.f32.mrf.mxu0
    %v1265 = vadd.f32 %v887, %v1264
    %1266 = vmatmul.f32.gmra.mxu0 %v1001
    %v1267 = vpop.f32.mrf.mxu0
    %v1268 = vadd.f32 %v892, %v1267
    %1269 = vmatmul.f32.gmra.mxu0 %v1004
    %v1270 = vpop.f32.mrf.mxu0
    %v1271 = vadd.f32 %v897, %v1270
    %1272 = vmatmul.f32.gmra.mxu0 %v1007
    %v1273 = vpop.f32.mrf.mxu0
    %v1274 = vadd.f32 %v902, %v1273
    %1275 = vmatmul.f32.gmra.mxu0 %v1010
    %v1276 = vpop.f32.mrf.mxu0
    %v1277 = vadd.f32 %v907, %v1276
    %1278 = vmatmul.f32.gmra.mxu0 %v1013
    %v1279 = vpop.f32.mrf.mxu0
    %v1280 = vadd.f32 %v912, %v1279
    %1281 = vmatmul.f32.gmra.mxu0 %v1016
    %v1282 = vpop.f32.mrf.mxu0
    %v1283 = vadd.f32 %v917, %v1282
    %1284 = vmatmul.f32.gmra.mxu0 %v1019
    %v1285 = vpop.f32.mrf.mxu0
    %v1286 = vadd.f32 %v922, %v1285
    %1287 = vmatmul.f32.gmra.mxu0 %v1022
    %v1288 = vpop.f32.mrf.mxu0
    %v1289 = vadd.f32 %v927, %v1288
    %1290 = vmatmul.f32.gmra.mxu0 %v1025
    %v1291 = vpop.f32.mrf.mxu0
    %v1292 = vadd.f32 %v932, %v1291
    %1293 = vmatmul.f32.gmra.mxu0 %v1028
    %v1294 = vpop.f32.mrf.mxu0
    %v1295 = vadd.f32 %v937, %v1294
    %1296 = vmatmul.f32.gmra.mxu0 %v1031
    %v1297 = vpop.f32.mrf.mxu0
    %v1298 = vadd.f32 %v942, %v1297
    %1299 = vmatmul.f32.gmra.mxu0 %v1034
    %v1300 = vpop.f32.mrf.mxu0
    %v1301 = vadd.f32 %v947, %v1300
    %1302 = vmatmul.f32.gmra.mxu0 %v1037
    %v1303 = vpop.f32.mrf.mxu0
    %v1304 = vadd.f32 %v952, %v1303
    %1305 = vmatmul.f32.gmra.mxu0 %v1040
    %v1306 = vpop.f32.mrf.mxu0
    %v1307 = vadd.f32 %v957, %v1306
    %1308 = vmatmul.f32.gmra.mxu0 %v1043
    %v1309 = vpop.f32.mrf.mxu0
    %v1310 = vadd.f32 %v962, %v1309
    %1311 = vmatmul.f32.gmra.mxu0 %v1046
    %v1312 = vpop.f32.mrf.mxu0
    %v1313 = vadd.f32 %v967, %v1312
    %1314 = vmatmul.f32.gmra.mxu0 %v1049
    %v1315 = vpop.f32.mrf.mxu0
    %v1316 = vadd.f32 %v972, %v1315
    %1317 = vmatmul.f32.gmra.mxu0 %v1052
    %v1318 = vpop.f32.mrf.mxu0
    %v1319 = vadd.f32 %v977, %v1318
    %1320 = vmatmul.f32.gmra.mxu0 %v1055
    %v1321 = vpop.f32.mrf.mxu0
    %v1322 = vadd.f32 %v982, %v1321
    %1323 = vdwg.mxu0
    %1324 = vmatpush.msra.mxu0 0.0
    %1325 = vmatpush.msra.mxu0 0.0
    %1326 = vmatpush.msra.mxu0 0.0
    %1327 = vmatpush.msra.mxu0 0.0
    %1328 = vmatpush.msra.mxu0 0.0
    %1329 = vmatpush.msra.mxu0 0.0
    %1330 = vmatpush.msra.mxu0 0.0
    %1331 = vmatpush.msra.mxu0 0.0
    %1332 = vmatpush.msra.mxu0 0.0
    %1333 = vmatpush.msra.mxu0 0.0
    %1334 = vmatpush.msra.mxu0 0.0
    %1335 = vmatpush.msra.mxu0 0.0
    %1336 = vmatpush.msra.mxu0 %v67
    %1337 = vmatpush.msra.mxu0 %v63
    %1338 = vmatpush.msra.mxu0 %v59
    %1339 = vmatpush.msra.mxu0 %v55
    %1340 = vmatmul.f32.gmra.mxu0 %v986
    %v1341 = vpop.f32.mrf.mxu0
    %v1342 = vadd.f32 %v867, %v1341
    %1343 = vmatmul.f32.gmra.mxu0 %v989
    %v1344 = vpop.f32.mrf.mxu0
    %v1345 = vadd.f32 %v872, %v1344
    %1346 = vmatmul.f32.gmra.mxu0 %v992
    %v1347 = vpop.f32.mrf.mxu0
    %v1348 = vadd.f32 %v877, %v1347
    %1349 = vmatmul.f32.gmra.mxu0 %v995
    %v1350 = vpop.f32.mrf.mxu0
    %v1351 = vadd.f32 %v882, %v1350
    %1352 = vmatmul.f32.gmra.mxu0 %v998
    %v1353 = vpop.f32.mrf.mxu0
    %v1354 = vadd.f32 %v887, %v1353
    %1355 = vmatmul.f32.gmra.mxu0 %v1001
    %v1356 = vpop.f32.mrf.mxu0
    %v1357 = vadd.f32 %v892, %v1356
    %1358 = vmatmul.f32.gmra.mxu0 %v1004
    %v1359 = vpop.f32.mrf.mxu0
    %v1360 = vadd.f32 %v897, %v1359
    %1361 = vmatmul.f32.gmra.mxu0 %v1007
    %v1362 = vpop.f32.mrf.mxu0
    %v1363 = vadd.f32 %v902, %v1362
    %1364 = vmatmul.f32.gmra.mxu0 %v1010
    %v1365 = vpop.f32.mrf.mxu0
    %v1366 = vadd.f32 %v907, %v1365
    %1367 = vmatmul.f32.gmra.mxu0 %v1013
    %v1368 = vpop.f32.mrf.mxu0
    %v1369 = vadd.f32 %v912, %v1368
    %1370 = vmatmul.f32.gmra.mxu0 %v1016
    %v1371 = vpop.f32.mrf.mxu0
    %v1372 = vadd.f32 %v917, %v1371
    %1373 = vmatmul.f32.gmra.mxu0 %v1019
    %v1374 = vpop.f32.mrf.mxu0
    %v1375 = vadd.f32 %v922, %v1374
    %1376 = vmatmul.f32.gmra.mxu0 %v1022
    %v1377 = vpop.f32.mrf.mxu0
    %v1378 = vadd.f32 %v927, %v1377
    %1379 = vmatmul.f32.gmra.mxu0 %v1025
    %v1380 = vpop.f32.mrf.mxu0
    %v1381 = vadd.f32 %v932, %v1380
    %1382 = vmatmul.f32.gmra.mxu0 %v1028
    %v1383 = vpop.f32.mrf.mxu0
    %v1384 = vadd.f32 %v937, %v1383
    %1385 = vmatmul.f32.gmra.mxu0 %v1031
    %v1386 = vpop.f32.mrf.mxu0
    %v1387 = vadd.f32 %v942, %v1386
    %1388 = vmatmul.f32.gmra.mxu0 %v1034
    %v1389 = vpop.f32.mrf.mxu0
    %v1390 = vadd.f32 %v947, %v1389
    %1391 = vmatmul.f32.gmra.mxu0 %v1037
    %v1392 = vpop.f32.mrf.mxu0
    %v1393 = vadd.f32 %v952, %v1392
    %1394 = vmatmul.f32.gmra.mxu0 %v1040
    %v1395 = vpop.f32.mrf.mxu0
    %v1396 = vadd.f32 %v957, %v1395
    %1397 = vmatmul.f32.gmra.mxu0 %v1043
    %v1398 = vpop.f32.mrf.mxu0
    %v1399 = vadd.f32 %v962, %v1398
    %1400 = vmatmul.f32.gmra.mxu0 %v1046
    %v1401 = vpop.f32.mrf.mxu0
    %v1402 = vadd.f32 %v967, %v1401
    %1403 = vmatmul.f32.gmra.mxu0 %v1049
    %v1404 = vpop.f32.mrf.mxu0
    %v1405 = vadd.f32 %v972, %v1404
    %1406 = vmatmul.f32.gmra.mxu0 %v1052
    %v1407 = vpop.f32.mrf.mxu0
    %v1408 = vadd.f32 %v977, %v1407
    %1409 = vmatmul.f32.gmra.mxu0 %v1055
    %v1410 = vpop.f32.mrf.mxu0
    %v1411 = vadd.f32 %v982, %v1410
    %1412 = vdwg.mxu0
    %v1413 = vmax.f32 %v1075, 0.0
    %v1414 = vmax.f32 %v1164, 0.0
    %v1415 = vmax.f32 %v1253, 0.0
    %v1416 = vmax.f32 %v1342, 0.0
    %v1417 = vmax.f32 %v1078, 0.0
    %v1418 = vmax.f32 %v1167, 0.0
    %v1419 = vmax.f32 %v1256, 0.0
    %v1420 = vmax.f32 %v1345, 0.0
    %v1421 = vmax.f32 %v1081, 0.0
    %v1422 = vmax.f32 %v1170, 0.0
    %v1423 = vmax.f32 %v1259, 0.0
    %v1424 = vmax.f32 %v1348, 0.0
    %v1425 = vmax.f32 %v1084, 0.0
    %v1426 = vmax.f32 %v1173, 0.0
    %v1427 = vmax.f32 %v1262, 0.0
    %v1428 = vmax.f32 %v1351, 0.0
    %v1429 = vmax.f32 %v1087, 0.0
    %v1430 = vmax.f32 %v1176, 0.0
    %v1431 = vmax.f32 %v1265, 0.0
    %v1432 = vmax.f32 %v1354, 0.0
    %v1433 = vmax.f32 %v1090, 0.0
    %v1434 = vmax.f32 %v1179, 0.0
    %v1435 = vmax.f32 %v1268, 0.0
    %v1436 = vmax.f32 %v1357, 0.0
    %v1437 = vmax.f32 %v1093, 0.0
    %v1438 = vmax.f32 %v1182, 0.0
    %v1439 = vmax.f32 %v1271, 0.0
    %v1440 = vmax.f32 %v1360, 0.0
    %v1441 = vmax.f32 %v1096, 0.0
    %v1442 = vmax.f32 %v1185, 0.0
    %v1443 = vmax.f32 %v1274, 0.0
    %v1444 = vmax.f32 %v1363, 0.0
    %v1445 = vmax.f32 %v1099, 0.0
    %v1446 = vmax.f32 %v1188, 0.0
    %v1447 = vmax.f32 %v1277, 0.0
    %v1448 = vmax.f32 %v1366, 0.0
    %v1449 = vmax.f32 %v1102, 0.0
    %v1450 = vmax.f32 %v1191, 0.0
    %v1451 = vmax.f32 %v1280, 0.0
    %v1452 = vmax.f32 %v1369, 0.0
    %v1453 = vmax.f32 %v1105, 0.0
    %v1454 = vmax.f32 %v1194, 0.0
    %v1455 = vmax.f32 %v1283, 0.0
    %v1456 = vmax.f32 %v1372, 0.0
    %v1457 = vmax.f32 %v1108, 0.0
    %v1458 = vmax.f32 %v1197, 0.0
    %v1459 = vmax.f32 %v1286, 0.0
    %v1460 = vmax.f32 %v1375, 0.0
    %v1461 = vmax.f32 %v1111, 0.0
    %v1462 = vmax.f32 %v1200, 0.0
    %v1463 = vmax.f32 %v1289, 0.0
    %v1464 = vmax.f32 %v1378, 0.0
    %v1465 = vmax.f32 %v1114, 0.0
    %v1466 = vmax.f32 %v1203, 0.0
    %v1467 = vmax.f32 %v1292, 0.0
    %v1468 = vmax.f32 %v1381, 0.0
    %v1469 = vmax.f32 %v1117, 0.0
    %v1470 = vmax.f32 %v1206, 0.0
    %v1471 = vmax.f32 %v1295, 0.0
    %v1472 = vmax.f32 %v1384, 0.0
    %v1473 = vmax.f32 %v1120, 0.0
    %v1474 = vmax.f32 %v1209, 0.0
    %v1475 = vmax.f32 %v1298, 0.0
    %v1476 = vmax.f32 %v1387, 0.0
    %v1477 = vmax.f32 %v1135, 0.0
    %v1478 = vmax.f32 %v1224, 0.0
    %v1479 = vmax.f32 %v1313, 0.0
    %v1480 = vmax.f32 %v1402, 0.0
    %v1481 = vmax.f32 %v1138, 0.0
    %v1482 = vmax.f32 %v1227, 0.0
    %v1483 = vmax.f32 %v1316, 0.0
    %v1484 = vmax.f32 %v1405, 0.0
    %v1485 = vmax.f32 %v1141, 0.0
    %v1486 = vmax.f32 %v1230, 0.0
    %v1487 = vmax.f32 %v1319, 0.0
    %v1488 = vmax.f32 %v1408, 0.0
    %v1489 = vmax.f32 %v1144, 0.0
    %v1490 = vmax.f32 %v1233, 0.0
    %v1491 = vmax.f32 %v1322, 0.0
    %v1492 = vmax.f32 %v1411, 0.0
    %v1493 = vld [vmem:[%s10] sm:$0xff]
    %v1494 = vld [vmem:[%s10 + $0x8] sm:$0xff]
    %v1495 = vld [vmem:[%s10 + $0x10] sm:$0xff]
    %v1496 = vld [vmem:[%s10 + $0x18] sm:$0xff]
    %v1497 = vld [vmem:[%s10 + $0x20] sm:$0xff]
    %v1498 = vld [vmem:[%s10 + $0x28] sm:$0xff]
    %v1499 = vld [vmem:[%s10 + $0x30] sm:$0xff]
    %v1500 = vld [vmem:[%s10 + $0x38] sm:$0xff]
    %v1501 = vld [vmem:[%s11] sm:$0xff]
    %v1502 = vld [vmem:[%s11 + $0x8] sm:$0xff]
    %v1503 = vld [vmem:[%s11 + $0x10] sm:$0xff]
    %v1504 = vld [vmem:[%s11 + $0x18] sm:$0xff]
    %v1505 = vld [vmem:[%s11 + $0x20] sm:$0xff]
    %v1506 = vld [vmem:[%s11 + $0x28] sm:$0xff]
    %v1507 = vld [vmem:[%s11 + $0x30] sm:$0xff]
    %v1508 = vld [vmem:[%s11 + $0x38] sm:$0xff]
    %1510 = vset.pattern.permute.xlu0 0
    %1511 = vperm.xlu0 %1510, %v1501
    %v1512 = vpop.permute.xlu0 %1511
    %1515 = vset.pattern.permute.xlu0 0
    %1516 = vperm.xlu0 %1515, %v1502
    %v1517 = vpop.permute.xlu0 %1516
    %1520 = vset.pattern.permute.xlu0 0
    %1521 = vperm.xlu0 %1520, %v1503
    %v1522 = vpop.permute.xlu0 %1521
    %1525 = vset.pattern.permute.xlu0 0
    %1526 = vperm.xlu0 %1525, %v1504
    %v1527 = vpop.permute.xlu0 %1526
    %1530 = vset.pattern.permute.xlu0 0
    %1531 = vperm.xlu0 %1530, %v1505
    %v1532 = vpop.permute.xlu0 %1531
    %1535 = vset.pattern.permute.xlu0 0
    %1536 = vperm.xlu0 %1535, %v1506
    %v1537 = vpop.permute.xlu0 %1536
    %1540 = vset.pattern.permute.xlu0 0
    %1541 = vperm.xlu0 %1540, %v1507
    %v1542 = vpop.permute.xlu0 %1541
    %1545 = vset.pattern.permute.xlu0 0
    %1546 = vperm.xlu0 %1545, %v1508
    %v1547 = vpop.permute.xlu0 %1546
    %1549 = vmatpush.msra.mxu0 %v1473
    %1550 = vmatpush.msra.mxu0 %v1469
    %1551 = vmatpush.msra.mxu0 %v1465
    %1552 = vmatpush.msra.mxu0 %v1461
    %1553 = vmatpush.msra.mxu0 %v1457
    %1554 = vmatpush.msra.mxu0 %v1453
    %1555 = vmatpush.msra.mxu0 %v1449
    %1556 = vmatpush.msra.mxu0 %v1445
    %1557 = vmatpush.msra.mxu0 %v1441
    %1558 = vmatpush.msra.mxu0 %v1437
    %1559 = vmatpush.msra.mxu0 %v1433
    %1560 = vmatpush.msra.mxu0 %v1429
    %1561 = vmatpush.msra.mxu0 %v1425
    %1562 = vmatpush.msra.mxu0 %v1421
    %1563 = vmatpush.msra.mxu0 %v1417
    %1564 = vmatpush.msra.mxu0 %v1413
    %1565 = vmatmul.f32.gmra.mxu0 %v1493
    %v1566 = vpop.f32.mrf.mxu0
    %v1567 = vadd.f32 %v1512, %v1566
    %1568 = vmatmul.f32.gmra.mxu0 %v1494
    %v1569 = vpop.f32.mrf.mxu0
    %v1570 = vadd.f32 %v1517, %v1569
    %1571 = vmatmul.f32.gmra.mxu0 %v1495
    %v1572 = vpop.f32.mrf.mxu0
    %v1573 = vadd.f32 %v1522, %v1572
    %1574 = vmatmul.f32.gmra.mxu0 %v1496
    %v1575 = vpop.f32.mrf.mxu0
    %v1576 = vadd.f32 %v1527, %v1575
    %1577 = vmatmul.f32.gmra.mxu0 %v1497
    %v1578 = vpop.f32.mrf.mxu0
    %v1579 = vadd.f32 %v1532, %v1578
    %1580 = vmatmul.f32.gmra.mxu0 %v1498
    %v1581 = vpop.f32.mrf.mxu0
    %v1582 = vadd.f32 %v1537, %v1581
    %1583 = vmatmul.f32.gmra.mxu0 %v1499
    %v1584 = vpop.f32.mrf.mxu0
    %v1585 = vadd.f32 %v1542, %v1584
    %1586 = vmatmul.f32.gmra.mxu0 %v1500
    %v1587 = vpop.f32.mrf.mxu0
    %v1588 = vadd.f32 %v1547, %v1587
    %1589 = vdwg.mxu0
    %1590 = vmatpush.msra.mxu0 %v1474
    %1591 = vmatpush.msra.mxu0 %v1470
    %1592 = vmatpush.msra.mxu0 %v1466
    %1593 = vmatpush.msra.mxu0 %v1462
    %1594 = vmatpush.msra.mxu0 %v1458
    %1595 = vmatpush.msra.mxu0 %v1454
    %1596 = vmatpush.msra.mxu0 %v1450
    %1597 = vmatpush.msra.mxu0 %v1446
    %1598 = vmatpush.msra.mxu0 %v1442
    %1599 = vmatpush.msra.mxu0 %v1438
    %1600 = vmatpush.msra.mxu0 %v1434
    %1601 = vmatpush.msra.mxu0 %v1430
    %1602 = vmatpush.msra.mxu0 %v1426
    %1603 = vmatpush.msra.mxu0 %v1422
    %1604 = vmatpush.msra.mxu0 %v1418
    %1605 = vmatpush.msra.mxu0 %v1414
    %1606 = vmatmul.f32.gmra.mxu0 %v1493
    %v1607 = vpop.f32.mrf.mxu0
    %v1608 = vadd.f32 %v1512, %v1607
    %1609 = vmatmul.f32.gmra.mxu0 %v1494
    %v1610 = vpop.f32.mrf.mxu0
    %v1611 = vadd.f32 %v1517, %v1610
    %1612 = vmatmul.f32.gmra.mxu0 %v1495
    %v1613 = vpop.f32.mrf.mxu0
    %v1614 = vadd.f32 %v1522, %v1613
    %1615 = vmatmul.f32.gmra.mxu0 %v1496
    %v1616 = vpop.f32.mrf.mxu0
    %v1617 = vadd.f32 %v1527, %v1616
    %1618 = vmatmul.f32.gmra.mxu0 %v1497
    %v1619 = vpop.f32.mrf.mxu0
    %v1620 = vadd.f32 %v1532, %v1619
    %1621 = vmatmul.f32.gmra.mxu0 %v1498
    %v1622 = vpop.f32.mrf.mxu0
    %v1623 = vadd.f32 %v1537, %v1622
    %1624 = vmatmul.f32.gmra.mxu0 %v1499
    %v1625 = vpop.f32.mrf.mxu0
    %v1626 = vadd.f32 %v1542, %v1625
    %1627 = vmatmul.f32.gmra.mxu0 %v1500
    %v1628 = vpop.f32.mrf.mxu0
    %v1629 = vadd.f32 %v1547, %v1628
    %1630 = vdwg.mxu0
    %1631 = vmatpush.msra.mxu0 %v1475
    %1632 = vmatpush.msra.mxu0 %v1471
    %1633 = vmatpush.msra.mxu0 %v1467
    %1634 = vmatpush.msra.mxu0 %v1463
    %1635 = vmatpush.msra.mxu0 %v1459
    %1636 = vmatpush.msra.mxu0 %v1455
    %1637 = vmatpush.msra.mxu0 %v1451
    %1638 = vmatpush.msra.mxu0 %v1447
    %1639 = vmatpush.msra.mxu0 %v1443
    %1640 = vmatpush.msra.mxu0 %v1439
    %1641 = vmatpush.msra.mxu0 %v1435
    %1642 = vmatpush.msra.mxu0 %v1431
    %1643 = vmatpush.msra.mxu0 %v1427
    %1644 = vmatpush.msra.mxu0 %v1423
    %1645 = vmatpush.msra.mxu0 %v1419
    %1646 = vmatpush.msra.mxu0 %v1415
    %1647 = vmatmul.f32.gmra.mxu0 %v1493
    %v1648 = vpop.f32.mrf.mxu0
    %v1649 = vadd.f32 %v1512, %v1648
    %1650 = vmatmul.f32.gmra.mxu0 %v1494
    %v1651 = vpop.f32.mrf.mxu0
    %v1652 = vadd.f32 %v1517, %v1651
    %1653 = vmatmul.f32.gmra.mxu0 %v1495
    %v1654 = vpop.f32.mrf.mxu0
    %v1655 = vadd.f32 %v1522, %v1654
    %1656 = vmatmul.f32.gmra.mxu0 %v1496
    %v1657 = vpop.f32.mrf.mxu0
    %v1658 = vadd.f32 %v1527, %v1657
    %1659 = vmatmul.f32.gmra.mxu0 %v1497
    %v1660 = vpop.f32.mrf.mxu0
    %v1661 = vadd.f32 %v1532, %v1660
    %1662 = vmatmul.f32.gmra.mxu0 %v1498
    %v1663 = vpop.f32.mrf.mxu0
    %v1664 = vadd.f32 %v1537, %v1663
    %1665 = vmatmul.f32.gmra.mxu0 %v1499
    %v1666 = vpop.f32.mrf.mxu0
    %v1667 = vadd.f32 %v1542, %v1666
    %1668 = vmatmul.f32.gmra.mxu0 %v1500
    %v1669 = vpop.f32.mrf.mxu0
    %v1670 = vadd.f32 %v1547, %v1669
    %1671 = vdwg.mxu0
    %1672 = vmatpush.msra.mxu0 %v1476
    %1673 = vmatpush.msra.mxu0 %v1472
    %1674 = vmatpush.msra.mxu0 %v1468
    %1675 = vmatpush.msra.mxu0 %v1464
    %1676 = vmatpush.msra.mxu0 %v1460
    %1677 = vmatpush.msra.mxu0 %v1456
    %1678 = vmatpush.msra.mxu0 %v1452
    %1679 = vmatpush.msra.mxu0 %v1448
    %1680 = vmatpush.msra.mxu0 %v1444
    %1681 = vmatpush.msra.mxu0 %v1440
    %1682 = vmatpush.msra.mxu0 %v1436
    %1683 = vmatpush.msra.mxu0 %v1432
    %1684 = vmatpush.msra.mxu0 %v1428
    %1685 = vmatpush.msra.mxu0 %v1424
    %1686 = vmatpush.msra.mxu0 %v1420
    %1687 = vmatpush.msra.mxu0 %v1416
    %1688 = vmatmul.f32.gmra.mxu0 %v1493
    %v1689 = vpop.f32.mrf.mxu0
    %v1690 = vadd.f32 %v1512, %v1689
    %1691 = vmatmul.f32.gmra.mxu0 %v1494
    %v1692 = vpop.f32.mrf.mxu0
    %v1693 = vadd.f32 %v1517, %v1692
    %1694 = vmatmul.f32.gmra.mxu0 %v1495
    %v1695 = vpop.f32.mrf.mxu0
    %v1696 = vadd.f32 %v1522, %v1695
    %1697 = vmatmul.f32.gmra.mxu0 %v1496
    %v1698 = vpop.f32.mrf.mxu0
    %v1699 = vadd.f32 %v1527, %v1698
    %1700 = vmatmul.f32.gmra.mxu0 %v1497
    %v1701 = vpop.f32.mrf.mxu0
    %v1702 = vadd.f32 %v1532, %v1701
    %1703 = vmatmul.f32.gmra.mxu0 %v1498
    %v1704 = vpop.f32.mrf.mxu0
    %v1705 = vadd.f32 %v1537, %v1704
    %1706 = vmatmul.f32.gmra.mxu0 %v1499
    %v1707 = vpop.f32.mrf.mxu0
    %v1708 = vadd.f32 %v1542, %v1707
    %1709 = vmatmul.f32.gmra.mxu0 %v1500
    %v1710 = vpop.f32.mrf.mxu0
    %v1711 = vadd.f32 %v1547, %v1710
    %1712 = vdwg.mxu0
    %v1713 = vand.u32 2147483647, %v1567
    %v1714 = vand.u32 2147483647, %v1608
    %v1715 = vand.u32 2147483647, %v1649
    %v1716 = vand.u32 2147483647, %v1690
    %v1717 = vand.u32 2147483647, %v1570
    %v1718 = vand.u32 2147483647, %v1611
    %v1719 = vand.u32 2147483647, %v1652
    %v1720 = vand.u32 2147483647, %v1693
    %v1721 = vand.u32 2147483647, %v1573
    %v1722 = vand.u32 2147483647, %v1614
    %v1723 = vand.u32 2147483647, %v1655
    %v1724 = vand.u32 2147483647, %v1696
    %v1725 = vand.u32 2147483647, %v1576
    %v1726 = vand.u32 2147483647, %v1617
    %v1727 = vand.u32 2147483647, %v1658
    %v1728 = vand.u32 2147483647, %v1699
    %v1729 = vand.u32 2147483647, %v1579
    %v1730 = vand.u32 2147483647, %v1620
    %v1731 = vand.u32 2147483647, %v1661
    %v1732 = vand.u32 2147483647, %v1702
    %v1733 = vand.u32 2147483647, %v1582
    %v1734 = vand.u32 2147483647, %v1623
    %v1735 = vand.u32 2147483647, %v1664
    %v1736 = vand.u32 2147483647, %v1705
    %v1737 = vand.u32 2147483647, %v1585
    %v1738 = vand.u32 2147483647, %v1626
    %v1739 = vand.u32 2147483647, %v1667
    %v1740 = vand.u32 2147483647, %v1708
    %v1741 = vand.u32 2147483647, %v1588
    %v1742 = vand.u32 2147483647, %v1629
    %v1743 = vand.u32 2147483647, %v1670
    %v1744 = vand.u32 2147483647, %v1711
    %v1745 = vld [vmem:[%s12] sm:$0xff]
    %v1746 = vld [vmem:[%s12 + $0x8] sm:$0xff]
    %v1747 = vld [vmem:[%s12 + $0x10] sm:$0xff]
    %v1748 = vld [vmem:[%s12 + $0x18] sm:$0xff]
    %1750 = vset.pattern.permute.xlu0 0
    %1751 = vperm.xlu0 %1750, %v1745
    %v1752 = vpop.permute.xlu0 %1751
    %1755 = vset.pattern.permute.xlu0 0
    %1756 = vperm.xlu0 %1755, %v1746
    %v1757 = vpop.permute.xlu0 %1756
    %1760 = vset.pattern.permute.xlu0 0
    %1761 = vperm.xlu0 %1760, %v1747
    %v1762 = vpop.permute.xlu0 %1761
    %1765 = vset.pattern.permute.xlu0 0
    %1766 = vperm.xlu0 %1765, %v1748
    %v1767 = vpop.permute.xlu0 %1766
    %v1769 = vmul.f32 %v1477, %v1752
    %v1770 = vmul.f32 %v1478, %v1752
    %v1771 = vmul.f32 %v1479, %v1752
    %v1772 = vmul.f32 %v1480, %v1752
    %v1773 = vmul.f32 %v1481, %v1757
    %v1774 = vmul.f32 %v1482, %v1757
    %v1775 = vmul.f32 %v1483, %v1757
    %v1776 = vmul.f32 %v1484, %v1757
    %v1777 = vmul.f32 %v1485, %v1762
    %v1778 = vmul.f32 %v1486, %v1762
    %v1779 = vmul.f32 %v1487, %v1762
    %v1780 = vmul.f32 %v1488, %v1762
    %v1781 = vmul.f32 %v1489, %v1767
    %v1782 = vmul.f32 %v1490, %v1767
    %v1783 = vmul.f32 %v1491, %v1767
    %v1784 = vmul.f32 %v1492, %v1767
    %v1785 = vadd.f32 %v1769, %v1773
    %v1786 = vadd.f32 %v1785, %v1777
    %v1787 = vadd.f32 %v1786, %v1781
    %v1788 = vrot.slane %v1787, 4
    %v1789 = vadd.f32 %v1787, %v1788
    %v1790 = vrot.slane %v1789, 2
    %v1791 = vadd.f32 %v1789, %v1790
    %v1792 = vrot.slane %v1791, 1
    %v1793 = vadd.f32 %v1791, %v1792
    %v1794 = vadd.f32 %v1770, %v1774
    %v1795 = vadd.f32 %v1794, %v1778
    %v1796 = vadd.f32 %v1795, %v1782
    %v1797 = vrot.slane %v1796, 4
    %v1798 = vadd.f32 %v1796, %v1797
    %v1799 = vrot.slane %v1798, 2
    %v1800 = vadd.f32 %v1798, %v1799
    %v1801 = vrot.slane %v1800, 1
    %v1802 = vadd.f32 %v1800, %v1801
    %v1803 = vadd.f32 %v1771, %v1775
    %v1804 = vadd.f32 %v1803, %v1779
    %v1805 = vadd.f32 %v1804, %v1783
    %v1806 = vrot.slane %v1805, 4
    %v1807 = vadd.f32 %v1805, %v1806
    %v1808 = vrot.slane %v1807, 2
    %v1809 = vadd.f32 %v1807, %v1808
    %v1810 = vrot.slane %v1809, 1
    %v1811 = vadd.f32 %v1809, %v1810
    %v1812 = vadd.f32 %v1772, %v1776
    %v1813 = vadd.f32 %v1812, %v1780
    %v1814 = vadd.f32 %v1813, %v1784
    %v1815 = vrot.slane %v1814, 4
    %v1816 = vadd.f32 %v1814, %v1815
    %v1817 = vrot.slane %v1816, 2
    %v1818 = vadd.f32 %v1816, %v1817
    %v1819 = vrot.slane %v1818, 1
    %v1820 = vadd.f32 %v1818, %v1819
    %v1821 = vld [vmem:[#allocation2] sm:$0x1]
    %1823 = vset.pattern.permute.xlu0 0
    %1824 = vperm.xlu0 %1823, %v1821
    %v1825 = vpop.permute.xlu0 %1824
    %v1827 = vperm.slane %v1825, 0
    %v1828 = vadd.f32 %v1793, %v1827
    %v1829 = vadd.f32 %v1802, %v1827
    %v1830 = vadd.f32 %v1811, %v1827
    %v1831 = vadd.f32 %v1820, %v1827
    %v1832 = vmul.f32 %v598, %v574
    %v1833 = vmul.f32 %v663, %v639
    %v1834 = vmul.f32 %v728, %v704
    %v1835 = vmul.f32 %v793, %v769
    %v1836 = vmul.f32 %v601, %v577
    %v1837 = vmul.f32 %v666, %v642
    %v1838 = vmul.f32 %v731, %v707
    %v1839 = vmul.f32 %v796, %v772
    %v1840 = vmul.f32 %v604, %v574
    %v1841 = vmul.f32 %v669, %v639
    %v1842 = vmul.f32 %v734, %v704
    %v1843 = vmul.f32 %v799, %v769
    %v1844 = vmul.f32 %v607, %v577
    %v1845 = vmul.f32 %v672, %v642
    %v1846 = vmul.f32 %v737, %v707
    %v1847 = vmul.f32 %v802, %v772
    %v1848 = vmul.f32 %v610, %v574
    %v1849 = vmul.f32 %v675, %v639
    %v1850 = vmul.f32 %v740, %v704
    %v1851 = vmul.f32 %v805, %v769
    %v1852 = vmul.f32 %v613, %v577
    %v1853 = vmul.f32 %v678, %v642
    %v1854 = vmul.f32 %v743, %v707
    %v1855 = vmul.f32 %v808, %v772
    %v1856 = vmul.f32 %v616, %v574
    %v1857 = vmul.f32 %v681, %v639
    %v1858 = vmul.f32 %v746, %v704
    %v1859 = vmul.f32 %v811, %v769
    %v1860 = vmul.f32 %v619, %v577
    %v1861 = vmul.f32 %v684, %v642
    %v1862 = vmul.f32 %v749, %v707
    %v1863 = vmul.f32 %v814, %v772
    %v1864 = vadd.f32 %v1832, %v1836
    %v1865 = vrot.slane %v1864, 4
    %v1866 = vadd.f32 %v1864, %v1865
    %v1867 = vrot.slane %v1866, 2
    %v1868 = vadd.f32 %v1866, %v1867
    %v1869 = vrot.slane %v1868, 1
    %v1870 = vadd.f32 %v1868, %v1869
    %v1871 = vadd.f32 %v1833, %v1837
    %v1872 = vrot.slane %v1871, 4
    %v1873 = vadd.f32 %v1871, %v1872
    %v1874 = vrot.slane %v1873, 2
    %v1875 = vadd.f32 %v1873, %v1874
    %v1876 = vrot.slane %v1875, 1
    %v1877 = vadd.f32 %v1875, %v1876
    %v1878 = vadd.f32 %v1834, %v1838
    %v1879 = vrot.slane %v1878, 4
    %v1880 = vadd.f32 %v1878, %v1879
    %v1881 = vrot.slane %v1880, 2
    %v1882 = vadd.f32 %v1880, %v1881
    %v1883 = vrot.slane %v1882, 1
    %v1884 = vadd.f32 %v1882, %v1883
    %v1885 = vadd.f32 %v1835, %v1839
    %v1886 = vrot.slane %v1885, 4
    %v1887 = vadd.f32 %v1885, %v1886
    %v1888 = vrot.slane %v1887, 2
    %v1889 = vadd.f32 %v1887, %v1888
    %v1890 = vrot.slane %v1889, 1
    %v1891 = vadd.f32 %v1889, %v1890
    %v1892 = vadd.f32 %v1840, %v1844
    %v1893 = vrot.slane %v1892, 4
    %v1894 = vadd.f32 %v1892, %v1893
    %v1895 = vrot.slane %v1894, 2
    %v1896 = vadd.f32 %v1894, %v1895
    %v1897 = vrot.slane %v1896, 1
    %v1898 = vadd.f32 %v1896, %v1897
    %v1899 = vadd.f32 %v1841, %v1845
    %v1900 = vrot.slane %v1899, 4
    %v1901 = vadd.f32 %v1899, %v1900
    %v1902 = vrot.slane %v1901, 2
    %v1903 = vadd.f32 %v1901, %v1902
    %v1904 = vrot.slane %v1903, 1
    %v1905 = vadd.f32 %v1903, %v1904
    %v1906 = vadd.f32 %v1842, %v1846
    %v1907 = vrot.slane %v1906, 4
    %v1908 = vadd.f32 %v1906, %v1907
    %v1909 = vrot.slane %v1908, 2
    %v1910 = vadd.f32 %v1908, %v1909
    %v1911 = vrot.slane %v1910, 1
    %v1912 = vadd.f32 %v1910, %v1911
    %v1913 = vadd.f32 %v1843, %v1847
    %v1914 = vrot.slane %v1913, 4
    %v1915 = vadd.f32 %v1913, %v1914
    %v1916 = vrot.slane %v1915, 2
    %v1917 = vadd.f32 %v1915, %v1916
    %v1918 = vrot.slane %v1917, 1
    %v1919 = vadd.f32 %v1917, %v1918
    %v1920 = vadd.f32 %v1848, %v1852
    %v1921 = vrot.slane %v1920, 4
    %v1922 = vadd.f32 %v1920, %v1921
    %v1923 = vrot.slane %v1922, 2
    %v1924 = vadd.f32 %v1922, %v1923
    %v1925 = vrot.slane %v1924, 1
    %v1926 = vadd.f32 %v1924, %v1925
    %v1927 = vadd.f32 %v1849, %v1853
    %v1928 = vrot.slane %v1927, 4
    %v1929 = vadd.f32 %v1927, %v1928
    %v1930 = vrot.slane %v1929, 2
    %v1931 = vadd.f32 %v1929, %v1930
    %v1932 = vrot.slane %v1931, 1
    %v1933 = vadd.f32 %v1931, %v1932
    %v1934 = vadd.f32 %v1850, %v1854
    %v1935 = vrot.slane %v1934, 4
    %v1936 = vadd.f32 %v1934, %v1935
    %v1937 = vrot.slane %v1936, 2
    %v1938 = vadd.f32 %v1936, %v1937
    %v1939 = vrot.slane %v1938, 1
    %v1940 = vadd.f32 %v1938, %v1939
    %v1941 = vadd.f32 %v1851, %v1855
    %v1942 = vrot.slane %v1941, 4
    %v1943 = vadd.f32 %v1941, %v1942
    %v1944 = vrot.slane %v1943, 2
    %v1945 = vadd.f32 %v1943, %v1944
    %v1946 = vrot.slane %v1945, 1
    %v1947 = vadd.f32 %v1945, %v1946
    %v1948 = vadd.f32 %v1856, %v1860
    %v1949 = vrot.slane %v1948, 4
    %v1950 = vadd.f32 %v1948, %v1949
    %v1951 = vrot.slane %v1950, 2
    %v1952 = vadd.f32 %v1950, %v1951
    %v1953 = vrot.slane %v1952, 1
    %v1954 = vadd.f32 %v1952, %v1953
    %v1955 = vadd.f32 %v1857, %v1861
    %v1956 = vrot.slane %v1955, 4
    %v1957 = vadd.f32 %v1955, %v1956
    %v1958 = vrot.slane %v1957, 2
    %v1959 = vadd.f32 %v1957, %v1958
    %v1960 = vrot.slane %v1959, 1
    %v1961 = vadd.f32 %v1959, %v1960
    %v1962 = vadd.f32 %v1858, %v1862
    %v1963 = vrot.slane %v1962, 4
    %v1964 = vadd.f32 %v1962, %v1963
    %v1965 = vrot.slane %v1964, 2
    %v1966 = vadd.f32 %v1964, %v1965
    %v1967 = vrot.slane %v1966, 1
    %v1968 = vadd.f32 %v1966, %v1967
    %v1969 = vadd.f32 %v1859, %v1863
    %v1970 = vrot.slane %v1969, 4
    %v1971 = vadd.f32 %v1969, %v1970
    %v1972 = vrot.slane %v1971, 2
    %v1973 = vadd.f32 %v1971, %v1972
    %v1974 = vrot.slane %v1973, 1
    %v1975 = vadd.f32 %v1973, %v1974
    %v1976 = vmul.f32 %v1870, 0.25
    %v1977 = vmul.f32 %v1877, 0.25
    %v1978 = vmul.f32 %v1884, 0.25
    %v1979 = vmul.f32 %v1891, 0.25
    %v1980 = vmul.f32 %v1898, 0.25
    %v1981 = vmul.f32 %v1905, 0.25
    %v1982 = vmul.f32 %v1912, 0.25
    %v1983 = vmul.f32 %v1919, 0.25
    %v1984 = vmul.f32 %v1926, 0.25
    %v1985 = vmul.f32 %v1933, 0.25
    %v1986 = vmul.f32 %v1940, 0.25
    %v1987 = vmul.f32 %v1947, 0.25
    %v1988 = vmul.f32 %v1954, 0.25
    %v1989 = vmul.f32 %v1961, 0.25
    %v1990 = vmul.f32 %v1968, 0.25
    %v1991 = vmul.f32 %v1975, 0.25
    %v1994 = vperm.slane %v68, 0
    %v1995 = vperm.slane %v68, 4
    %v1996 = vperm.slane %v69, 0
    %v1997 = vperm.slane %v69, 4
    %v2002 = vperm.slane %v1994, 0
    %v2003 = vperm.slane %v1995, 0
    %v2004 = vperm.slane %v1996, 0
    %v2005 = vperm.slane %v1997, 0
    %v2010 = vrot.slane %v2003, 4
    %v2011 = vrot.slane %v2005, 4
    %vm2012 = vcmask 1043456
    %v2013 = vsel %vm2012, %v2002, %v2010
    %v2014 = vsel %vm2012, %v2004, %v2011
    %v2017 = vmul.f32 %v68, %v2013
    %v2018 = vmul.f32 %v69, %v2014
    %v2019 = vsub.f32 1.0, %v2017
    %v2020 = vsub.f32 1.0, %v2018
    %v2021 = vmul.f32 %v2019, -1e+10
    %v2022 = vmul.f32 %v2020, -1e+10
    %2025 = vst [vmem:[#allocation1] ss:$2 sm:$0xff] %v2021
    %s2026 = scalar_lea.vmem [#allocation1], 16
    %2027 = vst [vmem:[%s2026] ss:$2 sm:$0xff] %v2022
    %v2028 = vld.sshfl [vmem:[#allocation1] sm:$0xff pattern:$0x75316420]
    %v2029 = vld.sshfl [vmem:[#allocation1 + $0x8] sm:$0xff pattern:$0x75316420]
    %v2030 = vld.sshfl [vmem:[#allocation1 + $0x10] sm:$0xff pattern:$0x75316420]
    %v2031 = vld.sshfl [vmem:[#allocation1 + $0x18] sm:$0xff pattern:$0x75316420]
    %v2032 = vrot.slane %v2028, 1
    %v2033 = vrot.slane %v2029, 1
    %v2034 = vrot.slane %v2030, 1
    %v2035 = vrot.slane %v2031, 1
    %v2036 = vrot.slane %v2028, 2
    %v2037 = vrot.slane %v2029, 2
    %v2038 = vrot.slane %v2030, 2
    %v2039 = vrot.slane %v2031, 2
    %v2040 = vrot.slane %v2028, 3
    %v2041 = vrot.slane %v2029, 3
    %v2042 = vrot.slane %v2030, 3
    %v2043 = vrot.slane %v2031, 3
    %v2060 = vadd.f32 %v1976, %v2028
    %v2061 = vadd.f32 %v1977, %v2029
    %v2062 = vadd.f32 %v1978, %v2030
    %v2063 = vadd.f32 %v1979, %v2031
    %v2064 = vadd.f32 %v1980, %v2032
    %v2065 = vadd.f32 %v1981, %v2033
    %v2066 = vadd.f32 %v1982, %v2034
    %v2067 = vadd.f32 %v1983, %v2035
    %v2068 = vadd.f32 %v1984, %v2036
    %v2069 = vadd.f32 %v1985, %v2037
    %v2070 = vadd.f32 %v1986, %v2038
    %v2071 = vadd.f32 %v1987, %v2039
    %v2072 = vadd.f32 %v1988, %v2040
    %v2073 = vadd.f32 %v1989, %v2041
    %v2074 = vadd.f32 %v1990, %v2042
    %v2075 = vadd.f32 %v1991, %v2043
    %vm2076 = vcmask 1040384
    %v2077 = vsel %vm2076, %v2060, -inf
    %v2078 = vsel %vm2076, %v2064, -inf
    %v2079 = vmax.f32 %v2077, %v2078
    %v2080 = vsel %vm2076, %v2068, -inf
    %v2081 = vmax.f32 %v2079, %v2080
    %v2082 = vsel %vm2076, %v2072, -inf
    %v2083 = vmax.f32 %v2081, %v2082
    %v2084 = vsel %vm2076, %v2061, -inf
    %v2085 = vsel %vm2076, %v2065, -inf
    %v2086 = vmax.f32 %v2084, %v2085
    %v2087 = vsel %vm2076, %v2069, -inf
    %v2088 = vmax.f32 %v2086, %v2087
    %v2089 = vsel %vm2076, %v2073, -inf
    %v2090 = vmax.f32 %v2088, %v2089
    %v2091 = vsel %vm2076, %v2062, -inf
    %v2092 = vsel %vm2076, %v2066, -inf
    %v2093 = vmax.f32 %v2091, %v2092
    %v2094 = vsel %vm2076, %v2070, -inf
    %v2095 = vmax.f32 %v2093, %v2094
    %v2096 = vsel %vm2076, %v2074, -inf
    %v2097 = vmax.f32 %v2095, %v2096
    %v2098 = vsel %vm2076, %v2063, -inf
    %v2099 = vsel %vm2076, %v2067, -inf
    %v2100 = vmax.f32 %v2098, %v2099
    %v2101 = vsel %vm2076, %v2071, -inf
    %v2102 = vmax.f32 %v2100, %v2101
    %v2103 = vsel %vm2076, %v2075, -inf
    %v2104 = vmax.f32 %v2102, %v2103
    %v2105 = vperm.slane %v2083, 0
    %v2106 = vperm.slane %v2090, 0
    %v2107 = vperm.slane %v2097, 0
    %v2108 = vperm.slane %v2104, 0
    %v2109 = vsub.f32 %v2060, %v2105
    %v2110 = vsub.f32 %v2061, %v2106
    %v2111 = vsub.f32 %v2062, %v2107
    %v2112 = vsub.f32 %v2063, %v2108
    %v2113 = vsub.f32 %v2064, %v2105
    %v2114 = vsub.f32 %v2065, %v2106
    %v2115 = vsub.f32 %v2066, %v2107
    %v2116 = vsub.f32 %v2067, %v2108
    %v2117 = vsub.f32 %v2068, %v2105
    %v2118 = vsub.f32 %v2069, %v2106
    %v2119 = vsub.f32 %v2070, %v2107
    %v2120 = vsub.f32 %v2071, %v2108
    %v2121 = vsub.f32 %v2072, %v2105
    %v2122 = vsub.f32 %v2073, %v2106
    %v2123 = vsub.f32 %v2074, %v2107
    %v2124 = vsub.f32 %v2075, %v2108
    %v2125 = vmul.f32 %v2109, 1.442695
    %v2126 = vpow.pop %v2125
    %v2127 = vmul.f32 %v2110, 1.442695
    %v2128 = vpow.pop %v2127
    %v2129 = vmul.f32 %v2111, 1.442695
    %v2130 = vpow.pop %v2129
    %v2131 = vmul.f32 %v2112, 1.442695
    %v2132 = vpow.pop %v2131
    %v2133 = vmul.f32 %v2113, 1.442695
    %v2134 = vpow.pop %v2133
    %v2135 = vmul.f32 %v2114, 1.442695
    %v2136 = vpow.pop %v2135
    %v2137 = vmul.f32 %v2115, 1.442695
    %v2138 = vpow.pop %v2137
    %v2139 = vmul.f32 %v2116, 1.442695
    %v2140 = vpow.pop %v2139
    %v2141 = vmul.f32 %v2117, 1.442695
    %v2142 = vpow.pop %v2141
    %v2143 = vmul.f32 %v2118, 1.442695
    %v2144 = vpow.pop %v2143
    %v2145 = vmul.f32 %v2119, 1.442695
    %v2146 = vpow.pop %v2145
    %v2147 = vmul.f32 %v2120, 1.442695
    %v2148 = vpow.pop %v2147
    %v2149 = vmul.f32 %v2121, 1.442695
    %v2150 = vpow.pop %v2149
    %v2151 = vmul.f32 %v2122, 1.442695
    %v2152 = vpow.pop %v2151
    %v2153 = vmul.f32 %v2123, 1.442695
    %v2154 = vpow.pop %v2153
    %v2155 = vmul.f32 %v2124, 1.442695
    %v2156 = vpow.pop %v2155
    %v2173 = vrot.slane %v2134, 7
    %vm2174 = vcmask 1041409
    %v2175 = vsel %vm2174, %v2173, %v2126
    %v2176 = vrot.slane %v2142, 6
    %vm2177 = vcmask 1042434
    %v2178 = vsel %vm2177, %v2176, %v2175
    %v2179 = vrot.slane %v2150, 5
    %vm2180 = vcmask 1043459
    %v2181 = vsel %vm2180, %v2179, %v2178
    %v2182 = vrot.slane %v2136, 7
    %v2183 = vsel %vm2174, %v2182, %v2128
    %v2184 = vrot.slane %v2144, 6
    %v2185 = vsel %vm2177, %v2184, %v2183
    %v2186 = vrot.slane %v2152, 5
    %v2187 = vsel %vm2180, %v2186, %v2185
    %v2188 = vrot.slane %v2138, 7
    %v2189 = vsel %vm2174, %v2188, %v2130
    %v2190 = vrot.slane %v2146, 6
    %v2191 = vsel %vm2177, %v2190, %v2189
    %v2192 = vrot.slane %v2154, 5
    %v2193 = vsel %vm2180, %v2192, %v2191
    %v2194 = vrot.slane %v2140, 7
    %v2195 = vsel %vm2174, %v2194, %v2132
    %v2196 = vrot.slane %v2148, 6
    %v2197 = vsel %vm2177, %v2196, %v2195
    %v2198 = vrot.slane %v2156, 5
    %v2199 = vsel %vm2180, %v2198, %v2197
    %v2204 = vsel %vm2012, %v2181, 0.0
    %v2205 = vrot.slane %v2204, 4
    %v2206 = vadd.f32 %v2204, %v2205
    %v2207 = vrot.slane %v2206, 2
    %v2208 = vadd.f32 %v2206, %v2207
    %v2209 = vrot.slane %v2208, 1
    %v2210 = vadd.f32 %v2208, %v2209
    %v2211 = vsel %vm2012, %v2187, 0.0
    %v2212 = vrot.slane %v2211, 4
    %v2213 = vadd.f32 %v2211, %v2212
    %v2214 = vrot.slane %v2213, 2
    %v2215 = vadd.f32 %v2213, %v2214
    %v2216 = vrot.slane %v2215, 1
    %v2217 = vadd.f32 %v2215, %v2216
    %v2218 = vsel %vm2012, %v2193, 0.0
    %v2219 = vrot.slane %v2218, 4
    %v2220 = vadd.f32 %v2218, %v2219
    %v2221 = vrot.slane %v2220, 2
    %v2222 = vadd.f32 %v2220, %v2221
    %v2223 = vrot.slane %v2222, 1
    %v2224 = vadd.f32 %v2222, %v2223
    %v2225 = vsel %vm2012, %v2199, 0.0
    %v2226 = vrot.slane %v2225, 4
    %v2227 = vadd.f32 %v2225, %v2226
    %v2228 = vrot.slane %v2227, 2
    %v2229 = vadd.f32 %v2227, %v2228
    %v2230 = vrot.slane %v2229, 1
    %v2231 = vadd.f32 %v2229, %v2230
    %v2232 = vrcp.pop %v2210
    %v2233 = vmul.f32 %v2210, %v2232
    %v2234 = vsub.f32 1.0, %v2233
    %v2235 = vmul.f32 %v2232, %v2234
    %v2236 = vadd.f32 %v2232, %v2235
    %vm2237 = vweird.f32 %v2210
    %vm2238 = vweird.f32 %v2232
    %vm2239 = vmor %vm2237, %vm2238
    %v2240 = vsel %vm2239, %v2232, %v2236
    %v2241 = vand.u32 2147483647, %v2210
    %vm2242 = vcmp.eq.f32.partialorder %v2241, 8.507059e+37
    %v2243 = vand.u32 %v2210, 2147483648
    %v2244 = vor.u32 1.1754944e-38, %v2243
    %v2245 = vsel %vm2242, %v2244, %v2240
    %v2246 = vmul.f32 1.0, %v2245
    %v2247 = vrcp.pop %v2217
    %v2248 = vmul.f32 %v2217, %v2247
    %v2249 = vsub.f32 1.0, %v2248
    %v2250 = vmul.f32 %v2247, %v2249
    %v2251 = vadd.f32 %v2247, %v2250
    %vm2252 = vweird.f32 %v2217
    %vm2253 = vweird.f32 %v2247
    %vm2254 = vmor %vm2252, %vm2253
    %v2255 = vsel %vm2254, %v2247, %v2251
    %v2256 = vand.u32 2147483647, %v2217
    %vm2257 = vcmp.eq.f32.partialorder %v2256, 8.507059e+37
    %v2258 = vand.u32 %v2217, 2147483648
    %v2259 = vor.u32 1.1754944e-38, %v2258
    %v2260 = vsel %vm2257, %v2259, %v2255
    %v2261 = vmul.f32 1.0, %v2260
    %v2262 = vrcp.pop %v2224
    %v2263 = vmul.f32 %v2224, %v2262
    %v2264 = vsub.f32 1.0, %v2263
    %v2265 = vmul.f32 %v2262, %v2264
    %v2266 = vadd.f32 %v2262, %v2265
    %vm2267 = vweird.f32 %v2224
    %vm2268 = vweird.f32 %v2262
    %vm2269 = vmor %vm2267, %vm2268
    %v2270 = vsel %vm2269, %v2262, %v2266
    %v2271 = vand.u32 2147483647, %v2224
    %vm2272 = vcmp.eq.f32.partialorder %v2271, 8.507059e+37
    %v2273 = vand.u32 %v2224, 2147483648
    %v2274 = vor.u32 1.1754944e-38, %v2273
    %v2275 = vsel %vm2272, %v2274, %v2270
    %v2276 = vmul.f32 1.0, %v2275
    %v2277 = vrcp.pop %v2231
    %v2278 = vmul.f32 %v2231, %v2277
    %v2279 = vsub.f32 1.0, %v2278
    %v2280 = vmul.f32 %v2277, %v2279
    %v2281 = vadd.f32 %v2277, %v2280
    %vm2282 = vweird.f32 %v2231
    %vm2283 = vweird.f32 %v2277
    %vm2284 = vmor %vm2282, %vm2283
    %v2285 = vsel %vm2284, %v2277, %v2281
    %v2286 = vand.u32 2147483647, %v2231
    %vm2287 = vcmp.eq.f32.partialorder %v2286, 8.507059e+37
    %v2288 = vand.u32 %v2231, 2147483648
    %v2289 = vor.u32 1.1754944e-38, %v2288
    %v2290 = vsel %vm2287, %v2289, %v2285
    %v2291 = vmul.f32 1.0, %v2290
    %v2292 = vperm.slane %v2246, 0
    %v2293 = vperm.slane %v2261, 0
    %v2294 = vperm.slane %v2276, 0
    %v2295 = vperm.slane %v2291, 0
    %v2296 = vmul.f32 %v2126, %v2292
    %v2297 = vmul.f32 %v2128, %v2293
    %v2298 = vmul.f32 %v2130, %v2294
    %v2299 = vmul.f32 %v2132, %v2295
    %v2300 = vmul.f32 %v2134, %v2292
    %v2301 = vmul.f32 %v2136, %v2293
    %v2302 = vmul.f32 %v2138, %v2294
    %v2303 = vmul.f32 %v2140, %v2295
    %v2304 = vmul.f32 %v2142, %v2292
    %v2305 = vmul.f32 %v2144, %v2293
    %v2306 = vmul.f32 %v2146, %v2294
    %v2307 = vmul.f32 %v2148, %v2295
    %v2308 = vmul.f32 %v2150, %v2292
    %v2309 = vmul.f32 %v2152, %v2293
    %v2310 = vmul.f32 %v2154, %v2294
    %v2311 = vmul.f32 %v2156, %v2295
    %2314 = vst [vmem:[#allocation1] ss:$2 sm:$0xff] %v2017
    %s2315 = scalar_lea.vmem [#allocation1], 16
    %2316 = vst [vmem:[%s2315] ss:$2 sm:$0xff] %v2018
    %v2317 = vld.sshfl [vmem:[#allocation1] sm:$0xff pattern:$0x75316420]
    %v2318 = vld.sshfl [vmem:[#allocation1 + $0x8] sm:$0xff pattern:$0x75316420]
    %v2319 = vld.sshfl [vmem:[#allocation1 + $0x10] sm:$0xff pattern:$0x75316420]
    %v2320 = vld.sshfl [vmem:[#allocation1 + $0x18] sm:$0xff pattern:$0x75316420]
    %v2321 = vrot.slane %v2317, 1
    %v2322 = vrot.slane %v2318, 1
    %v2323 = vrot.slane %v2319, 1
    %v2324 = vrot.slane %v2320, 1
    %v2325 = vrot.slane %v2317, 2
    %v2326 = vrot.slane %v2318, 2
    %v2327 = vrot.slane %v2319, 2
    %v2328 = vrot.slane %v2320, 2
    %v2329 = vrot.slane %v2317, 3
    %v2330 = vrot.slane %v2318, 3
    %v2331 = vrot.slane %v2319, 3
    %v2332 = vrot.slane %v2320, 3
    %v2349 = vmul.f32 %v2296, %v2317
    %v2350 = vmul.f32 %v2297, %v2318
    %v2351 = vmul.f32 %v2298, %v2319
    %v2352 = vmul.f32 %v2299, %v2320
    %v2353 = vmul.f32 %v2300, %v2321
    %v2354 = vmul.f32 %v2301, %v2322
    %v2355 = vmul.f32 %v2302, %v2323
    %v2356 = vmul.f32 %v2303, %v2324
    %v2357 = vmul.f32 %v2304, %v2325
    %v2358 = vmul.f32 %v2305, %v2326
    %v2359 = vmul.f32 %v2306, %v2327
    %v2360 = vmul.f32 %v2307, %v2328
    %v2361 = vmul.f32 %v2308, %v2329
    %v2362 = vmul.f32 %v2309, %v2330
    %v2363 = vmul.f32 %v2310, %v2331
    %v2364 = vmul.f32 %v2311, %v2332
    %2367 = vst [vmem:[#allocation1] ss:$2 sm:$0xff] %v50
    %s2368 = scalar_lea.vmem [#allocation1], 16
    %2369 = vst [vmem:[%s2368] ss:$2 sm:$0xff] %v51
    %v2370 = vld.sshfl [vmem:[#allocation1] sm:$0xff pattern:$0x75316420]
    %v2371 = vld.sshfl [vmem:[#allocation1 + $0x8] sm:$0xff pattern:$0x75316420]
    %v2372 = vld.sshfl [vmem:[#allocation1 + $0x10] sm:$0xff pattern:$0x75316420]
    %v2373 = vld.sshfl [vmem:[#allocation1 + $0x18] sm:$0xff pattern:$0x75316420]
    %v2374 = vrot.slane %v2370, 1
    %v2375 = vrot.slane %v2371, 1
    %v2376 = vrot.slane %v2372, 1
    %v2377 = vrot.slane %v2373, 1
    %v2378 = vrot.slane %v2370, 2
    %v2379 = vrot.slane %v2371, 2
    %v2380 = vrot.slane %v2372, 2
    %v2381 = vrot.slane %v2373, 2
    %v2382 = vrot.slane %v2370, 3
    %v2383 = vrot.slane %v2371, 3
    %v2384 = vrot.slane %v2372, 3
    %v2385 = vrot.slane %v2373, 3
    %v2402 = vmul.f32 %v2349, %v2370
    %v2403 = vmul.f32 %v2350, %v2371
    %v2404 = vmul.f32 %v2351, %v2372
    %v2405 = vmul.f32 %v2352, %v2373
    %v2406 = vmul.f32 %v2353, %v2374
    %v2407 = vmul.f32 %v2354, %v2375
    %v2408 = vmul.f32 %v2355, %v2376
    %v2409 = vmul.f32 %v2356, %v2377
    %v2410 = vmul.f32 %v2357, %v2378
    %v2411 = vmul.f32 %v2358, %v2379
    %v2412 = vmul.f32 %v2359, %v2380
    %v2413 = vmul.f32 %v2360, %v2381
    %v2414 = vmul.f32 %v2361, %v2382
    %v2415 = vmul.f32 %v2362, %v2383
    %v2416 = vmul.f32 %v2363, %v2384
    %v2417 = vmul.f32 %v2364, %v2385
    %v2434 = vrot.slane %v2406, 7
    %v2435 = vsel %vm2174, %v2434, %v2402
    %v2436 = vrot.slane %v2410, 6
    %v2437 = vsel %vm2177, %v2436, %v2435
    %v2438 = vrot.slane %v2414, 5
    %v2439 = vsel %vm2180, %v2438, %v2437
    %v2440 = vrot.slane %v2407, 7
    %v2441 = vsel %vm2174, %v2440, %v2403
    %v2442 = vrot.slane %v2411, 6
    %v2443 = vsel %vm2177, %v2442, %v2441
    %v2444 = vrot.slane %v2415, 5
    %v2445 = vsel %vm2180, %v2444, %v2443
    %v2446 = vrot.slane %v2408, 7
    %v2447 = vsel %vm2174, %v2446, %v2404
    %v2448 = vrot.slane %v2412, 6
    %v2449 = vsel %vm2177, %v2448, %v2447
    %v2450 = vrot.slane %v2416, 5
    %v2451 = vsel %vm2180, %v2450, %v2449
    %v2452 = vrot.slane %v2409, 7
    %v2453 = vsel %vm2174, %v2452, %v2405
    %v2454 = vrot.slane %v2413, 6
    %v2455 = vsel %vm2177, %v2454, %v2453
    %v2456 = vrot.slane %v2417, 5
    %v2457 = vsel %vm2180, %v2456, %v2455
    %v2462 = vsel %vm2012, %v2439, 0.0
    %v2463 = vrot.slane %v2462, 4
    %v2464 = vadd.f32 %v2462, %v2463
    %v2465 = vrot.slane %v2464, 2
    %v2466 = vadd.f32 %v2464, %v2465
    %v2467 = vrot.slane %v2466, 1
    %v2468 = vadd.f32 %v2466, %v2467
    %v2469 = vsel %vm2012, %v2445, 0.0
    %v2470 = vrot.slane %v2469, 4
    %v2471 = vadd.f32 %v2469, %v2470
    %v2472 = vrot.slane %v2471, 2
    %v2473 = vadd.f32 %v2471, %v2472
    %v2474 = vrot.slane %v2473, 1
    %v2475 = vadd.f32 %v2473, %v2474
    %v2476 = vsel %vm2012, %v2451, 0.0
    %v2477 = vrot.slane %v2476, 4
    %v2478 = vadd.f32 %v2476, %v2477
    %v2479 = vrot.slane %v2478, 2
    %v2480 = vadd.f32 %v2478, %v2479
    %v2481 = vrot.slane %v2480, 1
    %v2482 = vadd.f32 %v2480, %v2481
    %v2483 = vsel %vm2012, %v2457, 0.0
    %v2484 = vrot.slane %v2483, 4
    %v2485 = vadd.f32 %v2483, %v2484
    %v2486 = vrot.slane %v2485, 2
    %v2487 = vadd.f32 %v2485, %v2486
    %v2488 = vrot.slane %v2487, 1
    %v2489 = vadd.f32 %v2487, %v2488
    %v2494 = vrot.slane %v2475, 4
    %v2495 = vrot.slane %v2489, 4
    %v2496 = vsel %vm2012, %v2468, %v2494
    %v2497 = vsel %vm2012, %v2482, %v2495
    %v2500 = vadd.f32 %v50, %v2496
    %v2501 = vadd.f32 %v51, %v2497
    %v2504 = vperm.slane %v2500, 0
    %v2505 = vperm.slane %v2500, 4
    %v2506 = vperm.slane %v2501, 0
    %v2507 = vperm.slane %v2501, 4
    %v2512 = vperm.slane %v2504, 0
    %v2513 = vperm.slane %v2505, 0
    %v2514 = vperm.slane %v2506, 0
    %v2515 = vperm.slane %v2507, 0
    %v2516 = vmul.f32 %v2512, %v1713
    %v2517 = vmul.f32 %v2513, %v1714
    %v2518 = vmul.f32 %v2514, %v1715
    %v2519 = vmul.f32 %v2515, %v1716
    %v2520 = vmul.f32 %v2512, %v1717
    %v2521 = vmul.f32 %v2513, %v1718
    %v2522 = vmul.f32 %v2514, %v1719
    %v2523 = vmul.f32 %v2515, %v1720
    %v2524 = vmul.f32 %v2512, %v1721
    %v2525 = vmul.f32 %v2513, %v1722
    %v2526 = vmul.f32 %v2514, %v1723
    %v2527 = vmul.f32 %v2515, %v1724
    %v2528 = vmul.f32 %v2512, %v1725
    %v2529 = vmul.f32 %v2513, %v1726
    %v2530 = vmul.f32 %v2514, %v1727
    %v2531 = vmul.f32 %v2515, %v1728
    %v2532 = vadd.f32 %v2516, %v1123
    %v2533 = vadd.f32 %v2517, %v1212
    %v2534 = vadd.f32 %v2518, %v1301
    %v2535 = vadd.f32 %v2519, %v1390
    %v2536 = vadd.f32 %v2520, %v1126
    %v2537 = vadd.f32 %v2521, %v1215
    %v2538 = vadd.f32 %v2522, %v1304
    %v2539 = vadd.f32 %v2523, %v1393
    %v2540 = vadd.f32 %v2524, %v1129
    %v2541 = vadd.f32 %v2525, %v1218
    %v2542 = vadd.f32 %v2526, %v1307
    %v2543 = vadd.f32 %v2527, %v1396
    %v2544 = vadd.f32 %v2528, %v1132
    %v2545 = vadd.f32 %v2529, %v1221
    %v2546 = vadd.f32 %v2530, %v1310
    %v2547 = vadd.f32 %v2531, %v1399
    %vm2548 = vcmp.gt.f32.partialorder %v2532, 0.0
    %vm2549 = vcmp.gt.f32.partialorder %v2533, 0.0
    %vm2550 = vcmp.gt.f32.partialorder %v2534, 0.0
    %vm2551 = vcmp.gt.f32.partialorder %v2535, 0.0
    %vm2552 = vcmp.gt.f32.partialorder %v2536, 0.0
    %vm2553 = vcmp.gt.f32.partialorder %v2537, 0.0
    %vm2554 = vcmp.gt.f32.partialorder %v2538, 0.0
    %vm2555 = vcmp.gt.f32.partialorder %v2539, 0.0
    %vm2556 = vcmp.gt.f32.partialorder %v2540, 0.0
    %vm2557 = vcmp.gt.f32.partialorder %v2541, 0.0
    %vm2558 = vcmp.gt.f32.partialorder %v2542, 0.0
    %vm2559 = vcmp.gt.f32.partialorder %v2543, 0.0
    %vm2560 = vcmp.gt.f32.partialorder %v2544, 0.0
    %vm2561 = vcmp.gt.f32.partialorder %v2545, 0.0
    %vm2562 = vcmp.gt.f32.partialorder %v2546, 0.0
    %vm2563 = vcmp.gt.f32.partialorder %v2547, 0.0
    %v2564 = vmul.f32 %v2532, 0.01
    %v2565 = vmul.f32 %v2533, 0.01
    %v2566 = vmul.f32 %v2534, 0.01
    %v2567 = vmul.f32 %v2535, 0.01
    %v2568 = vmul.f32 %v2536, 0.01
    %v2569 = vmul.f32 %v2537, 0.01
    %v2570 = vmul.f32 %v2538, 0.01
    %v2571 = vmul.f32 %v2539, 0.01
    %v2572 = vmul.f32 %v2540, 0.01
    %v2573 = vmul.f32 %v2541, 0.01
    %v2574 = vmul.f32 %v2542, 0.01
    %v2575 = vmul.f32 %v2543, 0.01
    %v2576 = vmul.f32 %v2544, 0.01
    %v2577 = vmul.f32 %v2545, 0.01
    %v2578 = vmul.f32 %v2546, 0.01
    %v2579 = vmul.f32 %v2547, 0.01
    %v2580 = vsel %vm2548, %v2532, %v2564
    %v2581 = vsel %vm2549, %v2533, %v2565
    %v2582 = vsel %vm2550, %v2534, %v2566
    %v2583 = vsel %vm2551, %v2535, %v2567
    %v2584 = vsel %vm2552, %v2536, %v2568
    %v2585 = vsel %vm2553, %v2537, %v2569
    %v2586 = vsel %vm2554, %v2538, %v2570
    %v2587 = vsel %vm2555, %v2539, %v2571
    %v2588 = vsel %vm2556, %v2540, %v2572
    %v2589 = vsel %vm2557, %v2541, %v2573
    %v2590 = vsel %vm2558, %v2542, %v2574
    %v2591 = vsel %vm2559, %v2543, %v2575
    %v2592 = vsel %vm2560, %v2544, %v2576
    %v2593 = vsel %vm2561, %v2545, %v2577
    %v2594 = vsel %vm2562, %v2546, %v2578
    %v2595 = vsel %vm2563, %v2547, %v2579
    %v2596 = vmul.f32 %v2580, %v1729
    %v2597 = vmul.f32 %v2581, %v1730
    %v2598 = vmul.f32 %v2582, %v1731
    %v2599 = vmul.f32 %v2583, %v1732
    %v2600 = vmul.f32 %v2584, %v1733
    %v2601 = vmul.f32 %v2585, %v1734
    %v2602 = vmul.f32 %v2586, %v1735
    %v2603 = vmul.f32 %v2587, %v1736
    %v2604 = vmul.f32 %v2588, %v1737
    %v2605 = vmul.f32 %v2589, %v1738
    %v2606 = vmul.f32 %v2590, %v1739
    %v2607 = vmul.f32 %v2591, %v1740
    %v2608 = vmul.f32 %v2592, %v1741
    %v2609 = vmul.f32 %v2593, %v1742
    %v2610 = vmul.f32 %v2594, %v1743
    %v2611 = vmul.f32 %v2595, %v1744
    %v2612 = vadd.f32 %v2596, %v2600
    %v2613 = vadd.f32 %v2612, %v2604
    %v2614 = vadd.f32 %v2613, %v2608
    %v2615 = vrot.slane %v2614, 4
    %v2616 = vadd.f32 %v2614, %v2615
    %v2617 = vrot.slane %v2616, 2
    %v2618 = vadd.f32 %v2616, %v2617
    %v2619 = vrot.slane %v2618, 1
    %v2620 = vadd.f32 %v2618, %v2619
    %v2621 = vadd.f32 %v2597, %v2601
    %v2622 = vadd.f32 %v2621, %v2605
    %v2623 = vadd.f32 %v2622, %v2609
    %v2624 = vrot.slane %v2623, 4
    %v2625 = vadd.f32 %v2623, %v2624
    %v2626 = vrot.slane %v2625, 2
    %v2627 = vadd.f32 %v2625, %v2626
    %v2628 = vrot.slane %v2627, 1
    %v2629 = vadd.f32 %v2627, %v2628
    %v2630 = vadd.f32 %v2598, %v2602
    %v2631 = vadd.f32 %v2630, %v2606
    %v2632 = vadd.f32 %v2631, %v2610
    %v2633 = vrot.slane %v2632, 4
    %v2634 = vadd.f32 %v2632, %v2633
    %v2635 = vrot.slane %v2634, 2
    %v2636 = vadd.f32 %v2634, %v2635
    %v2637 = vrot.slane %v2636, 1
    %v2638 = vadd.f32 %v2636, %v2637
    %v2639 = vadd.f32 %v2599, %v2603
    %v2640 = vadd.f32 %v2639, %v2607
    %v2641 = vadd.f32 %v2640, %v2611
    %v2642 = vrot.slane %v2641, 4
    %v2643 = vadd.f32 %v2641, %v2642
    %v2644 = vrot.slane %v2643, 2
    %v2645 = vadd.f32 %v2643, %v2644
    %v2646 = vrot.slane %v2645, 1
    %v2647 = vadd.f32 %v2645, %v2646
    %v2648 = vmul.f32 %v598, %v580
    %v2649 = vmul.f32 %v663, %v645
    %v2650 = vmul.f32 %v728, %v710
    %v2651 = vmul.f32 %v793, %v775
    %v2652 = vmul.f32 %v601, %v583
    %v2653 = vmul.f32 %v666, %v648
    %v2654 = vmul.f32 %v731, %v713
    %v2655 = vmul.f32 %v796, %v778
    %v2656 = vmul.f32 %v604, %v580
    %v2657 = vmul.f32 %v669, %v645
    %v2658 = vmul.f32 %v734, %v710
    %v2659 = vmul.f32 %v799, %v775
    %v2660 = vmul.f32 %v607, %v583
    %v2661 = vmul.f32 %v672, %v648
    %v2662 = vmul.f32 %v737, %v713
    %v2663 = vmul.f32 %v802, %v778
    %v2664 = vmul.f32 %v610, %v580
    %v2665 = vmul.f32 %v675, %v645
    %v2666 = vmul.f32 %v740, %v710
    %v2667 = vmul.f32 %v805, %v775
    %v2668 = vmul.f32 %v613, %v583
    %v2669 = vmul.f32 %v678, %v648
    %v2670 = vmul.f32 %v743, %v713
    %v2671 = vmul.f32 %v808, %v778
    %v2672 = vmul.f32 %v616, %v580
    %v2673 = vmul.f32 %v681, %v645
    %v2674 = vmul.f32 %v746, %v710
    %v2675 = vmul.f32 %v811, %v775
    %v2676 = vmul.f32 %v619, %v583
    %v2677 = vmul.f32 %v684, %v648
    %v2678 = vmul.f32 %v749, %v713
    %v2679 = vmul.f32 %v814, %v778
    %v2680 = vadd.f32 %v2648, %v2652
    %v2681 = vrot.slane %v2680, 4
    %v2682 = vadd.f32 %v2680, %v2681
    %v2683 = vrot.slane %v2682, 2
    %v2684 = vadd.f32 %v2682, %v2683
    %v2685 = vrot.slane %v2684, 1
    %v2686 = vadd.f32 %v2684, %v2685
    %v2687 = vadd.f32 %v2649, %v2653
    %v2688 = vrot.slane %v2687, 4
    %v2689 = vadd.f32 %v2687, %v2688
    %v2690 = vrot.slane %v2689, 2
    %v2691 = vadd.f32 %v2689, %v2690
    %v2692 = vrot.slane %v2691, 1
    %v2693 = vadd.f32 %v2691, %v2692
    %v2694 = vadd.f32 %v2650, %v2654
    %v2695 = vrot.slane %v2694, 4
    %v2696 = vadd.f32 %v2694, %v2695
    %v2697 = vrot.slane %v2696, 2
    %v2698 = vadd.f32 %v2696, %v2697
    %v2699 = vrot.slane %v2698, 1
    %v2700 = vadd.f32 %v2698, %v2699
    %v2701 = vadd.f32 %v2651, %v2655
    %v2702 = vrot.slane %v2701, 4
    %v2703 = vadd.f32 %v2701, %v2702
    %v2704 = vrot.slane %v2703, 2
    %v2705 = vadd.f32 %v2703, %v2704
    %v2706 = vrot.slane %v2705, 1
    %v2707 = vadd.f32 %v2705, %v2706
    %v2708 = vadd.f32 %v2656, %v2660
    %v2709 = vrot.slane %v2708, 4
    %v2710 = vadd.f32 %v2708, %v2709
    %v2711 = vrot.slane %v2710, 2
    %v2712 = vadd.f32 %v2710, %v2711
    %v2713 = vrot.slane %v2712, 1
    %v2714 = vadd.f32 %v2712, %v2713
    %v2715 = vadd.f32 %v2657, %v2661
    %v2716 = vrot.slane %v2715, 4
    %v2717 = vadd.f32 %v2715, %v2716
    %v2718 = vrot.slane %v2717, 2
    %v2719 = vadd.f32 %v2717, %v2718
    %v2720 = vrot.slane %v2719, 1
    %v2721 = vadd.f32 %v2719, %v2720
    %v2722 = vadd.f32 %v2658, %v2662
    %v2723 = vrot.slane %v2722, 4
    %v2724 = vadd.f32 %v2722, %v2723
    %v2725 = vrot.slane %v2724, 2
    %v2726 = vadd.f32 %v2724, %v2725
    %v2727 = vrot.slane %v2726, 1
    %v2728 = vadd.f32 %v2726, %v2727
    %v2729 = vadd.f32 %v2659, %v2663
    %v2730 = vrot.slane %v2729, 4
    %v2731 = vadd.f32 %v2729, %v2730
    %v2732 = vrot.slane %v2731, 2
    %v2733 = vadd.f32 %v2731, %v2732
    %v2734 = vrot.slane %v2733, 1
    %v2735 = vadd.f32 %v2733, %v2734
    %v2736 = vadd.f32 %v2664, %v2668
    %v2737 = vrot.slane %v2736, 4
    %v2738 = vadd.f32 %v2736, %v2737
    %v2739 = vrot.slane %v2738, 2
    %v2740 = vadd.f32 %v2738, %v2739
    %v2741 = vrot.slane %v2740, 1
    %v2742 = vadd.f32 %v2740, %v2741
    %v2743 = vadd.f32 %v2665, %v2669
    %v2744 = vrot.slane %v2743, 4
    %v2745 = vadd.f32 %v2743, %v2744
    %v2746 = vrot.slane %v2745, 2
    %v2747 = vadd.f32 %v2745, %v2746
    %v2748 = vrot.slane %v2747, 1
    %v2749 = vadd.f32 %v2747, %v2748
    %v2750 = vadd.f32 %v2666, %v2670
    %v2751 = vrot.slane %v2750, 4
    %v2752 = vadd.f32 %v2750, %v2751
    %v2753 = vrot.slane %v2752, 2
    %v2754 = vadd.f32 %v2752, %v2753
    %v2755 = vrot.slane %v2754, 1
    %v2756 = vadd.f32 %v2754, %v2755
    %v2757 = vadd.f32 %v2667, %v2671
    %v2758 = vrot.slane %v2757, 4
    %v2759 = vadd.f32 %v2757, %v2758
    %v2760 = vrot.slane %v2759, 2
    %v2761 = vadd.f32 %v2759, %v2760
    %v2762 = vrot.slane %v2761, 1
    %v2763 = vadd.f32 %v2761, %v2762
    %v2764 = vadd.f32 %v2672, %v2676
    %v2765 = vrot.slane %v2764, 4
    %v2766 = vadd.f32 %v2764, %v2765
    %v2767 = vrot.slane %v2766, 2
    %v2768 = vadd.f32 %v2766, %v2767
    %v2769 = vrot.slane %v2768, 1
    %v2770 = vadd.f32 %v2768, %v2769
    %v2771 = vadd.f32 %v2673, %v2677
    %v2772 = vrot.slane %v2771, 4
    %v2773 = vadd.f32 %v2771, %v2772
    %v2774 = vrot.slane %v2773, 2
    %v2775 = vadd.f32 %v2773, %v2774
    %v2776 = vrot.slane %v2775, 1
    %v2777 = vadd.f32 %v2775, %v2776
    %v2778 = vadd.f32 %v2674, %v2678
    %v2779 = vrot.slane %v2778, 4
    %v2780 = vadd.f32 %v2778, %v2779
    %v2781 = vrot.slane %v2780, 2
    %v2782 = vadd.f32 %v2780, %v2781
    %v2783 = vrot.slane %v2782, 1
    %v2784 = vadd.f32 %v2782, %v2783
    %v2785 = vadd.f32 %v2675, %v2679
    %v2786 = vrot.slane %v2785, 4
    %v2787 = vadd.f32 %v2785, %v2786
    %v2788 = vrot.slane %v2787, 2
    %v2789 = vadd.f32 %v2787, %v2788
    %v2790 = vrot.slane %v2789, 1
    %v2791 = vadd.f32 %v2789, %v2790
    %v2792 = vmul.f32 %v2686, 0.25
    %v2793 = vmul.f32 %v2693, 0.25
    %v2794 = vmul.f32 %v2700, 0.25
    %v2795 = vmul.f32 %v2707, 0.25
    %v2796 = vmul.f32 %v2714, 0.25
    %v2797 = vmul.f32 %v2721, 0.25
    %v2798 = vmul.f32 %v2728, 0.25
    %v2799 = vmul.f32 %v2735, 0.25
    %v2800 = vmul.f32 %v2742, 0.25
    %v2801 = vmul.f32 %v2749, 0.25
    %v2802 = vmul.f32 %v2756, 0.25
    %v2803 = vmul.f32 %v2763, 0.25
    %v2804 = vmul.f32 %v2770, 0.25
    %v2805 = vmul.f32 %v2777, 0.25
    %v2806 = vmul.f32 %v2784, 0.25
    %v2807 = vmul.f32 %v2791, 0.25
    %v2808 = vperm.slane %v68, 1
    %v2809 = vperm.slane %v68, 5
    %v2810 = vperm.slane %v69, 1
    %v2811 = vperm.slane %v69, 5
    %v2816 = vperm.slane %v2808, 1
    %v2817 = vperm.slane %v2809, 1
    %v2818 = vperm.slane %v2810, 1
    %v2819 = vperm.slane %v2811, 1
    %v2824 = vrot.slane %v2817, 4
    %v2825 = vrot.slane %v2819, 4
    %v2826 = vsel %vm2012, %v2816, %v2824
    %v2827 = vsel %vm2012, %v2818, %v2825
    %v2830 = vmul.f32 %v68, %v2826
    %v2831 = vmul.f32 %v69, %v2827
    %v2832 = vsub.f32 1.0, %v2830
    %v2833 = vsub.f32 1.0, %v2831
    %v2834 = vmul.f32 %v2832, -1e+10
    %v2835 = vmul.f32 %v2833, -1e+10
    %2838 = vst [vmem:[#allocation1] ss:$2 sm:$0xff] %v2834
    %s2839 = scalar_lea.vmem [#allocation1], 16
    %2840 = vst [vmem:[%s2839] ss:$2 sm:$0xff] %v2835
    %v2841 = vld.sshfl [vmem:[#allocation1] sm:$0xff pattern:$0x75316420]
    %v2842 = vld.sshfl [vmem:[#allocation1 + $0x8] sm:$0xff pattern:$0x75316420]
    %v2843 = vld.sshfl [vmem:[#allocation1 + $0x10] sm:$0xff pattern:$0x75316420]
    %v2844 = vld.sshfl [vmem:[#allocation1 + $0x18] sm:$0xff pattern:$0x75316420]
    %v2845 = vrot.slane %v2841, 1
    %v2846 = vrot.slane %v2842, 1
    %v2847 = vrot.slane %v2843, 1
    %v2848 = vrot.slane %v2844, 1
    %v2849 = vrot.slane %v2841, 2
    %v2850 = vrot.slane %v2842, 2
    %v2851 = vrot.slane %v2843, 2
    %v2852 = vrot.slane %v2844, 2
    %v2853 = vrot.slane %v2841, 3
    %v2854 = vrot.slane %v2842, 3
    %v2855 = vrot.slane %v2843, 3
    %v2856 = vrot.slane %v2844, 3
    %v2873 = vadd.f32 %v2792, %v2841
    %v2874 = vadd.f32 %v2793, %v2842
    %v2875 = vadd.f32 %v2794, %v2843
    %v2876 = vadd.f32 %v2795, %v2844
    %v2877 = vadd.f32 %v2796, %v2845
    %v2878 = vadd.f32 %v2797, %v2846
    %v2879 = vadd.f32 %v2798, %v2847
    %v2880 = vadd.f32 %v2799, %v2848
    %v2881 = vadd.f32 %v2800, %v2849
    %v2882 = vadd.f32 %v2801, %v2850
    %v2883 = vadd.f32 %v2802, %v2851
    %v2884 = vadd.f32 %v2803, %v2852
    %v2885 = vadd.f32 %v2804, %v2853
    %v2886 = vadd.f32 %v2805, %v2854
    %v2887 = vadd.f32 %v2806, %v2855
    %v2888 = vadd.f32 %v2807, %v2856
    %v2889 = vsel %vm2076, %v2873, -inf
    %v2890 = vsel %vm2076, %v2877, -inf
    %v2891 = vmax.f32 %v2889, %v2890
    %v2892 = vsel %vm2076, %v2881, -inf
    %v2893 = vmax.f32 %v2891, %v2892
    %v2894 = vsel %vm2076, %v2885, -inf
    %v2895 = vmax.f32 %v2893, %v2894
    %v2896 = vsel %vm2076, %v2874, -inf
    %v2897 = vsel %vm2076, %v2878, -inf
    %v2898 = vmax.f32 %v2896, %v2897
    %v2899 = vsel %vm2076, %v2882, -inf
    %v2900 = vmax.f32 %v2898, %v2899
    %v2901 = vsel %vm2076, %v2886, -inf
    %v2902 = vmax.f32 %v2900, %v2901
    %v2903 = vsel %vm2076, %v2875, -inf
    %v2904 = vsel %vm2076, %v2879, -inf
    %v2905 = vmax.f32 %v2903, %v2904
    %v2906 = vsel %vm2076, %v2883, -inf
    %v2907 = vmax.f32 %v2905, %v2906
    %v2908 = vsel %vm2076, %v2887, -inf
    %v2909 = vmax.f32 %v2907, %v2908
    %v2910 = vsel %vm2076, %v2876, -inf
    %v2911 = vsel %vm2076, %v2880, -inf
    %v2912 = vmax.f32 %v2910, %v2911
    %v2913 = vsel %vm2076, %v2884, -inf
    %v2914 = vmax.f32 %v2912, %v2913
    %v2915 = vsel %vm2076, %v2888, -inf
    %v2916 = vmax.f32 %v2914, %v2915
    %v2917 = vperm.slane %v2895, 0
    %v2918 = vperm.slane %v2902, 0
    %v2919 = vperm.slane %v2909, 0
    %v2920 = vperm.slane %v2916, 0
    %v2921 = vsub.f32 %v2873, %v2917
    %v2922 = vsub.f32 %v2874, %v2918
    %v2923 = vsub.f32 %v2875, %v2919
    %v2924 = vsub.f32 %v2876, %v2920
    %v2925 = vsub.f32 %v2877, %v2917
    %v2926 = vsub.f32 %v2878, %v2918
    %v2927 = vsub.f32 %v2879, %v2919
    %v2928 = vsub.f32 %v2880, %v2920
    %v2929 = vsub.f32 %v2881, %v2917
    %v2930 = vsub.f32 %v2882, %v2918
    %v2931 = vsub.f32 %v2883, %v2919
    %v2932 = vsub.f32 %v2884, %v2920
    %v2933 = vsub.f32 %v2885, %v2917
    %v2934 = vsub.f32 %v2886, %v2918
    %v2935 = vsub.f32 %v2887, %v2919
    %v2936 = vsub.f32 %v2888, %v2920
    %v2937 = vmul.f32 %v2921, 1.442695
    %v2938 = vpow.pop %v2937
    %v2939 = vmul.f32 %v2922, 1.442695
    %v2940 = vpow.pop %v2939
    %v2941 = vmul.f32 %v2923, 1.442695
    %v2942 = vpow.pop %v2941
    %v2943 = vmul.f32 %v2924, 1.442695
    %v2944 = vpow.pop %v2943
    %v2945 = vmul.f32 %v2925, 1.442695
    %v2946 = vpow.pop %v2945
    %v2947 = vmul.f32 %v2926, 1.442695
    %v2948 = vpow.pop %v2947
    %v2949 = vmul.f32 %v2927, 1.442695
    %v2950 = vpow.pop %v2949
    %v2951 = vmul.f32 %v2928, 1.442695
    %v2952 = vpow.pop %v2951
    %v2953 = vmul.f32 %v2929, 1.442695
    %v2954 = vpow.pop %v2953
    %v2955 = vmul.f32 %v2930, 1.442695
    %v2956 = vpow.pop %v2955
    %v2957 = vmul.f32 %v2931, 1.442695
    %v2958 = vpow.pop %v2957
    %v2959 = vmul.f32 %v2932, 1.442695
    %v2960 = vpow.pop %v2959
    %v2961 = vmul.f32 %v2933, 1.442695
    %v2962 = vpow.pop %v2961
    %v2963 = vmul.f32 %v2934, 1.442695
    %v2964 = vpow.pop %v2963
    %v2965 = vmul.f32 %v2935, 1.442695
    %v2966 = vpow.pop %v2965
    %v2967 = vmul.f32 %v2936, 1.442695
    %v2968 = vpow.pop %v2967
    %v2985 = vrot.slane %v2946, 7
    %v2986 = vsel %vm2174, %v2985, %v2938
    %v2987 = vrot.slane %v2954, 6
    %v2988 = vsel %vm2177, %v2987, %v2986
    %v2989 = vrot.slane %v2962, 5
    %v2990 = vsel %vm2180, %v2989, %v2988
    %v2991 = vrot.slane %v2948, 7
    %v2992 = vsel %vm2174, %v2991, %v2940
    %v2993 = vrot.slane %v2956, 6
    %v2994 = vsel %vm2177, %v2993, %v2992
    %v2995 = vrot.slane %v2964, 5
    %v2996 = vsel %vm2180, %v2995, %v2994
    %v2997 = vrot.slane %v2950, 7
    %v2998 = vsel %vm2174, %v2997, %v2942
    %v2999 = vrot.slane %v2958, 6
    %v3000 = vsel %vm2177, %v2999, %v2998
    %v3001 = vrot.slane %v2966, 5
    %v3002 = vsel %vm2180, %v3001, %v3000
    %v3003 = vrot.slane %v2952, 7
    %v3004 = vsel %vm2174, %v3003, %v2944
    %v3005 = vrot.slane %v2960, 6
    %v3006 = vsel %vm2177, %v3005, %v3004
    %v3007 = vrot.slane %v2968, 5
    %v3008 = vsel %vm2180, %v3007, %v3006
    %v3013 = vsel %vm2012, %v2990, 0.0
    %v3014 = vrot.slane %v3013, 4
    %v3015 = vadd.f32 %v3013, %v3014
    %v3016 = vrot.slane %v3015, 2
    %v3017 = vadd.f32 %v3015, %v3016
    %v3018 = vrot.slane %v3017, 1
    %v3019 = vadd.f32 %v3017, %v3018
    %v3020 = vsel %vm2012, %v2996, 0.0
    %v3021 = vrot.slane %v3020, 4
    %v3022 = vadd.f32 %v3020, %v3021
    %v3023 = vrot.slane %v3022, 2
    %v3024 = vadd.f32 %v3022, %v3023
    %v3025 = vrot.slane %v3024, 1
    %v3026 = vadd.f32 %v3024, %v3025
    %v3027 = vsel %vm2012, %v3002, 0.0
    %v3028 = vrot.slane %v3027, 4
    %v3029 = vadd.f32 %v3027, %v3028
    %v3030 = vrot.slane %v3029, 2
    %v3031 = vadd.f32 %v3029, %v3030
    %v3032 = vrot.slane %v3031, 1
    %v3033 = vadd.f32 %v3031, %v3032
    %v3034 = vsel %vm2012, %v3008, 0.0
    %v3035 = vrot.slane %v3034, 4
    %v3036 = vadd.f32 %v3034, %v3035
    %v3037 = vrot.slane %v3036, 2
    %v3038 = vadd.f32 %v3036, %v3037
    %v3039 = vrot.slane %v3038, 1
    %v3040 = vadd.f32 %v3038, %v3039
    %v3041 = vrcp.pop %v3019
    %v3042 = vmul.f32 %v3019, %v3041
    %v3043 = vsub.f32 1.0, %v3042
    %v3044 = vmul.f32 %v3041, %v3043
    %v3045 = vadd.f32 %v3041, %v3044
    %vm3046 = vweird.f32 %v3019
    %vm3047 = vweird.f32 %v3041
    %vm3048 = vmor %vm3046, %vm3047
    %v3049 = vsel %vm3048, %v3041, %v3045
    %v3050 = vand.u32 2147483647, %v3019
    %vm3051 = vcmp.eq.f32.partialorder %v3050, 8.507059e+37
    %v3052 = vand.u32 %v3019, 2147483648
    %v3053 = vor.u32 1.1754944e-38, %v3052
    %v3054 = vsel %vm3051, %v3053, %v3049
    %v3055 = vmul.f32 1.0, %v3054
    %v3056 = vrcp.pop %v3026
    %v3057 = vmul.f32 %v3026, %v3056
    %v3058 = vsub.f32 1.0, %v3057
    %v3059 = vmul.f32 %v3056, %v3058
    %v3060 = vadd.f32 %v3056, %v3059
    %vm3061 = vweird.f32 %v3026
    %vm3062 = vweird.f32 %v3056
    %vm3063 = vmor %vm3061, %vm3062
    %v3064 = vsel %vm3063, %v3056, %v3060
    %v3065 = vand.u32 2147483647, %v3026
    %vm3066 = vcmp.eq.f32.partialorder %v3065, 8.507059e+37
    %v3067 = vand.u32 %v3026, 2147483648
    %v3068 = vor.u32 1.1754944e-38, %v3067
    %v3069 = vsel %vm3066, %v3068, %v3064
    %v3070 = vmul.f32 1.0, %v3069
    %v3071 = vrcp.pop %v3033
    %v3072 = vmul.f32 %v3033, %v3071
    %v3073 = vsub.f32 1.0, %v3072
    %v3074 = vmul.f32 %v3071, %v3073
    %v3075 = vadd.f32 %v3071, %v3074
    %vm3076 = vweird.f32 %v3033
    %vm3077 = vweird.f32 %v3071
    %vm3078 = vmor %vm3076, %vm3077
    %v3079 = vsel %vm3078, %v3071, %v3075
    %v3080 = vand.u32 2147483647, %v3033
    %vm3081 = vcmp.eq.f32.partialorder %v3080, 8.507059e+37
    %v3082 = vand.u32 %v3033, 2147483648
    %v3083 = vor.u32 1.1754944e-38, %v3082
    %v3084 = vsel %vm3081, %v3083, %v3079
    %v3085 = vmul.f32 1.0, %v3084
    %v3086 = vrcp.pop %v3040
    %v3087 = vmul.f32 %v3040, %v3086
    %v3088 = vsub.f32 1.0, %v3087
    %v3089 = vmul.f32 %v3086, %v3088
    %v3090 = vadd.f32 %v3086, %v3089
    %vm3091 = vweird.f32 %v3040
    %vm3092 = vweird.f32 %v3086
    %vm3093 = vmor %vm3091, %vm3092
    %v3094 = vsel %vm3093, %v3086, %v3090
    %v3095 = vand.u32 2147483647, %v3040
    %vm3096 = vcmp.eq.f32.partialorder %v3095, 8.507059e+37
    %v3097 = vand.u32 %v3040, 2147483648
    %v3098 = vor.u32 1.1754944e-38, %v3097
    %v3099 = vsel %vm3096, %v3098, %v3094
    %v3100 = vmul.f32 1.0, %v3099
    %v3101 = vperm.slane %v3055, 0
    %v3102 = vperm.slane %v3070, 0
    %v3103 = vperm.slane %v3085, 0
    %v3104 = vperm.slane %v3100, 0
    %v3105 = vmul.f32 %v2938, %v3101
    %v3106 = vmul.f32 %v2940, %v3102
    %v3107 = vmul.f32 %v2942, %v3103
    %v3108 = vmul.f32 %v2944, %v3104
    %v3109 = vmul.f32 %v2946, %v3101
    %v3110 = vmul.f32 %v2948, %v3102
    %v3111 = vmul.f32 %v2950, %v3103
    %v3112 = vmul.f32 %v2952, %v3104
    %v3113 = vmul.f32 %v2954, %v3101
    %v3114 = vmul.f32 %v2956, %v3102
    %v3115 = vmul.f32 %v2958, %v3103
    %v3116 = vmul.f32 %v2960, %v3104
    %v3117 = vmul.f32 %v2962, %v3101
    %v3118 = vmul.f32 %v2964, %v3102
    %v3119 = vmul.f32 %v2966, %v3103
    %v3120 = vmul.f32 %v2968, %v3104
    %3123 = vst [vmem:[#allocation1] ss:$2 sm:$0xff] %v2830
    %s3124 = scalar_lea.vmem [#allocation1], 16
    %3125 = vst [vmem:[%s3124] ss:$2 sm:$0xff] %v2831
    %v3126 = vld.sshfl [vmem:[#allocation1] sm:$0xff pattern:$0x75316420]
    %v3127 = vld.sshfl [vmem:[#allocation1 + $0x8] sm:$0xff pattern:$0x75316420]
    %v3128 = vld.sshfl [vmem:[#allocation1 + $0x10] sm:$0xff pattern:$0x75316420]
    %v3129 = vld.sshfl [vmem:[#allocation1 + $0x18] sm:$0xff pattern:$0x75316420]
    %v3130 = vrot.slane %v3126, 1
    %v3131 = vrot.slane %v3127, 1
    %v3132 = vrot.slane %v3128, 1
    %v3133 = vrot.slane %v3129, 1
    %v3134 = vrot.slane %v3126, 2
    %v3135 = vrot.slane %v3127, 2
    %v3136 = vrot.slane %v3128, 2
    %v3137 = vrot.slane %v3129, 2
    %v3138 = vrot.slane %v3126, 3
    %v3139 = vrot.slane %v3127, 3
    %v3140 = vrot.slane %v3128, 3
    %v3141 = vrot.slane %v3129, 3
    %v3158 = vmul.f32 %v3105, %v3126
    %v3159 = vmul.f32 %v3106, %v3127
    %v3160 = vmul.f32 %v3107, %v3128
    %v3161 = vmul.f32 %v3108, %v3129
    %v3162 = vmul.f32 %v3109, %v3130
    %v3163 = vmul.f32 %v3110, %v3131
    %v3164 = vmul.f32 %v3111, %v3132
    %v3165 = vmul.f32 %v3112, %v3133
    %v3166 = vmul.f32 %v3113, %v3134
    %v3167 = vmul.f32 %v3114, %v3135
    %v3168 = vmul.f32 %v3115, %v3136
    %v3169 = vmul.f32 %v3116, %v3137
    %v3170 = vmul.f32 %v3117, %v3138
    %v3171 = vmul.f32 %v3118, %v3139
    %v3172 = vmul.f32 %v3119, %v3140
    %v3173 = vmul.f32 %v3120, %v3141
    %3174 = vst [vmem:[#allocation1] ss:$2 sm:$0xff] %v50
    %s3175 = scalar_lea.vmem [#allocation1], 16
    %3176 = vst [vmem:[%s3175] ss:$2 sm:$0xff] %v51
    %v3177 = vld.sshfl [vmem:[#allocation1] sm:$0xff pattern:$0x75316420]
    %v3178 = vld.sshfl [vmem:[#allocation1 + $0x8] sm:$0xff pattern:$0x75316420]
    %v3179 = vld.sshfl [vmem:[#allocation1 + $0x10] sm:$0xff pattern:$0x75316420]
    %v3180 = vld.sshfl [vmem:[#allocation1 + $0x18] sm:$0xff pattern:$0x75316420]
    %v3181 = vrot.slane %v3177, 1
    %v3182 = vrot.slane %v3178, 1
    %v3183 = vrot.slane %v3179, 1
    %v3184 = vrot.slane %v3180, 1
    %v3185 = vrot.slane %v3177, 2
    %v3186 = vrot.slane %v3178, 2
    %v3187 = vrot.slane %v3179, 2
    %v3188 = vrot.slane %v3180, 2
    %v3189 = vrot.slane %v3177, 3
    %v3190 = vrot.slane %v3178, 3
    %v3191 = vrot.slane %v3179, 3
    %v3192 = vrot.slane %v3180, 3
    %v3209 = vmul.f32 %v3158, %v3177
    %v3210 = vmul.f32 %v3159, %v3178
    %v3211 = vmul.f32 %v3160, %v3179
    %v3212 = vmul.f32 %v3161, %v3180
    %v3213 = vmul.f32 %v3162, %v3181
    %v3214 = vmul.f32 %v3163, %v3182
    %v3215 = vmul.f32 %v3164, %v3183
    %v3216 = vmul.f32 %v3165, %v3184
    %v3217 = vmul.f32 %v3166, %v3185
    %v3218 = vmul.f32 %v3167, %v3186
    %v3219 = vmul.f32 %v3168, %v3187
    %v3220 = vmul.f32 %v3169, %v3188
    %v3221 = vmul.f32 %v3170, %v3189
    %v3222 = vmul.f32 %v3171, %v3190
    %v3223 = vmul.f32 %v3172, %v3191
    %v3224 = vmul.f32 %v3173, %v3192
    %v3241 = vrot.slane %v3213, 7
    %v3242 = vsel %vm2174, %v3241, %v3209
    %v3243 = vrot.slane %v3217, 6
    %v3244 = vsel %vm2177, %v3243, %v3242
    %v3245 = vrot.slane %v3221, 5
    %v3246 = vsel %vm2180, %v3245, %v3244
    %v3247 = vrot.slane %v3214, 7
    %v3248 = vsel %vm2174, %v3247, %v3210
    %v3249 = vrot.slane %v3218, 6
    %v3250 = vsel %vm2177, %v3249, %v3248
    %v3251 = vrot.slane %v3222, 5
    %v3252 = vsel %vm2180, %v3251, %v3250
    %v3253 = vrot.slane %v3215, 7
    %v3254 = vsel %vm2174, %v3253, %v3211
    %v3255 = vrot.slane %v3219, 6
    %v3256 = vsel %vm2177, %v3255, %v3254
    %v3257 = vrot.slane %v3223, 5
    %v3258 = vsel %vm2180, %v3257, %v3256
    %v3259 = vrot.slane %v3216, 7
    %v3260 = vsel %vm2174, %v3259, %v3212
    %v3261 = vrot.slane %v3220, 6
    %v3262 = vsel %vm2177, %v3261, %v3260
    %v3263 = vrot.slane %v3224, 5
    %v3264 = vsel %vm2180, %v3263, %v3262
    %v3269 = vsel %vm2012, %v3246, 0.0
    %v3270 = vrot.slane %v3269, 4
    %v3271 = vadd.f32 %v3269, %v3270
    %v3272 = vrot.slane %v3271, 2
    %v3273 = vadd.f32 %v3271, %v3272
    %v3274 = vrot.slane %v3273, 1
    %v3275 = vadd.f32 %v3273, %v3274
    %v3276 = vsel %vm2012, %v3252, 0.0
    %v3277 = vrot.slane %v3276, 4
    %v3278 = vadd.f32 %v3276, %v3277
    %v3279 = vrot.slane %v3278, 2
    %v3280 = vadd.f32 %v3278, %v3279
    %v3281 = vrot.slane %v3280, 1
    %v3282 = vadd.f32 %v3280, %v3281
    %v3283 = vsel %vm2012, %v3258, 0.0
    %v3284 = vrot.slane %v3283, 4
    %v3285 = vadd.f32 %v3283, %v3284
    %v3286 = vrot.slane %v3285, 2
    %v3287 = vadd.f32 %v3285, %v3286
    %v3288 = vrot.slane %v3287, 1
    %v3289 = vadd.f32 %v3287, %v3288
    %v3290 = vsel %vm2012, %v3264, 0.0
    %v3291 = vrot.slane %v3290, 4
    %v3292 = vadd.f32 %v3290, %v3291
    %v3293 = vrot.slane %v3292, 2
    %v3294 = vadd.f32 %v3292, %v3293
    %v3295 = vrot.slane %v3294, 1
    %v3296 = vadd.f32 %v3294, %v3295
    %v3301 = vrot.slane %v3282, 4
    %v3302 = vrot.slane %v3296, 4
    %v3303 = vsel %vm2012, %v3275, %v3301
    %v3304 = vsel %vm2012, %v3289, %v3302
    %v3305 = vrot.slane %v3303, 7
    %v3306 = vrot.slane %v3304, 7
    %v3309 = vadd.f32 %v50, %v3305
    %v3310 = vadd.f32 %v51, %v3306
    %v3313 = vperm.slane %v3309, 1
    %v3314 = vperm.slane %v3309, 5
    %v3315 = vperm.slane %v3310, 1
    %v3316 = vperm.slane %v3310, 5
    %v3321 = vperm.slane %v3313, 1
    %v3322 = vperm.slane %v3314, 1
    %v3323 = vperm.slane %v3315, 1
    %v3324 = vperm.slane %v3316, 1
    %v3325 = vmul.f32 %v3321, %v1713
    %v3326 = vmul.f32 %v3322, %v1714
    %v3327 = vmul.f32 %v3323, %v1715
    %v3328 = vmul.f32 %v3324, %v1716
    %v3329 = vmul.f32 %v3321, %v1717
    %v3330 = vmul.f32 %v3322, %v1718
    %v3331 = vmul.f32 %v3323, %v1719
    %v3332 = vmul.f32 %v3324, %v1720
    %v3333 = vmul.f32 %v3321, %v1721
    %v3334 = vmul.f32 %v3322, %v1722
    %v3335 = vmul.f32 %v3323, %v1723
    %v3336 = vmul.f32 %v3324, %v1724
    %v3337 = vmul.f32 %v3321, %v1725
    %v3338 = vmul.f32 %v3322, %v1726
    %v3339 = vmul.f32 %v3323, %v1727
    %v3340 = vmul.f32 %v3324, %v1728
    %v3341 = vadd.f32 %v3325, %v1123
    %v3342 = vadd.f32 %v3326, %v1212
    %v3343 = vadd.f32 %v3327, %v1301
    %v3344 = vadd.f32 %v3328, %v1390
    %v3345 = vadd.f32 %v3329, %v1126
    %v3346 = vadd.f32 %v3330, %v1215
    %v3347 = vadd.f32 %v3331, %v1304
    %v3348 = vadd.f32 %v3332, %v1393
    %v3349 = vadd.f32 %v3333, %v1129
    %v3350 = vadd.f32 %v3334, %v1218
    %v3351 = vadd.f32 %v3335, %v1307
    %v3352 = vadd.f32 %v3336, %v1396
    %v3353 = vadd.f32 %v3337, %v1132
    %v3354 = vadd.f32 %v3338, %v1221
    %v3355 = vadd.f32 %v3339, %v1310
    %v3356 = vadd.f32 %v3340, %v1399
    %vm3357 = vcmp.gt.f32.partialorder %v3341, 0.0
    %vm3358 = vcmp.gt.f32.partialorder %v3342, 0.0
    %vm3359 = vcmp.gt.f32.partialorder %v3343, 0.0
    %vm3360 = vcmp.gt.f32.partialorder %v3344, 0.0
    %vm3361 = vcmp.gt.f32.partialorder %v3345, 0.0
    %vm3362 = vcmp.gt.f32.partialorder %v3346, 0.0
    %vm3363 = vcmp.gt.f32.partialorder %v3347, 0.0
    %vm3364 = vcmp.gt.f32.partialorder %v3348, 0.0
    %vm3365 = vcmp.gt.f32.partialorder %v3349, 0.0
    %vm3366 = vcmp.gt.f32.partialorder %v3350, 0.0
    %vm3367 = vcmp.gt.f32.partialorder %v3351, 0.0
    %vm3368 = vcmp.gt.f32.partialorder %v3352, 0.0
    %vm3369 = vcmp.gt.f32.partialorder %v3353, 0.0
    %vm3370 = vcmp.gt.f32.partialorder %v3354, 0.0
    %vm3371 = vcmp.gt.f32.partialorder %v3355, 0.0
    %vm3372 = vcmp.gt.f32.partialorder %v3356, 0.0
    %v3373 = vmul.f32 %v3341, 0.01
    %v3374 = vmul.f32 %v3342, 0.01
    %v3375 = vmul.f32 %v3343, 0.01
    %v3376 = vmul.f32 %v3344, 0.01
    %v3377 = vmul.f32 %v3345, 0.01
    %v3378 = vmul.f32 %v3346, 0.01
    %v3379 = vmul.f32 %v3347, 0.01
    %v3380 = vmul.f32 %v3348, 0.01
    %v3381 = vmul.f32 %v3349, 0.01
    %v3382 = vmul.f32 %v3350, 0.01
    %v3383 = vmul.f32 %v3351, 0.01
    %v3384 = vmul.f32 %v3352, 0.01
    %v3385 = vmul.f32 %v3353, 0.01
    %v3386 = vmul.f32 %v3354, 0.01
    %v3387 = vmul.f32 %v3355, 0.01
    %v3388 = vmul.f32 %v3356, 0.01
    %v3389 = vsel %vm3357, %v3341, %v3373
    %v3390 = vsel %vm3358, %v3342, %v3374
    %v3391 = vsel %vm3359, %v3343, %v3375
    %v3392 = vsel %vm3360, %v3344, %v3376
    %v3393 = vsel %vm3361, %v3345, %v3377
    %v3394 = vsel %vm3362, %v3346, %v3378
    %v3395 = vsel %vm3363, %v3347, %v3379
    %v3396 = vsel %vm3364, %v3348, %v3380
    %v3397 = vsel %vm3365, %v3349, %v3381
    %v3398 = vsel %vm3366, %v3350, %v3382
    %v3399 = vsel %vm3367, %v3351, %v3383
    %v3400 = vsel %vm3368, %v3352, %v3384
    %v3401 = vsel %vm3369, %v3353, %v3385
    %v3402 = vsel %vm3370, %v3354, %v3386
    %v3403 = vsel %vm3371, %v3355, %v3387
    %v3404 = vsel %vm3372, %v3356, %v3388
    %v3405 = vmul.f32 %v3389, %v1729
    %v3406 = vmul.f32 %v3390, %v1730
    %v3407 = vmul.f32 %v3391, %v1731
    %v3408 = vmul.f32 %v3392, %v1732
    %v3409 = vmul.f32 %v3393, %v1733
    %v3410 = vmul.f32 %v3394, %v1734
    %v3411 = vmul.f32 %v3395, %v1735
    %v3412 = vmul.f32 %v3396, %v1736
    %v3413 = vmul.f32 %v3397, %v1737
    %v3414 = vmul.f32 %v3398, %v1738
    %v3415 = vmul.f32 %v3399, %v1739
    %v3416 = vmul.f32 %v3400, %v1740
    %v3417 = vmul.f32 %v3401, %v1741
    %v3418 = vmul.f32 %v3402, %v1742
    %v3419 = vmul.f32 %v3403, %v1743
    %v3420 = vmul.f32 %v3404, %v1744
    %v3421 = vadd.f32 %v3405, %v3409
    %v3422 = vadd.f32 %v3421, %v3413
    %v3423 = vadd.f32 %v3422, %v3417
    %v3424 = vrot.slane %v3423, 4
    %v3425 = vadd.f32 %v3423, %v3424
    %v3426 = vrot.slane %v3425, 2
    %v3427 = vadd.f32 %v3425, %v3426
    %v3428 = vrot.slane %v3427, 1
    %v3429 = vadd.f32 %v3427, %v3428
    %v3430 = vadd.f32 %v3406, %v3410
    %v3431 = vadd.f32 %v3430, %v3414
    %v3432 = vadd.f32 %v3431, %v3418
    %v3433 = vrot.slane %v3432, 4
    %v3434 = vadd.f32 %v3432, %v3433
    %v3435 = vrot.slane %v3434, 2
    %v3436 = vadd.f32 %v3434, %v3435
    %v3437 = vrot.slane %v3436, 1
    %v3438 = vadd.f32 %v3436, %v3437
    %v3439 = vadd.f32 %v3407, %v3411
    %v3440 = vadd.f32 %v3439, %v3415
    %v3441 = vadd.f32 %v3440, %v3419
    %v3442 = vrot.slane %v3441, 4
    %v3443 = vadd.f32 %v3441, %v3442
    %v3444 = vrot.slane %v3443, 2
    %v3445 = vadd.f32 %v3443, %v3444
    %v3446 = vrot.slane %v3445, 1
    %v3447 = vadd.f32 %v3445, %v3446
    %v3448 = vadd.f32 %v3408, %v3412
    %v3449 = vadd.f32 %v3448, %v3416
    %v3450 = vadd.f32 %v3449, %v3420
    %v3451 = vrot.slane %v3450, 4
    %v3452 = vadd.f32 %v3450, %v3451
    %v3453 = vrot.slane %v3452, 2
    %v3454 = vadd.f32 %v3452, %v3453
    %v3455 = vrot.slane %v3454, 1
    %v3456 = vadd.f32 %v3454, %v3455
    %v3457 = vmul.f32 %v598, %v586
    %v3458 = vmul.f32 %v663, %v651
    %v3459 = vmul.f32 %v728, %v716
    %v3460 = vmul.f32 %v793, %v781
    %v3461 = vmul.f32 %v601, %v589
    %v3462 = vmul.f32 %v666, %v654
    %v3463 = vmul.f32 %v731, %v719
    %v3464 = vmul.f32 %v796, %v784
    %v3465 = vmul.f32 %v604, %v586
    %v3466 = vmul.f32 %v669, %v651
    %v3467 = vmul.f32 %v734, %v716
    %v3468 = vmul.f32 %v799, %v781
    %v3469 = vmul.f32 %v607, %v589
    %v3470 = vmul.f32 %v672, %v654
    %v3471 = vmul.f32 %v737, %v719
    %v3472 = vmul.f32 %v802, %v784
    %v3473 = vmul.f32 %v610, %v586
    %v3474 = vmul.f32 %v675, %v651
    %v3475 = vmul.f32 %v740, %v716
    %v3476 = vmul.f32 %v805, %v781
    %v3477 = vmul.f32 %v613, %v589
    %v3478 = vmul.f32 %v678, %v654
    %v3479 = vmul.f32 %v743, %v719
    %v3480 = vmul.f32 %v808, %v784
    %v3481 = vmul.f32 %v616, %v586
    %v3482 = vmul.f32 %v681, %v651
    %v3483 = vmul.f32 %v746, %v716
    %v3484 = vmul.f32 %v811, %v781
    %v3485 = vmul.f32 %v619, %v589
    %v3486 = vmul.f32 %v684, %v654
    %v3487 = vmul.f32 %v749, %v719
    %v3488 = vmul.f32 %v814, %v784
    %v3489 = vadd.f32 %v3457, %v3461
    %v3490 = vrot.slane %v3489, 4
    %v3491 = vadd.f32 %v3489, %v3490
    %v3492 = vrot.slane %v3491, 2
    %v3493 = vadd.f32 %v3491, %v3492
    %v3494 = vrot.slane %v3493, 1
    %v3495 = vadd.f32 %v3493, %v3494
    %v3496 = vadd.f32 %v3458, %v3462
    %v3497 = vrot.slane %v3496, 4
    %v3498 = vadd.f32 %v3496, %v3497
    %v3499 = vrot.slane %v3498, 2
    %v3500 = vadd.f32 %v3498, %v3499
    %v3501 = vrot.slane %v3500, 1
    %v3502 = vadd.f32 %v3500, %v3501
    %v3503 = vadd.f32 %v3459, %v3463
    %v3504 = vrot.slane %v3503, 4
    %v3505 = vadd.f32 %v3503, %v3504
    %v3506 = vrot.slane %v3505, 2
    %v3507 = vadd.f32 %v3505, %v3506
    %v3508 = vrot.slane %v3507, 1
    %v3509 = vadd.f32 %v3507, %v3508
    %v3510 = vadd.f32 %v3460, %v3464
    %v3511 = vrot.slane %v3510, 4
    %v3512 = vadd.f32 %v3510, %v3511
    %v3513 = vrot.slane %v3512, 2
    %v3514 = vadd.f32 %v3512, %v3513
    %v3515 = vrot.slane %v3514, 1
    %v3516 = vadd.f32 %v3514, %v3515
    %v3517 = vadd.f32 %v3465, %v3469
    %v3518 = vrot.slane %v3517, 4
    %v3519 = vadd.f32 %v3517, %v3518
    %v3520 = vrot.slane %v3519, 2
    %v3521 = vadd.f32 %v3519, %v3520
    %v3522 = vrot.slane %v3521, 1
    %v3523 = vadd.f32 %v3521, %v3522
    %v3524 = vadd.f32 %v3466, %v3470
    %v3525 = vrot.slane %v3524, 4
    %v3526 = vadd.f32 %v3524, %v3525
    %v3527 = vrot.slane %v3526, 2
    %v3528 = vadd.f32 %v3526, %v3527
    %v3529 = vrot.slane %v3528, 1
    %v3530 = vadd.f32 %v3528, %v3529
    %v3531 = vadd.f32 %v3467, %v3471
    %v3532 = vrot.slane %v3531, 4
    %v3533 = vadd.f32 %v3531, %v3532
    %v3534 = vrot.slane %v3533, 2
    %v3535 = vadd.f32 %v3533, %v3534
    %v3536 = vrot.slane %v3535, 1
    %v3537 = vadd.f32 %v3535, %v3536
    %v3538 = vadd.f32 %v3468, %v3472
    %v3539 = vrot.slane %v3538, 4
    %v3540 = vadd.f32 %v3538, %v3539
    %v3541 = vrot.slane %v3540, 2
    %v3542 = vadd.f32 %v3540, %v3541
    %v3543 = vrot.slane %v3542, 1
    %v3544 = vadd.f32 %v3542, %v3543
    %v3545 = vadd.f32 %v3473, %v3477
    %v3546 = vrot.slane %v3545, 4
    %v3547 = vadd.f32 %v3545, %v3546
    %v3548 = vrot.slane %v3547, 2
    %v3549 = vadd.f32 %v3547, %v3548
    %v3550 = vrot.slane %v3549, 1
    %v3551 = vadd.f32 %v3549, %v3550
    %v3552 = vadd.f32 %v3474, %v3478
    %v3553 = vrot.slane %v3552, 4
    %v3554 = vadd.f32 %v3552, %v3553
    %v3555 = vrot.slane %v3554, 2
    %v3556 = vadd.f32 %v3554, %v3555
    %v3557 = vrot.slane %v3556, 1
    %v3558 = vadd.f32 %v3556, %v3557
    %v3559 = vadd.f32 %v3475, %v3479
    %v3560 = vrot.slane %v3559, 4
    %v3561 = vadd.f32 %v3559, %v3560
    %v3562 = vrot.slane %v3561, 2
    %v3563 = vadd.f32 %v3561, %v3562
    %v3564 = vrot.slane %v3563, 1
    %v3565 = vadd.f32 %v3563, %v3564
    %v3566 = vadd.f32 %v3476, %v3480
    %v3567 = vrot.slane %v3566, 4
    %v3568 = vadd.f32 %v3566, %v3567
    %v3569 = vrot.slane %v3568, 2
    %v3570 = vadd.f32 %v3568, %v3569
    %v3571 = vrot.slane %v3570, 1
    %v3572 = vadd.f32 %v3570, %v3571
    %v3573 = vadd.f32 %v3481, %v3485
    %v3574 = vrot.slane %v3573, 4
    %v3575 = vadd.f32 %v3573, %v3574
    %v3576 = vrot.slane %v3575, 2
    %v3577 = vadd.f32 %v3575, %v3576
    %v3578 = vrot.slane %v3577, 1
    %v3579 = vadd.f32 %v3577, %v3578
    %v3580 = vadd.f32 %v3482, %v3486
    %v3581 = vrot.slane %v3580, 4
    %v3582 = vadd.f32 %v3580, %v3581
    %v3583 = vrot.slane %v3582, 2
    %v3584 = vadd.f32 %v3582, %v3583
    %v3585 = vrot.slane %v3584, 1
    %v3586 = vadd.f32 %v3584, %v3585
    %v3587 = vadd.f32 %v3483, %v3487
    %v3588 = vrot.slane %v3587, 4
    %v3589 = vadd.f32 %v3587, %v3588
    %v3590 = vrot.slane %v3589, 2
    %v3591 = vadd.f32 %v3589, %v3590
    %v3592 = vrot.slane %v3591, 1
    %v3593 = vadd.f32 %v3591, %v3592
    %v3594 = vadd.f32 %v3484, %v3488
    %v3595 = vrot.slane %v3594, 4
    %v3596 = vadd.f32 %v3594, %v3595
    %v3597 = vrot.slane %v3596, 2
    %v3598 = vadd.f32 %v3596, %v3597
    %v3599 = vrot.slane %v3598, 1
    %v3600 = vadd.f32 %v3598, %v3599
    %v3601 = vmul.f32 %v3495, 0.25
    %v3602 = vmul.f32 %v3502, 0.25
    %v3603 = vmul.f32 %v3509, 0.25
    %v3604 = vmul.f32 %v3516, 0.25
    %v3605 = vmul.f32 %v3523, 0.25
    %v3606 = vmul.f32 %v3530, 0.25
    %v3607 = vmul.f32 %v3537, 0.25
    %v3608 = vmul.f32 %v3544, 0.25
    %v3609 = vmul.f32 %v3551, 0.25
    %v3610 = vmul.f32 %v3558, 0.25
    %v3611 = vmul.f32 %v3565, 0.25
    %v3612 = vmul.f32 %v3572, 0.25
    %v3613 = vmul.f32 %v3579, 0.25
    %v3614 = vmul.f32 %v3586, 0.25
    %v3615 = vmul.f32 %v3593, 0.25
    %v3616 = vmul.f32 %v3600, 0.25
    %v3617 = vperm.slane %v68, 2
    %v3618 = vperm.slane %v68, 6
    %v3619 = vperm.slane %v69, 2
    %v3620 = vperm.slane %v69, 6
    %v3625 = vperm.slane %v3617, 2
    %v3626 = vperm.slane %v3618, 2
    %v3627 = vperm.slane %v3619, 2
    %v3628 = vperm.slane %v3620, 2
    %v3633 = vrot.slane %v3626, 4
    %v3634 = vrot.slane %v3628, 4
    %v3635 = vsel %vm2012, %v3625, %v3633
    %v3636 = vsel %vm2012, %v3627, %v3634
    %v3639 = vmul.f32 %v68, %v3635
    %v3640 = vmul.f32 %v69, %v3636
    %v3641 = vsub.f32 1.0, %v3639
    %v3642 = vsub.f32 1.0, %v3640
    %v3643 = vmul.f32 %v3641, -1e+10
    %v3644 = vmul.f32 %v3642, -1e+10
    %3647 = vst [vmem:[#allocation1] ss:$2 sm:$0xff] %v3643
    %s3648 = scalar_lea.vmem [#allocation1], 16
    %3649 = vst [vmem:[%s3648] ss:$2 sm:$0xff] %v3644
    %v3650 = vld.sshfl [vmem:[#allocation1] sm:$0xff pattern:$0x75316420]
    %v3651 = vld.sshfl [vmem:[#allocation1 + $0x8] sm:$0xff pattern:$0x75316420]
    %v3652 = vld.sshfl [vmem:[#allocation1 + $0x10] sm:$0xff pattern:$0x75316420]
    %v3653 = vld.sshfl [vmem:[#allocation1 + $0x18] sm:$0xff pattern:$0x75316420]
    %v3654 = vrot.slane %v3650, 1
    %v3655 = vrot.slane %v3651, 1
    %v3656 = vrot.slane %v3652, 1
    %v3657 = vrot.slane %v3653, 1
    %v3658 = vrot.slane %v3650, 2
    %v3659 = vrot.slane %v3651, 2
    %v3660 = vrot.slane %v3652, 2
    %v3661 = vrot.slane %v3653, 2
    %v3662 = vrot.slane %v3650, 3
    %v3663 = vrot.slane %v3651, 3
    %v3664 = vrot.slane %v3652, 3
    %v3665 = vrot.slane %v3653, 3
    %v3682 = vadd.f32 %v3601, %v3650
    %v3683 = vadd.f32 %v3602, %v3651
    %v3684 = vadd.f32 %v3603, %v3652
    %v3685 = vadd.f32 %v3604, %v3653
    %v3686 = vadd.f32 %v3605, %v3654
    %v3687 = vadd.f32 %v3606, %v3655
    %v3688 = vadd.f32 %v3607, %v3656
    %v3689 = vadd.f32 %v3608, %v3657
    %v3690 = vadd.f32 %v3609, %v3658
    %v3691 = vadd.f32 %v3610, %v3659
    %v3692 = vadd.f32 %v3611, %v3660
    %v3693 = vadd.f32 %v3612, %v3661
    %v3694 = vadd.f32 %v3613, %v3662
    %v3695 = vadd.f32 %v3614, %v3663
    %v3696 = vadd.f32 %v3615, %v3664
    %v3697 = vadd.f32 %v3616, %v3665
    %v3698 = vsel %vm2076, %v3682, -inf
    %v3699 = vsel %vm2076, %v3686, -inf
    %v3700 = vmax.f32 %v3698, %v3699
    %v3701 = vsel %vm2076, %v3690, -inf
    %v3702 = vmax.f32 %v3700, %v3701
    %v3703 = vsel %vm2076, %v3694, -inf
    %v3704 = vmax.f32 %v3702, %v3703
    %v3705 = vsel %vm2076, %v3683, -inf
    %v3706 = vsel %vm2076, %v3687, -inf
    %v3707 = vmax.f32 %v3705, %v3706
    %v3708 = vsel %vm2076, %v3691, -inf
    %v3709 = vmax.f32 %v3707, %v3708
    %v3710 = vsel %vm2076, %v3695, -inf
    %v3711 = vmax.f32 %v3709, %v3710
    %v3712 = vsel %vm2076, %v3684, -inf
    %v3713 = vsel %vm2076, %v3688, -inf
    %v3714 = vmax.f32 %v3712, %v3713
    %v3715 = vsel %vm2076, %v3692, -inf
    %v3716 = vmax.f32 %v3714, %v3715
    %v3717 = vsel %vm2076, %v3696, -inf
    %v3718 = vmax.f32 %v3716, %v3717
    %v3719 = vsel %vm2076, %v3685, -inf
    %v3720 = vsel %vm2076, %v3689, -inf
    %v3721 = vmax.f32 %v3719, %v3720
    %v3722 = vsel %vm2076, %v3693, -inf
    %v3723 = vmax.f32 %v3721, %v3722
    %v3724 = vsel %vm2076, %v3697, -inf
    %v3725 = vmax.f32 %v3723, %v3724
    %v3726 = vperm.slane %v3704, 0
    %v3727 = vperm.slane %v3711, 0
    %v3728 = vperm.slane %v3718, 0
    %v3729 = vperm.slane %v3725, 0
    %v3730 = vsub.f32 %v3682, %v3726
    %v3731 = vsub.f32 %v3683, %v3727
    %v3732 = vsub.f32 %v3684, %v3728
    %v3733 = vsub.f32 %v3685, %v3729
    %v3734 = vsub.f32 %v3686, %v3726
    %v3735 = vsub.f32 %v3687, %v3727
    %v3736 = vsub.f32 %v3688, %v3728
    %v3737 = vsub.f32 %v3689, %v3729
    %v3738 = vsub.f32 %v3690, %v3726
    %v3739 = vsub.f32 %v3691, %v3727
    %v3740 = vsub.f32 %v3692, %v3728
    %v3741 = vsub.f32 %v3693, %v3729
    %v3742 = vsub.f32 %v3694, %v3726
    %v3743 = vsub.f32 %v3695, %v3727
    %v3744 = vsub.f32 %v3696, %v3728
    %v3745 = vsub.f32 %v3697, %v3729
    %v3746 = vmul.f32 %v3730, 1.442695
    %v3747 = vpow.pop %v3746
    %v3748 = vmul.f32 %v3731, 1.442695
    %v3749 = vpow.pop %v3748
    %v3750 = vmul.f32 %v3732, 1.442695
    %v3751 = vpow.pop %v3750
    %v3752 = vmul.f32 %v3733, 1.442695
    %v3753 = vpow.pop %v3752
    %v3754 = vmul.f32 %v3734, 1.442695
    %v3755 = vpow.pop %v3754
    %v3756 = vmul.f32 %v3735, 1.442695
    %v3757 = vpow.pop %v3756
    %v3758 = vmul.f32 %v3736, 1.442695
    %v3759 = vpow.pop %v3758
    %v3760 = vmul.f32 %v3737, 1.442695
    %v3761 = vpow.pop %v3760
    %v3762 = vmul.f32 %v3738, 1.442695
    %v3763 = vpow.pop %v3762
    %v3764 = vmul.f32 %v3739, 1.442695
    %v3765 = vpow.pop %v3764
    %v3766 = vmul.f32 %v3740, 1.442695
    %v3767 = vpow.pop %v3766
    %v3768 = vmul.f32 %v3741, 1.442695
    %v3769 = vpow.pop %v3768
    %v3770 = vmul.f32 %v3742, 1.442695
    %v3771 = vpow.pop %v3770
    %v3772 = vmul.f32 %v3743, 1.442695
    %v3773 = vpow.pop %v3772
    %v3774 = vmul.f32 %v3744, 1.442695
    %v3775 = vpow.pop %v3774
    %v3776 = vmul.f32 %v3745, 1.442695
    %v3777 = vpow.pop %v3776
    %v3794 = vrot.slane %v3755, 7
    %v3795 = vsel %vm2174, %v3794, %v3747
    %v3796 = vrot.slane %v3763, 6
    %v3797 = vsel %vm2177, %v3796, %v3795
    %v3798 = vrot.slane %v3771, 5
    %v3799 = vsel %vm2180, %v3798, %v3797
    %v3800 = vrot.slane %v3757, 7
    %v3801 = vsel %vm2174, %v3800, %v3749
    %v3802 = vrot.slane %v3765, 6
    %v3803 = vsel %vm2177, %v3802, %v3801
    %v3804 = vrot.slane %v3773, 5
    %v3805 = vsel %vm2180, %v3804, %v3803
    %v3806 = vrot.slane %v3759, 7
    %v3807 = vsel %vm2174, %v3806, %v3751
    %v3808 = vrot.slane %v3767, 6
    %v3809 = vsel %vm2177, %v3808, %v3807
    %v3810 = vrot.slane %v3775, 5
    %v3811 = vsel %vm2180, %v3810, %v3809
    %v3812 = vrot.slane %v3761, 7
    %v3813 = vsel %vm2174, %v3812, %v3753
    %v3814 = vrot.slane %v3769, 6
    %v3815 = vsel %vm2177, %v3814, %v3813
    %v3816 = vrot.slane %v3777, 5
    %v3817 = vsel %vm2180, %v3816, %v3815
    %v3822 = vsel %vm2012, %v3799, 0.0
    %v3823 = vrot.slane %v3822, 4
    %v3824 = vadd.f32 %v3822, %v3823
    %v3825 = vrot.slane %v3824, 2
    %v3826 = vadd.f32 %v3824, %v3825
    %v3827 = vrot.slane %v3826, 1
    %v3828 = vadd.f32 %v3826, %v3827
    %v3829 = vsel %vm2012, %v3805, 0.0
    %v3830 = vrot.slane %v3829, 4
    %v3831 = vadd.f32 %v3829, %v3830
    %v3832 = vrot.slane %v3831, 2
    %v3833 = vadd.f32 %v3831, %v3832
    %v3834 = vrot.slane %v3833, 1
    %v3835 = vadd.f32 %v3833, %v3834
    %v3836 = vsel %vm2012, %v3811, 0.0
    %v3837 = vrot.slane %v3836, 4
    %v3838 = vadd.f32 %v3836, %v3837
    %v3839 = vrot.slane %v3838, 2
    %v3840 = vadd.f32 %v3838, %v3839
    %v3841 = vrot.slane %v3840, 1
    %v3842 = vadd.f32 %v3840, %v3841
    %v3843 = vsel %vm2012, %v3817, 0.0
    %v3844 = vrot.slane %v3843, 4
    %v3845 = vadd.f32 %v3843, %v3844
    %v3846 = vrot.slane %v3845, 2
    %v3847 = vadd.f32 %v3845, %v3846
    %v3848 = vrot.slane %v3847, 1
    %v3849 = vadd.f32 %v3847, %v3848
    %v3850 = vrcp.pop %v3828
    %v3851 = vmul.f32 %v3828, %v3850
    %v3852 = vsub.f32 1.0, %v3851
    %v3853 = vmul.f32 %v3850, %v3852
    %v3854 = vadd.f32 %v3850, %v3853
    %vm3855 = vweird.f32 %v3828
    %vm3856 = vweird.f32 %v3850
    %vm3857 = vmor %vm3855, %vm3856
    %v3858 = vsel %vm3857, %v3850, %v3854
    %v3859 = vand.u32 2147483647, %v3828
    %vm3860 = vcmp.eq.f32.partialorder %v3859, 8.507059e+37
    %v3861 = vand.u32 %v3828, 2147483648
    %v3862 = vor.u32 1.1754944e-38, %v3861
    %v3863 = vsel %vm3860, %v3862, %v3858
    %v3864 = vmul.f32 1.0, %v3863
    %v3865 = vrcp.pop %v3835
    %v3866 = vmul.f32 %v3835, %v3865
    %v3867 = vsub.f32 1.0, %v3866
    %v3868 = vmul.f32 %v3865, %v3867
    %v3869 = vadd.f32 %v3865, %v3868
    %vm3870 = vweird.f32 %v3835
    %vm3871 = vweird.f32 %v3865
    %vm3872 = vmor %vm3870, %vm3871
    %v3873 = vsel %vm3872, %v3865, %v3869
    %v3874 = vand.u32 2147483647, %v3835
    %vm3875 = vcmp.eq.f32.partialorder %v3874, 8.507059e+37
    %v3876 = vand.u32 %v3835, 2147483648
    %v3877 = vor.u32 1.1754944e-38, %v3876
    %v3878 = vsel %vm3875, %v3877, %v3873
    %v3879 = vmul.f32 1.0, %v3878
    %v3880 = vrcp.pop %v3842
    %v3881 = vmul.f32 %v3842, %v3880
    %v3882 = vsub.f32 1.0, %v3881
    %v3883 = vmul.f32 %v3880, %v3882
    %v3884 = vadd.f32 %v3880, %v3883
    %vm3885 = vweird.f32 %v3842
    %vm3886 = vweird.f32 %v3880
    %vm3887 = vmor %vm3885, %vm3886
    %v3888 = vsel %vm3887, %v3880, %v3884
    %v3889 = vand.u32 2147483647, %v3842
    %vm3890 = vcmp.eq.f32.partialorder %v3889, 8.507059e+37
    %v3891 = vand.u32 %v3842, 2147483648
    %v3892 = vor.u32 1.1754944e-38, %v3891
    %v3893 = vsel %vm3890, %v3892, %v3888
    %v3894 = vmul.f32 1.0, %v3893
    %v3895 = vrcp.pop %v3849
    %v3896 = vmul.f32 %v3849, %v3895
    %v3897 = vsub.f32 1.0, %v3896
    %v3898 = vmul.f32 %v3895, %v3897
    %v3899 = vadd.f32 %v3895, %v3898
    %vm3900 = vweird.f32 %v3849
    %vm3901 = vweird.f32 %v3895
    %vm3902 = vmor %vm3900, %vm3901
    %v3903 = vsel %vm3902, %v3895, %v3899
    %v3904 = vand.u32 2147483647, %v3849
    %vm3905 = vcmp.eq.f32.partialorder %v3904, 8.507059e+37
    %v3906 = vand.u32 %v3849, 2147483648
    %v3907 = vor.u32 1.1754944e-38, %v3906
    %v3908 = vsel %vm3905, %v3907, %v3903
    %v3909 = vmul.f32 1.0, %v3908
    %v3910 = vperm.slane %v3864, 0
    %v3911 = vperm.slane %v3879, 0
    %v3912 = vperm.slane %v3894, 0
    %v3913 = vperm.slane %v3909, 0
    %v3914 = vmul.f32 %v3747, %v3910
    %v3915 = vmul.f32 %v3749, %v3911
    %v3916 = vmul.f32 %v3751, %v3912
    %v3917 = vmul.f32 %v3753, %v3913
    %v3918 = vmul.f32 %v3755, %v3910
    %v3919 = vmul.f32 %v3757, %v3911
    %v3920 = vmul.f32 %v3759, %v3912
    %v3921 = vmul.f32 %v3761, %v3913
    %v3922 = vmul.f32 %v3763, %v3910
    %v3923 = vmul.f32 %v3765, %v3911
    %v3924 = vmul.f32 %v3767, %v3912
    %v3925 = vmul.f32 %v3769, %v3913
    %v3926 = vmul.f32 %v3771, %v3910
    %v3927 = vmul.f32 %v3773, %v3911
    %v3928 = vmul.f32 %v3775, %v3912
    %v3929 = vmul.f32 %v3777, %v3913
    %3932 = vst [vmem:[#allocation1] ss:$2 sm:$0xff] %v3639
    %s3933 = scalar_lea.vmem [#allocation1], 16
    %3934 = vst [vmem:[%s3933] ss:$2 sm:$0xff] %v3640
    %v3935 = vld.sshfl [vmem:[#allocation1] sm:$0xff pattern:$0x75316420]
    %v3936 = vld.sshfl [vmem:[#allocation1 + $0x8] sm:$0xff pattern:$0x75316420]
    %v3937 = vld.sshfl [vmem:[#allocation1 + $0x10] sm:$0xff pattern:$0x75316420]
    %v3938 = vld.sshfl [vmem:[#allocation1 + $0x18] sm:$0xff pattern:$0x75316420]
    %v3939 = vrot.slane %v3935, 1
    %v3940 = vrot.slane %v3936, 1
    %v3941 = vrot.slane %v3937, 1
    %v3942 = vrot.slane %v3938, 1
    %v3943 = vrot.slane %v3935, 2
    %v3944 = vrot.slane %v3936, 2
    %v3945 = vrot.slane %v3937, 2
    %v3946 = vrot.slane %v3938, 2
    %v3947 = vrot.slane %v3935, 3
    %v3948 = vrot.slane %v3936, 3
    %v3949 = vrot.slane %v3937, 3
    %v3950 = vrot.slane %v3938, 3
    %v3967 = vmul.f32 %v3914, %v3935
    %v3968 = vmul.f32 %v3915, %v3936
    %v3969 = vmul.f32 %v3916, %v3937
    %v3970 = vmul.f32 %v3917, %v3938
    %v3971 = vmul.f32 %v3918, %v3939
    %v3972 = vmul.f32 %v3919, %v3940
    %v3973 = vmul.f32 %v3920, %v3941
    %v3974 = vmul.f32 %v3921, %v3942
    %v3975 = vmul.f32 %v3922, %v3943
    %v3976 = vmul.f32 %v3923, %v3944
    %v3977 = vmul.f32 %v3924, %v3945
    %v3978 = vmul.f32 %v3925, %v3946
    %v3979 = vmul.f32 %v3926, %v3947
    %v3980 = vmul.f32 %v3927, %v3948
    %v3981 = vmul.f32 %v3928, %v3949
    %v3982 = vmul.f32 %v3929, %v3950
    %3983 = vst [vmem:[#allocation1] ss:$2 sm:$0xff] %v50
    %s3984 = scalar_lea.vmem [#allocation1], 16
    %3985 = vst [vmem:[%s3984] ss:$2 sm:$0xff] %v51
    %v3986 = vld.sshfl [vmem:[#allocation1] sm:$0xff pattern:$0x75316420]
    %v3987 = vld.sshfl [vmem:[#allocation1 + $0x8] sm:$0xff pattern:$0x75316420]
    %v3988 = vld.sshfl [vmem:[#allocation1 + $0x10] sm:$0xff pattern:$0x75316420]
    %v3989 = vld.sshfl [vmem:[#allocation1 + $0x18] sm:$0xff pattern:$0x75316420]
    %v3990 = vrot.slane %v3986, 1
    %v3991 = vrot.slane %v3987, 1
    %v3992 = vrot.slane %v3988, 1
    %v3993 = vrot.slane %v3989, 1
    %v3994 = vrot.slane %v3986, 2
    %v3995 = vrot.slane %v3987, 2
    %v3996 = vrot.slane %v3988, 2
    %v3997 = vrot.slane %v3989, 2
    %v3998 = vrot.slane %v3986, 3
    %v3999 = vrot.slane %v3987, 3
    %v4000 = vrot.slane %v3988, 3
    %v4001 = vrot.slane %v3989, 3
    %v4018 = vmul.f32 %v3967, %v3986
    %v4019 = vmul.f32 %v3968, %v3987
    %v4020 = vmul.f32 %v3969, %v3988
    %v4021 = vmul.f32 %v3970, %v3989
    %v4022 = vmul.f32 %v3971, %v3990
    %v4023 = vmul.f32 %v3972, %v3991
    %v4024 = vmul.f32 %v3973, %v3992
    %v4025 = vmul.f32 %v3974, %v3993
    %v4026 = vmul.f32 %v3975, %v3994
    %v4027 = vmul.f32 %v3976, %v3995
    %v4028 = vmul.f32 %v3977, %v3996
    %v4029 = vmul.f32 %v3978, %v3997
    %v4030 = vmul.f32 %v3979, %v3998
    %v4031 = vmul.f32 %v3980, %v3999
    %v4032 = vmul.f32 %v3981, %v4000
    %v4033 = vmul.f32 %v3982, %v4001
    %v4050 = vrot.slane %v4022, 7
    %v4051 = vsel %vm2174, %v4050, %v4018
    %v4052 = vrot.slane %v4026, 6
    %v4053 = vsel %vm2177, %v4052, %v4051
    %v4054 = vrot.slane %v4030, 5
    %v4055 = vsel %vm2180, %v4054, %v4053
    %v4056 = vrot.slane %v4023, 7
    %v4057 = vsel %vm2174, %v4056, %v4019
    %v4058 = vrot.slane %v4027, 6
    %v4059 = vsel %vm2177, %v4058, %v4057
    %v4060 = vrot.slane %v4031, 5
    %v4061 = vsel %vm2180, %v4060, %v4059
    %v4062 = vrot.slane %v4024, 7
    %v4063 = vsel %vm2174, %v4062, %v4020
    %v4064 = vrot.slane %v4028, 6
    %v4065 = vsel %vm2177, %v4064, %v4063
    %v4066 = vrot.slane %v4032, 5
    %v4067 = vsel %vm2180, %v4066, %v4065
    %v4068 = vrot.slane %v4025, 7
    %v4069 = vsel %vm2174, %v4068, %v4021
    %v4070 = vrot.slane %v4029, 6
    %v4071 = vsel %vm2177, %v4070, %v4069
    %v4072 = vrot.slane %v4033, 5
    %v4073 = vsel %vm2180, %v4072, %v4071
    %v4078 = vsel %vm2012, %v4055, 0.0
    %v4079 = vrot.slane %v4078, 4
    %v4080 = vadd.f32 %v4078, %v4079
    %v4081 = vrot.slane %v4080, 2
    %v4082 = vadd.f32 %v4080, %v4081
    %v4083 = vrot.slane %v4082, 1
    %v4084 = vadd.f32 %v4082, %v4083
    %v4085 = vsel %vm2012, %v4061, 0.0
    %v4086 = vrot.slane %v4085, 4
    %v4087 = vadd.f32 %v4085, %v4086
    %v4088 = vrot.slane %v4087, 2
    %v4089 = vadd.f32 %v4087, %v4088
    %v4090 = vrot.slane %v4089, 1
    %v4091 = vadd.f32 %v4089, %v4090
    %v4092 = vsel %vm2012, %v4067, 0.0
    %v4093 = vrot.slane %v4092, 4
    %v4094 = vadd.f32 %v4092, %v4093
    %v4095 = vrot.slane %v4094, 2
    %v4096 = vadd.f32 %v4094, %v4095
    %v4097 = vrot.slane %v4096, 1
    %v4098 = vadd.f32 %v4096, %v4097
    %v4099 = vsel %vm2012, %v4073, 0.0
    %v4100 = vrot.slane %v4099, 4
    %v4101 = vadd.f32 %v4099, %v4100
    %v4102 = vrot.slane %v4101, 2
    %v4103 = vadd.f32 %v4101, %v4102
    %v4104 = vrot.slane %v4103, 1
    %v4105 = vadd.f32 %v4103, %v4104
    %v4110 = vrot.slane %v4091, 4
    %v4111 = vrot.slane %v4105, 4
    %v4112 = vsel %vm2012, %v4084, %v4110
    %v4113 = vsel %vm2012, %v4098, %v4111
    %v4114 = vrot.slane %v4112, 6
    %v4115 = vrot.slane %v4113, 6
    %v4118 = vadd.f32 %v50, %v4114
    %v4119 = vadd.f32 %v51, %v4115
    %v4122 = vperm.slane %v4118, 2
    %v4123 = vperm.slane %v4118, 6
    %v4124 = vperm.slane %v4119, 2
    %v4125 = vperm.slane %v4119, 6
    %v4130 = vperm.slane %v4122, 2
    %v4131 = vperm.slane %v4123, 2
    %v4132 = vperm.slane %v4124, 2
    %v4133 = vperm.slane %v4125, 2
    %v4134 = vmul.f32 %v4130, %v1713
    %v4135 = vmul.f32 %v4131, %v1714
    %v4136 = vmul.f32 %v4132, %v1715
    %v4137 = vmul.f32 %v4133, %v1716
    %v4138 = vmul.f32 %v4130, %v1717
    %v4139 = vmul.f32 %v4131, %v1718
    %v4140 = vmul.f32 %v4132, %v1719
    %v4141 = vmul.f32 %v4133, %v1720
    %v4142 = vmul.f32 %v4130, %v1721
    %v4143 = vmul.f32 %v4131, %v1722
    %v4144 = vmul.f32 %v4132, %v1723
    %v4145 = vmul.f32 %v4133, %v1724
    %v4146 = vmul.f32 %v4130, %v1725
    %v4147 = vmul.f32 %v4131, %v1726
    %v4148 = vmul.f32 %v4132, %v1727
    %v4149 = vmul.f32 %v4133, %v1728
    %v4150 = vadd.f32 %v4134, %v1123
    %v4151 = vadd.f32 %v4135, %v1212
    %v4152 = vadd.f32 %v4136, %v1301
    %v4153 = vadd.f32 %v4137, %v1390
    %v4154 = vadd.f32 %v4138, %v1126
    %v4155 = vadd.f32 %v4139, %v1215
    %v4156 = vadd.f32 %v4140, %v1304
    %v4157 = vadd.f32 %v4141, %v1393
    %v4158 = vadd.f32 %v4142, %v1129
    %v4159 = vadd.f32 %v4143, %v1218
    %v4160 = vadd.f32 %v4144, %v1307
    %v4161 = vadd.f32 %v4145, %v1396
    %v4162 = vadd.f32 %v4146, %v1132
    %v4163 = vadd.f32 %v4147, %v1221
    %v4164 = vadd.f32 %v4148, %v1310
    %v4165 = vadd.f32 %v4149, %v1399
    %vm4166 = vcmp.gt.f32.partialorder %v4150, 0.0
    %vm4167 = vcmp.gt.f32.partialorder %v4151, 0.0
    %vm4168 = vcmp.gt.f32.partialorder %v4152, 0.0
    %vm4169 = vcmp.gt.f32.partialorder %v4153, 0.0
    %vm4170 = vcmp.gt.f32.partialorder %v4154, 0.0
    %vm4171 = vcmp.gt.f32.partialorder %v4155, 0.0
    %vm4172 = vcmp.gt.f32.partialorder %v4156, 0.0
    %vm4173 = vcmp.gt.f32.partialorder %v4157, 0.0
    %vm4174 = vcmp.gt.f32.partialorder %v4158, 0.0
    %vm4175 = vcmp.gt.f32.partialorder %v4159, 0.0
    %vm4176 = vcmp.gt.f32.partialorder %v4160, 0.0
    %vm4177 = vcmp.gt.f32.partialorder %v4161, 0.0
    %vm4178 = vcmp.gt.f32.partialorder %v4162, 0.0
    %vm4179 = vcmp.gt.f32.partialorder %v4163, 0.0
    %vm4180 = vcmp.gt.f32.partialorder %v4164, 0.0
    %vm4181 = vcmp.gt.f32.partialorder %v4165, 0.0
    %v4182 = vmul.f32 %v4150, 0.01
    %v4183 = vmul.f32 %v4151, 0.01
    %v4184 = vmul.f32 %v4152, 0.01
    %v4185 = vmul.f32 %v4153, 0.01
    %v4186 = vmul.f32 %v4154, 0.01
    %v4187 = vmul.f32 %v4155, 0.01
    %v4188 = vmul.f32 %v4156, 0.01
    %v4189 = vmul.f32 %v4157, 0.01
    %v4190 = vmul.f32 %v4158, 0.01
    %v4191 = vmul.f32 %v4159, 0.01
    %v4192 = vmul.f32 %v4160, 0.01
    %v4193 = vmul.f32 %v4161, 0.01
    %v4194 = vmul.f32 %v4162, 0.01
    %v4195 = vmul.f32 %v4163, 0.01
    %v4196 = vmul.f32 %v4164, 0.01
    %v4197 = vmul.f32 %v4165, 0.01
    %v4198 = vsel %vm4166, %v4150, %v4182
    %v4199 = vsel %vm4167, %v4151, %v4183
    %v4200 = vsel %vm4168, %v4152, %v4184
    %v4201 = vsel %vm4169, %v4153, %v4185
    %v4202 = vsel %vm4170, %v4154, %v4186
    %v4203 = vsel %vm4171, %v4155, %v4187
    %v4204 = vsel %vm4172, %v4156, %v4188
    %v4205 = vsel %vm4173, %v4157, %v4189
    %v4206 = vsel %vm4174, %v4158, %v4190
    %v4207 = vsel %vm4175, %v4159, %v4191
    %v4208 = vsel %vm4176, %v4160, %v4192
    %v4209 = vsel %vm4177, %v4161, %v4193
    %v4210 = vsel %vm4178, %v4162, %v4194
    %v4211 = vsel %vm4179, %v4163, %v4195
    %v4212 = vsel %vm4180, %v4164, %v4196
    %v4213 = vsel %vm4181, %v4165, %v4197
    %v4214 = vmul.f32 %v4198, %v1729
    %v4215 = vmul.f32 %v4199, %v1730
    %v4216 = vmul.f32 %v4200, %v1731
    %v4217 = vmul.f32 %v4201, %v1732
    %v4218 = vmul.f32 %v4202, %v1733
    %v4219 = vmul.f32 %v4203, %v1734
    %v4220 = vmul.f32 %v4204, %v1735
    %v4221 = vmul.f32 %v4205, %v1736
    %v4222 = vmul.f32 %v4206, %v1737
    %v4223 = vmul.f32 %v4207, %v1738
    %v4224 = vmul.f32 %v4208, %v1739
    %v4225 = vmul.f32 %v4209, %v1740
    %v4226 = vmul.f32 %v4210, %v1741
    %v4227 = vmul.f32 %v4211, %v1742
    %v4228 = vmul.f32 %v4212, %v1743
    %v4229 = vmul.f32 %v4213, %v1744
    %v4230 = vadd.f32 %v4214, %v4218
    %v4231 = vadd.f32 %v4230, %v4222
    %v4232 = vadd.f32 %v4231, %v4226
    %v4233 = vrot.slane %v4232, 4
    %v4234 = vadd.f32 %v4232, %v4233
    %v4235 = vrot.slane %v4234, 2
    %v4236 = vadd.f32 %v4234, %v4235
    %v4237 = vrot.slane %v4236, 1
    %v4238 = vadd.f32 %v4236, %v4237
    %v4239 = vadd.f32 %v4215, %v4219
    %v4240 = vadd.f32 %v4239, %v4223
    %v4241 = vadd.f32 %v4240, %v4227
    %v4242 = vrot.slane %v4241, 4
    %v4243 = vadd.f32 %v4241, %v4242
    %v4244 = vrot.slane %v4243, 2
    %v4245 = vadd.f32 %v4243, %v4244
    %v4246 = vrot.slane %v4245, 1
    %v4247 = vadd.f32 %v4245, %v4246
    %v4248 = vadd.f32 %v4216, %v4220
    %v4249 = vadd.f32 %v4248, %v4224
    %v4250 = vadd.f32 %v4249, %v4228
    %v4251 = vrot.slane %v4250, 4
    %v4252 = vadd.f32 %v4250, %v4251
    %v4253 = vrot.slane %v4252, 2
    %v4254 = vadd.f32 %v4252, %v4253
    %v4255 = vrot.slane %v4254, 1
    %v4256 = vadd.f32 %v4254, %v4255
    %v4257 = vadd.f32 %v4217, %v4221
    %v4258 = vadd.f32 %v4257, %v4225
    %v4259 = vadd.f32 %v4258, %v4229
    %v4260 = vrot.slane %v4259, 4
    %v4261 = vadd.f32 %v4259, %v4260
    %v4262 = vrot.slane %v4261, 2
    %v4263 = vadd.f32 %v4261, %v4262
    %v4264 = vrot.slane %v4263, 1
    %v4265 = vadd.f32 %v4263, %v4264
    %v4266 = vmul.f32 %v598, %v592
    %v4267 = vmul.f32 %v663, %v657
    %v4268 = vmul.f32 %v728, %v722
    %v4269 = vmul.f32 %v793, %v787
    %v4270 = vmul.f32 %v601, %v595
    %v4271 = vmul.f32 %v666, %v660
    %v4272 = vmul.f32 %v731, %v725
    %v4273 = vmul.f32 %v796, %v790
    %v4274 = vmul.f32 %v604, %v592
    %v4275 = vmul.f32 %v669, %v657
    %v4276 = vmul.f32 %v734, %v722
    %v4277 = vmul.f32 %v799, %v787
    %v4278 = vmul.f32 %v607, %v595
    %v4279 = vmul.f32 %v672, %v660
    %v4280 = vmul.f32 %v737, %v725
    %v4281 = vmul.f32 %v802, %v790
    %v4282 = vmul.f32 %v610, %v592
    %v4283 = vmul.f32 %v675, %v657
    %v4284 = vmul.f32 %v740, %v722
    %v4285 = vmul.f32 %v805, %v787
    %v4286 = vmul.f32 %v613, %v595
    %v4287 = vmul.f32 %v678, %v660
    %v4288 = vmul.f32 %v743, %v725
    %v4289 = vmul.f32 %v808, %v790
    %v4290 = vmul.f32 %v616, %v592
    %v4291 = vmul.f32 %v681, %v657
    %v4292 = vmul.f32 %v746, %v722
    %v4293 = vmul.f32 %v811, %v787
    %v4294 = vmul.f32 %v619, %v595
    %v4295 = vmul.f32 %v684, %v660
    %v4296 = vmul.f32 %v749, %v725
    %v4297 = vmul.f32 %v814, %v790
    %v4298 = vadd.f32 %v4266, %v4270
    %v4299 = vrot.slane %v4298, 4
    %v4300 = vadd.f32 %v4298, %v4299
    %v4301 = vrot.slane %v4300, 2
    %v4302 = vadd.f32 %v4300, %v4301
    %v4303 = vrot.slane %v4302, 1
    %v4304 = vadd.f32 %v4302, %v4303
    %v4305 = vadd.f32 %v4267, %v4271
    %v4306 = vrot.slane %v4305, 4
    %v4307 = vadd.f32 %v4305, %v4306
    %v4308 = vrot.slane %v4307, 2
    %v4309 = vadd.f32 %v4307, %v4308
    %v4310 = vrot.slane %v4309, 1
    %v4311 = vadd.f32 %v4309, %v4310
    %v4312 = vadd.f32 %v4268, %v4272
    %v4313 = vrot.slane %v4312, 4
    %v4314 = vadd.f32 %v4312, %v4313
    %v4315 = vrot.slane %v4314, 2
    %v4316 = vadd.f32 %v4314, %v4315
    %v4317 = vrot.slane %v4316, 1
    %v4318 = vadd.f32 %v4316, %v4317
    %v4319 = vadd.f32 %v4269, %v4273
    %v4320 = vrot.slane %v4319, 4
    %v4321 = vadd.f32 %v4319, %v4320
    %v4322 = vrot.slane %v4321, 2
    %v4323 = vadd.f32 %v4321, %v4322
    %v4324 = vrot.slane %v4323, 1
    %v4325 = vadd.f32 %v4323, %v4324
    %v4326 = vadd.f32 %v4274, %v4278
    %v4327 = vrot.slane %v4326, 4
    %v4328 = vadd.f32 %v4326, %v4327
    %v4329 = vrot.slane %v4328, 2
    %v4330 = vadd.f32 %v4328, %v4329
    %v4331 = vrot.slane %v4330, 1
    %v4332 = vadd.f32 %v4330, %v4331
    %v4333 = vadd.f32 %v4275, %v4279
    %v4334 = vrot.slane %v4333, 4
    %v4335 = vadd.f32 %v4333, %v4334
    %v4336 = vrot.slane %v4335, 2
    %v4337 = vadd.f32 %v4335, %v4336
    %v4338 = vrot.slane %v4337, 1
    %v4339 = vadd.f32 %v4337, %v4338
    %v4340 = vadd.f32 %v4276, %v4280
    %v4341 = vrot.slane %v4340, 4
    %v4342 = vadd.f32 %v4340, %v4341
    %v4343 = vrot.slane %v4342, 2
    %v4344 = vadd.f32 %v4342, %v4343
    %v4345 = vrot.slane %v4344, 1
    %v4346 = vadd.f32 %v4344, %v4345
    %v4347 = vadd.f32 %v4277, %v4281
    %v4348 = vrot.slane %v4347, 4
    %v4349 = vadd.f32 %v4347, %v4348
    %v4350 = vrot.slane %v4349, 2
    %v4351 = vadd.f32 %v4349, %v4350
    %v4352 = vrot.slane %v4351, 1
    %v4353 = vadd.f32 %v4351, %v4352
    %v4354 = vadd.f32 %v4282, %v4286
    %v4355 = vrot.slane %v4354, 4
    %v4356 = vadd.f32 %v4354, %v4355
    %v4357 = vrot.slane %v4356, 2
    %v4358 = vadd.f32 %v4356, %v4357
    %v4359 = vrot.slane %v4358, 1
    %v4360 = vadd.f32 %v4358, %v4359
    %v4361 = vadd.f32 %v4283, %v4287
    %v4362 = vrot.slane %v4361, 4
    %v4363 = vadd.f32 %v4361, %v4362
    %v4364 = vrot.slane %v4363, 2
    %v4365 = vadd.f32 %v4363, %v4364
    %v4366 = vrot.slane %v4365, 1
    %v4367 = vadd.f32 %v4365, %v4366
    %v4368 = vadd.f32 %v4284, %v4288
    %v4369 = vrot.slane %v4368, 4
    %v4370 = vadd.f32 %v4368, %v4369
    %v4371 = vrot.slane %v4370, 2
    %v4372 = vadd.f32 %v4370, %v4371
    %v4373 = vrot.slane %v4372, 1
    %v4374 = vadd.f32 %v4372, %v4373
    %v4375 = vadd.f32 %v4285, %v4289
    %v4376 = vrot.slane %v4375, 4
    %v4377 = vadd.f32 %v4375, %v4376
    %v4378 = vrot.slane %v4377, 2
    %v4379 = vadd.f32 %v4377, %v4378
    %v4380 = vrot.slane %v4379, 1
    %v4381 = vadd.f32 %v4379, %v4380
    %v4382 = vadd.f32 %v4290, %v4294
    %v4383 = vrot.slane %v4382, 4
    %v4384 = vadd.f32 %v4382, %v4383
    %v4385 = vrot.slane %v4384, 2
    %v4386 = vadd.f32 %v4384, %v4385
    %v4387 = vrot.slane %v4386, 1
    %v4388 = vadd.f32 %v4386, %v4387
    %v4389 = vadd.f32 %v4291, %v4295
    %v4390 = vrot.slane %v4389, 4
    %v4391 = vadd.f32 %v4389, %v4390
    %v4392 = vrot.slane %v4391, 2
    %v4393 = vadd.f32 %v4391, %v4392
    %v4394 = vrot.slane %v4393, 1
    %v4395 = vadd.f32 %v4393, %v4394
    %v4396 = vadd.f32 %v4292, %v4296
    %v4397 = vrot.slane %v4396, 4
    %v4398 = vadd.f32 %v4396, %v4397
    %v4399 = vrot.slane %v4398, 2
    %v4400 = vadd.f32 %v4398, %v4399
    %v4401 = vrot.slane %v4400, 1
    %v4402 = vadd.f32 %v4400, %v4401
    %v4403 = vadd.f32 %v4293, %v4297
    %v4404 = vrot.slane %v4403, 4
    %v4405 = vadd.f32 %v4403, %v4404
    %v4406 = vrot.slane %v4405, 2
    %v4407 = vadd.f32 %v4405, %v4406
    %v4408 = vrot.slane %v4407, 1
    %v4409 = vadd.f32 %v4407, %v4408
    %v4410 = vmul.f32 %v4304, 0.25
    %v4411 = vmul.f32 %v4311, 0.25
    %v4412 = vmul.f32 %v4318, 0.25
    %v4413 = vmul.f32 %v4325, 0.25
    %v4414 = vmul.f32 %v4332, 0.25
    %v4415 = vmul.f32 %v4339, 0.25
    %v4416 = vmul.f32 %v4346, 0.25
    %v4417 = vmul.f32 %v4353, 0.25
    %v4418 = vmul.f32 %v4360, 0.25
    %v4419 = vmul.f32 %v4367, 0.25
    %v4420 = vmul.f32 %v4374, 0.25
    %v4421 = vmul.f32 %v4381, 0.25
    %v4422 = vmul.f32 %v4388, 0.25
    %v4423 = vmul.f32 %v4395, 0.25
    %v4424 = vmul.f32 %v4402, 0.25
    %v4425 = vmul.f32 %v4409, 0.25
    %v4426 = vperm.slane %v68, 3
    %v4427 = vperm.slane %v68, 7
    %v4428 = vperm.slane %v69, 3
    %v4429 = vperm.slane %v69, 7
    %v4434 = vperm.slane %v4426, 3
    %v4435 = vperm.slane %v4427, 3
    %v4436 = vperm.slane %v4428, 3
    %v4437 = vperm.slane %v4429, 3
    %v4442 = vrot.slane %v4435, 4
    %v4443 = vrot.slane %v4437, 4
    %v4444 = vsel %vm2012, %v4434, %v4442
    %v4445 = vsel %vm2012, %v4436, %v4443
    %v4448 = vmul.f32 %v68, %v4444
    %v4449 = vmul.f32 %v69, %v4445
    %v4450 = vsub.f32 1.0, %v4448
    %v4451 = vsub.f32 1.0, %v4449
    %v4452 = vmul.f32 %v4450, -1e+10
    %v4453 = vmul.f32 %v4451, -1e+10
    %4456 = vst [vmem:[#allocation1] ss:$2 sm:$0xff] %v4452
    %s4457 = scalar_lea.vmem [#allocation1], 16
    %4458 = vst [vmem:[%s4457] ss:$2 sm:$0xff] %v4453
    %v4459 = vld.sshfl [vmem:[#allocation1] sm:$0xff pattern:$0x75316420]
    %v4460 = vld.sshfl [vmem:[#allocation1 + $0x8] sm:$0xff pattern:$0x75316420]
    %v4461 = vld.sshfl [vmem:[#allocation1 + $0x10] sm:$0xff pattern:$0x75316420]
    %v4462 = vld.sshfl [vmem:[#allocation1 + $0x18] sm:$0xff pattern:$0x75316420]
    %v4463 = vrot.slane %v4459, 1
    %v4464 = vrot.slane %v4460, 1
    %v4465 = vrot.slane %v4461, 1
    %v4466 = vrot.slane %v4462, 1
    %v4467 = vrot.slane %v4459, 2
    %v4468 = vrot.slane %v4460, 2
    %v4469 = vrot.slane %v4461, 2
    %v4470 = vrot.slane %v4462, 2
    %v4471 = vrot.slane %v4459, 3
    %v4472 = vrot.slane %v4460, 3
    %v4473 = vrot.slane %v4461, 3
    %v4474 = vrot.slane %v4462, 3
    %v4491 = vadd.f32 %v4410, %v4459
    %v4492 = vadd.f32 %v4411, %v4460
    %v4493 = vadd.f32 %v4412, %v4461
    %v4494 = vadd.f32 %v4413, %v4462
    %v4495 = vadd.f32 %v4414, %v4463
    %v4496 = vadd.f32 %v4415, %v4464
    %v4497 = vadd.f32 %v4416, %v4465
    %v4498 = vadd.f32 %v4417, %v4466
    %v4499 = vadd.f32 %v4418, %v4467
    %v4500 = vadd.f32 %v4419, %v4468
    %v4501 = vadd.f32 %v4420, %v4469
    %v4502 = vadd.f32 %v4421, %v4470
    %v4503 = vadd.f32 %v4422, %v4471
    %v4504 = vadd.f32 %v4423, %v4472
    %v4505 = vadd.f32 %v4424, %v4473
    %v4506 = vadd.f32 %v4425, %v4474
    %v4507 = vsel %vm2076, %v4491, -inf
    %v4508 = vsel %vm2076, %v4495, -inf
    %v4509 = vmax.f32 %v4507, %v4508
    %v4510 = vsel %vm2076, %v4499, -inf
    %v4511 = vmax.f32 %v4509, %v4510
    %v4512 = vsel %vm2076, %v4503, -inf
    %v4513 = vmax.f32 %v4511, %v4512
    %v4514 = vsel %vm2076, %v4492, -inf
    %v4515 = vsel %vm2076, %v4496, -inf
    %v4516 = vmax.f32 %v4514, %v4515
    %v4517 = vsel %vm2076, %v4500, -inf
    %v4518 = vmax.f32 %v4516, %v4517
    %v4519 = vsel %vm2076, %v4504, -inf
    %v4520 = vmax.f32 %v4518, %v4519
    %v4521 = vsel %vm2076, %v4493, -inf
    %v4522 = vsel %vm2076, %v4497, -inf
    %v4523 = vmax.f32 %v4521, %v4522
    %v4524 = vsel %vm2076, %v4501, -inf
    %v4525 = vmax.f32 %v4523, %v4524
    %v4526 = vsel %vm2076, %v4505, -inf
    %v4527 = vmax.f32 %v4525, %v4526
    %v4528 = vsel %vm2076, %v4494, -inf
    %v4529 = vsel %vm2076, %v4498, -inf
    %v4530 = vmax.f32 %v4528, %v4529
    %v4531 = vsel %vm2076, %v4502, -inf
    %v4532 = vmax.f32 %v4530, %v4531
    %v4533 = vsel %vm2076, %v4506, -inf
    %v4534 = vmax.f32 %v4532, %v4533
    %v4535 = vperm.slane %v4513, 0
    %v4536 = vperm.slane %v4520, 0
    %v4537 = vperm.slane %v4527, 0
    %v4538 = vperm.slane %v4534, 0
    %v4539 = vsub.f32 %v4491, %v4535
    %v4540 = vsub.f32 %v4492, %v4536
    %v4541 = vsub.f32 %v4493, %v4537
    %v4542 = vsub.f32 %v4494, %v4538
    %v4543 = vsub.f32 %v4495, %v4535
    %v4544 = vsub.f32 %v4496, %v4536
    %v4545 = vsub.f32 %v4497, %v4537
    %v4546 = vsub.f32 %v4498, %v4538
    %v4547 = vsub.f32 %v4499, %v4535
    %v4548 = vsub.f32 %v4500, %v4536
    %v4549 = vsub.f32 %v4501, %v4537
    %v4550 = vsub.f32 %v4502, %v4538
    %v4551 = vsub.f32 %v4503, %v4535
    %v4552 = vsub.f32 %v4504, %v4536
    %v4553 = vsub.f32 %v4505, %v4537
    %v4554 = vsub.f32 %v4506, %v4538
    %v4555 = vmul.f32 %v4539, 1.442695
    %v4556 = vpow.pop %v4555
    %v4557 = vmul.f32 %v4540, 1.442695
    %v4558 = vpow.pop %v4557
    %v4559 = vmul.f32 %v4541, 1.442695
    %v4560 = vpow.pop %v4559
    %v4561 = vmul.f32 %v4542, 1.442695
    %v4562 = vpow.pop %v4561
    %v4563 = vmul.f32 %v4543, 1.442695
    %v4564 = vpow.pop %v4563
    %v4565 = vmul.f32 %v4544, 1.442695
    %v4566 = vpow.pop %v4565
    %v4567 = vmul.f32 %v4545, 1.442695
    %v4568 = vpow.pop %v4567
    %v4569 = vmul.f32 %v4546, 1.442695
    %v4570 = vpow.pop %v4569
    %v4571 = vmul.f32 %v4547, 1.442695
    %v4572 = vpow.pop %v4571
    %v4573 = vmul.f32 %v4548, 1.442695
    %v4574 = vpow.pop %v4573
    %v4575 = vmul.f32 %v4549, 1.442695
    %v4576 = vpow.pop %v4575
    %v4577 = vmul.f32 %v4550, 1.442695
    %v4578 = vpow.pop %v4577
    %v4579 = vmul.f32 %v4551, 1.442695
    %v4580 = vpow.pop %v4579
    %v4581 = vmul.f32 %v4552, 1.442695
    %v4582 = vpow.pop %v4581
    %v4583 = vmul.f32 %v4553, 1.442695
    %v4584 = vpow.pop %v4583
    %v4585 = vmul.f32 %v4554, 1.442695
    %v4586 = vpow.pop %v4585
    %v4603 = vrot.slane %v4564, 7
    %v4604 = vsel %vm2174, %v4603, %v4556
    %v4605 = vrot.slane %v4572, 6
    %v4606 = vsel %vm2177, %v4605, %v4604
    %v4607 = vrot.slane %v4580, 5
    %v4608 = vsel %vm2180, %v4607, %v4606
    %v4609 = vrot.slane %v4566, 7
    %v4610 = vsel %vm2174, %v4609, %v4558
    %v4611 = vrot.slane %v4574, 6
    %v4612 = vsel %vm2177, %v4611, %v4610
    %v4613 = vrot.slane %v4582, 5
    %v4614 = vsel %vm2180, %v4613, %v4612
    %v4615 = vrot.slane %v4568, 7
    %v4616 = vsel %vm2174, %v4615, %v4560
    %v4617 = vrot.slane %v4576, 6
    %v4618 = vsel %vm2177, %v4617, %v4616
    %v4619 = vrot.slane %v4584, 5
    %v4620 = vsel %vm2180, %v4619, %v4618
    %v4621 = vrot.slane %v4570, 7
    %v4622 = vsel %vm2174, %v4621, %v4562
    %v4623 = vrot.slane %v4578, 6
    %v4624 = vsel %vm2177, %v4623, %v4622
    %v4625 = vrot.slane %v4586, 5
    %v4626 = vsel %vm2180, %v4625, %v4624
    %v4631 = vsel %vm2012, %v4608, 0.0
    %v4632 = vrot.slane %v4631, 4
    %v4633 = vadd.f32 %v4631, %v4632
    %v4634 = vrot.slane %v4633, 2
    %v4635 = vadd.f32 %v4633, %v4634
    %v4636 = vrot.slane %v4635, 1
    %v4637 = vadd.f32 %v4635, %v4636
    %v4638 = vsel %vm2012, %v4614, 0.0
    %v4639 = vrot.slane %v4638, 4
    %v4640 = vadd.f32 %v4638, %v4639
    %v4641 = vrot.slane %v4640, 2
    %v4642 = vadd.f32 %v4640, %v4641
    %v4643 = vrot.slane %v4642, 1
    %v4644 = vadd.f32 %v4642, %v4643
    %v4645 = vsel %vm2012, %v4620, 0.0
    %v4646 = vrot.slane %v4645, 4
    %v4647 = vadd.f32 %v4645, %v4646
    %v4648 = vrot.slane %v4647, 2
    %v4649 = vadd.f32 %v4647, %v4648
    %v4650 = vrot.slane %v4649, 1
    %v4651 = vadd.f32 %v4649, %v4650
    %v4652 = vsel %vm2012, %v4626, 0.0
    %v4653 = vrot.slane %v4652, 4
    %v4654 = vadd.f32 %v4652, %v4653
    %v4655 = vrot.slane %v4654, 2
    %v4656 = vadd.f32 %v4654, %v4655
    %v4657 = vrot.slane %v4656, 1
    %v4658 = vadd.f32 %v4656, %v4657
    %v4659 = vrcp.pop %v4637
    %v4660 = vmul.f32 %v4637, %v4659
    %v4661 = vsub.f32 1.0, %v4660
    %v4662 = vmul.f32 %v4659, %v4661
    %v4663 = vadd.f32 %v4659, %v4662
    %vm4664 = vweird.f32 %v4637
    %vm4665 = vweird.f32 %v4659
    %vm4666 = vmor %vm4664, %vm4665
    %v4667 = vsel %vm4666, %v4659, %v4663
    %v4668 = vand.u32 2147483647, %v4637
    %vm4669 = vcmp.eq.f32.partialorder %v4668, 8.507059e+37
    %v4670 = vand.u32 %v4637, 2147483648
    %v4671 = vor.u32 1.1754944e-38, %v4670
    %v4672 = vsel %vm4669, %v4671, %v4667
    %v4673 = vmul.f32 1.0, %v4672
    %v4674 = vrcp.pop %v4644
    %v4675 = vmul.f32 %v4644, %v4674
    %v4676 = vsub.f32 1.0, %v4675
    %v4677 = vmul.f32 %v4674, %v4676
    %v4678 = vadd.f32 %v4674, %v4677
    %vm4679 = vweird.f32 %v4644
    %vm4680 = vweird.f32 %v4674
    %vm4681 = vmor %vm4679, %vm4680
    %v4682 = vsel %vm4681, %v4674, %v4678
    %v4683 = vand.u32 2147483647, %v4644
    %vm4684 = vcmp.eq.f32.partialorder %v4683, 8.507059e+37
    %v4685 = vand.u32 %v4644, 2147483648
    %v4686 = vor.u32 1.1754944e-38, %v4685
    %v4687 = vsel %vm4684, %v4686, %v4682
    %v4688 = vmul.f32 1.0, %v4687
    %v4689 = vrcp.pop %v4651
    %v4690 = vmul.f32 %v4651, %v4689
    %v4691 = vsub.f32 1.0, %v4690
    %v4692 = vmul.f32 %v4689, %v4691
    %v4693 = vadd.f32 %v4689, %v4692
    %vm4694 = vweird.f32 %v4651
    %vm4695 = vweird.f32 %v4689
    %vm4696 = vmor %vm4694, %vm4695
    %v4697 = vsel %vm4696, %v4689, %v4693
    %v4698 = vand.u32 2147483647, %v4651
    %vm4699 = vcmp.eq.f32.partialorder %v4698, 8.507059e+37
    %v4700 = vand.u32 %v4651, 2147483648
    %v4701 = vor.u32 1.1754944e-38, %v4700
    %v4702 = vsel %vm4699, %v4701, %v4697
    %v4703 = vmul.f32 1.0, %v4702
    %v4704 = vrcp.pop %v4658
    %v4705 = vmul.f32 %v4658, %v4704
    %v4706 = vsub.f32 1.0, %v4705
    %v4707 = vmul.f32 %v4704, %v4706
    %v4708 = vadd.f32 %v4704, %v4707
    %vm4709 = vweird.f32 %v4658
    %vm4710 = vweird.f32 %v4704
    %vm4711 = vmor %vm4709, %vm4710
    %v4712 = vsel %vm4711, %v4704, %v4708
    %v4713 = vand.u32 2147483647, %v4658
    %vm4714 = vcmp.eq.f32.partialorder %v4713, 8.507059e+37
    %v4715 = vand.u32 %v4658, 2147483648
    %v4716 = vor.u32 1.1754944e-38, %v4715
    %v4717 = vsel %vm4714, %v4716, %v4712
    %v4718 = vmul.f32 1.0, %v4717
    %v4719 = vperm.slane %v4673, 0
    %v4720 = vperm.slane %v4688, 0
    %v4721 = vperm.slane %v4703, 0
    %v4722 = vperm.slane %v4718, 0
    %v4723 = vmul.f32 %v4556, %v4719
    %v4724 = vmul.f32 %v4558, %v4720
    %v4725 = vmul.f32 %v4560, %v4721
    %v4726 = vmul.f32 %v4562, %v4722
    %v4727 = vmul.f32 %v4564, %v4719
    %v4728 = vmul.f32 %v4566, %v4720
    %v4729 = vmul.f32 %v4568, %v4721
    %v4730 = vmul.f32 %v4570, %v4722
    %v4731 = vmul.f32 %v4572, %v4719
    %v4732 = vmul.f32 %v4574, %v4720
    %v4733 = vmul.f32 %v4576, %v4721
    %v4734 = vmul.f32 %v4578, %v4722
    %v4735 = vmul.f32 %v4580, %v4719
    %v4736 = vmul.f32 %v4582, %v4720
    %v4737 = vmul.f32 %v4584, %v4721
    %v4738 = vmul.f32 %v4586, %v4722
    %4741 = vst [vmem:[#allocation1] ss:$2 sm:$0xff] %v4448
    %s4742 = scalar_lea.vmem [#allocation1], 16
    %4743 = vst [vmem:[%s4742] ss:$2 sm:$0xff] %v4449
    %v4744 = vld.sshfl [vmem:[#allocation1] sm:$0xff pattern:$0x75316420]
    %v4745 = vld.sshfl [vmem:[#allocation1 + $0x8] sm:$0xff pattern:$0x75316420]
    %v4746 = vld.sshfl [vmem:[#allocation1 + $0x10] sm:$0xff pattern:$0x75316420]
    %v4747 = vld.sshfl [vmem:[#allocation1 + $0x18] sm:$0xff pattern:$0x75316420]
    %v4748 = vrot.slane %v4744, 1
    %v4749 = vrot.slane %v4745, 1
    %v4750 = vrot.slane %v4746, 1
    %v4751 = vrot.slane %v4747, 1
    %v4752 = vrot.slane %v4744, 2
    %v4753 = vrot.slane %v4745, 2
    %v4754 = vrot.slane %v4746, 2
    %v4755 = vrot.slane %v4747, 2
    %v4756 = vrot.slane %v4744, 3
    %v4757 = vrot.slane %v4745, 3
    %v4758 = vrot.slane %v4746, 3
    %v4759 = vrot.slane %v4747, 3
    %v4776 = vmul.f32 %v4723, %v4744
    %v4777 = vmul.f32 %v4724, %v4745
    %v4778 = vmul.f32 %v4725, %v4746
    %v4779 = vmul.f32 %v4726, %v4747
    %v4780 = vmul.f32 %v4727, %v4748
    %v4781 = vmul.f32 %v4728, %v4749
    %v4782 = vmul.f32 %v4729, %v4750
    %v4783 = vmul.f32 %v4730, %v4751
    %v4784 = vmul.f32 %v4731, %v4752
    %v4785 = vmul.f32 %v4732, %v4753
    %v4786 = vmul.f32 %v4733, %v4754
    %v4787 = vmul.f32 %v4734, %v4755
    %v4788 = vmul.f32 %v4735, %v4756
    %v4789 = vmul.f32 %v4736, %v4757
    %v4790 = vmul.f32 %v4737, %v4758
    %v4791 = vmul.f32 %v4738, %v4759
    %4792 = vst [vmem:[#allocation1] ss:$2 sm:$0xff] %v50
    %s4793 = scalar_lea.vmem [#allocation1], 16
    %4794 = vst [vmem:[%s4793] ss:$2 sm:$0xff] %v51
    %v4795 = vld.sshfl [vmem:[#allocation1] sm:$0xff pattern:$0x75316420]
    %v4796 = vld.sshfl [vmem:[#allocation1 + $0x8] sm:$0xff pattern:$0x75316420]
    %v4797 = vld.sshfl [vmem:[#allocation1 + $0x10] sm:$0xff pattern:$0x75316420]
    %v4798 = vld.sshfl [vmem:[#allocation1 + $0x18] sm:$0xff pattern:$0x75316420]
    %v4799 = vrot.slane %v4795, 1
    %v4800 = vrot.slane %v4796, 1
    %v4801 = vrot.slane %v4797, 1
    %v4802 = vrot.slane %v4798, 1
    %v4803 = vrot.slane %v4795, 2
    %v4804 = vrot.slane %v4796, 2
    %v4805 = vrot.slane %v4797, 2
    %v4806 = vrot.slane %v4798, 2
    %v4807 = vrot.slane %v4795, 3
    %v4808 = vrot.slane %v4796, 3
    %v4809 = vrot.slane %v4797, 3
    %v4810 = vrot.slane %v4798, 3
    %v4827 = vmul.f32 %v4776, %v4795
    %v4828 = vmul.f32 %v4777, %v4796
    %v4829 = vmul.f32 %v4778, %v4797
    %v4830 = vmul.f32 %v4779, %v4798
    %v4831 = vmul.f32 %v4780, %v4799
    %v4832 = vmul.f32 %v4781, %v4800
    %v4833 = vmul.f32 %v4782, %v4801
    %v4834 = vmul.f32 %v4783, %v4802
    %v4835 = vmul.f32 %v4784, %v4803
    %v4836 = vmul.f32 %v4785, %v4804
    %v4837 = vmul.f32 %v4786, %v4805
    %v4838 = vmul.f32 %v4787, %v4806
    %v4839 = vmul.f32 %v4788, %v4807
    %v4840 = vmul.f32 %v4789, %v4808
    %v4841 = vmul.f32 %v4790, %v4809
    %v4842 = vmul.f32 %v4791, %v4810
    %v4859 = vrot.slane %v4831, 7
    %v4860 = vsel %vm2174, %v4859, %v4827
    %v4861 = vrot.slane %v4835, 6
    %v4862 = vsel %vm2177, %v4861, %v4860
    %v4863 = vrot.slane %v4839, 5
    %v4864 = vsel %vm2180, %v4863, %v4862
    %v4865 = vrot.slane %v4832, 7
    %v4866 = vsel %vm2174, %v4865, %v4828
    %v4867 = vrot.slane %v4836, 6
    %v4868 = vsel %vm2177, %v4867, %v4866
    %v4869 = vrot.slane %v4840, 5
    %v4870 = vsel %vm2180, %v4869, %v4868
    %v4871 = vrot.slane %v4833, 7
    %v4872 = vsel %vm2174, %v4871, %v4829
    %v4873 = vrot.slane %v4837, 6
    %v4874 = vsel %vm2177, %v4873, %v4872
    %v4875 = vrot.slane %v4841, 5
    %v4876 = vsel %vm2180, %v4875, %v4874
    %v4877 = vrot.slane %v4834, 7
    %v4878 = vsel %vm2174, %v4877, %v4830
    %v4879 = vrot.slane %v4838, 6
    %v4880 = vsel %vm2177, %v4879, %v4878
    %v4881 = vrot.slane %v4842, 5
    %v4882 = vsel %vm2180, %v4881, %v4880
    %v4887 = vsel %vm2012, %v4864, 0.0
    %v4888 = vrot.slane %v4887, 4
    %v4889 = vadd.f32 %v4887, %v4888
    %v4890 = vrot.slane %v4889, 2
    %v4891 = vadd.f32 %v4889, %v4890
    %v4892 = vrot.slane %v4891, 1
    %v4893 = vadd.f32 %v4891, %v4892
    %v4894 = vsel %vm2012, %v4870, 0.0
    %v4895 = vrot.slane %v4894, 4
    %v4896 = vadd.f32 %v4894, %v4895
    %v4897 = vrot.slane %v4896, 2
    %v4898 = vadd.f32 %v4896, %v4897
    %v4899 = vrot.slane %v4898, 1
    %v4900 = vadd.f32 %v4898, %v4899
    %v4901 = vsel %vm2012, %v4876, 0.0
    %v4902 = vrot.slane %v4901, 4
    %v4903 = vadd.f32 %v4901, %v4902
    %v4904 = vrot.slane %v4903, 2
    %v4905 = vadd.f32 %v4903, %v4904
    %v4906 = vrot.slane %v4905, 1
    %v4907 = vadd.f32 %v4905, %v4906
    %v4908 = vsel %vm2012, %v4882, 0.0
    %v4909 = vrot.slane %v4908, 4
    %v4910 = vadd.f32 %v4908, %v4909
    %v4911 = vrot.slane %v4910, 2
    %v4912 = vadd.f32 %v4910, %v4911
    %v4913 = vrot.slane %v4912, 1
    %v4914 = vadd.f32 %v4912, %v4913
    %v4919 = vrot.slane %v4900, 4
    %v4920 = vrot.slane %v4914, 4
    %v4921 = vsel %vm2012, %v4893, %v4919
    %v4922 = vsel %vm2012, %v4907, %v4920
    %v4923 = vrot.slane %v4921, 5
    %v4924 = vrot.slane %v4922, 5
    %v4927 = vadd.f32 %v50, %v4923
    %v4928 = vadd.f32 %v51, %v4924
    %v4931 = vperm.slane %v4927, 3
    %v4932 = vperm.slane %v4927, 7
    %v4933 = vperm.slane %v4928, 3
    %v4934 = vperm.slane %v4928, 7
    %v4939 = vperm.slane %v4931, 3
    %v4940 = vperm.slane %v4932, 3
    %v4941 = vperm.slane %v4933, 3
    %v4942 = vperm.slane %v4934, 3
    %v4943 = vmul.f32 %v4939, %v1713
    %v4944 = vmul.f32 %v4940, %v1714
    %v4945 = vmul.f32 %v4941, %v1715
    %v4946 = vmul.f32 %v4942, %v1716
    %v4947 = vmul.f32 %v4939, %v1717
    %v4948 = vmul.f32 %v4940, %v1718
    %v4949 = vmul.f32 %v4941, %v1719
    %v4950 = vmul.f32 %v4942, %v1720
    %v4951 = vmul.f32 %v4939, %v1721
    %v4952 = vmul.f32 %v4940, %v1722
    %v4953 = vmul.f32 %v4941, %v1723
    %v4954 = vmul.f32 %v4942, %v1724
    %v4955 = vmul.f32 %v4939, %v1725
    %v4956 = vmul.f32 %v4940, %v1726
    %v4957 = vmul.f32 %v4941, %v1727
    %v4958 = vmul.f32 %v4942, %v1728
    %v4959 = vadd.f32 %v4943, %v1123
    %v4960 = vadd.f32 %v4944, %v1212
    %v4961 = vadd.f32 %v4945, %v1301
    %v4962 = vadd.f32 %v4946, %v1390
    %v4963 = vadd.f32 %v4947, %v1126
    %v4964 = vadd.f32 %v4948, %v1215
    %v4965 = vadd.f32 %v4949, %v1304
    %v4966 = vadd.f32 %v4950, %v1393
    %v4967 = vadd.f32 %v4951, %v1129
    %v4968 = vadd.f32 %v4952, %v1218
    %v4969 = vadd.f32 %v4953, %v1307
    %v4970 = vadd.f32 %v4954, %v1396
    %v4971 = vadd.f32 %v4955, %v1132
    %v4972 = vadd.f32 %v4956, %v1221
    %v4973 = vadd.f32 %v4957, %v1310
    %v4974 = vadd.f32 %v4958, %v1399
    %vm4975 = vcmp.gt.f32.partialorder %v4959, 0.0
    %vm4976 = vcmp.gt.f32.partialorder %v4960, 0.0
    %vm4977 = vcmp.gt.f32.partialorder %v4961, 0.0
    %vm4978 = vcmp.gt.f32.partialorder %v4962, 0.0
    %vm4979 = vcmp.gt.f32.partialorder %v4963, 0.0
    %vm4980 = vcmp.gt.f32.partialorder %v4964, 0.0
    %vm4981 = vcmp.gt.f32.partialorder %v4965, 0.0
    %vm4982 = vcmp.gt.f32.partialorder %v4966, 0.0
    %vm4983 = vcmp.gt.f32.partialorder %v4967, 0.0
    %vm4984 = vcmp.gt.f32.partialorder %v4968, 0.0
    %vm4985 = vcmp.gt.f32.partialorder %v4969, 0.0
    %vm4986 = vcmp.gt.f32.partialorder %v4970, 0.0
    %vm4987 = vcmp.gt.f32.partialorder %v4971, 0.0
    %vm4988 = vcmp.gt.f32.partialorder %v4972, 0.0
    %vm4989 = vcmp.gt.f32.partialorder %v4973, 0.0
    %vm4990 = vcmp.gt.f32.partialorder %v4974, 0.0
    %v4991 = vmul.f32 %v4959, 0.01
    %v4992 = vmul.f32 %v4960, 0.01
    %v4993 = vmul.f32 %v4961, 0.01
    %v4994 = vmul.f32 %v4962, 0.01
    %v4995 = vmul.f32 %v4963, 0.01
    %v4996 = vmul.f32 %v4964, 0.01
    %v4997 = vmul.f32 %v4965, 0.01
    %v4998 = vmul.f32 %v4966, 0.01
    %v4999 = vmul.f32 %v4967, 0.01
    %v5000 = vmul.f32 %v4968, 0.01
    %v5001 = vmul.f32 %v4969, 0.01
    %v5002 = vmul.f32 %v4970, 0.01
    %v5003 = vmul.f32 %v4971, 0.01
    %v5004 = vmul.f32 %v4972, 0.01
    %v5005 = vmul.f32 %v4973, 0.01
    %v5006 = vmul.f32 %v4974, 0.01
    %v5007 = vsel %vm4975, %v4959, %v4991
    %v5008 = vsel %vm4976, %v4960, %v4992
    %v5009 = vsel %vm4977, %v4961, %v4993
    %v5010 = vsel %vm4978, %v4962, %v4994
    %v5011 = vsel %vm4979, %v4963, %v4995
    %v5012 = vsel %vm4980, %v4964, %v4996
    %v5013 = vsel %vm4981, %v4965, %v4997
    %v5014 = vsel %vm4982, %v4966, %v4998
    %v5015 = vsel %vm4983, %v4967, %v4999
    %v5016 = vsel %vm4984, %v4968, %v5000
    %v5017 = vsel %vm4985, %v4969, %v5001
    %v5018 = vsel %vm4986, %v4970, %v5002
    %v5019 = vsel %vm4987, %v4971, %v5003
    %v5020 = vsel %vm4988, %v4972, %v5004
    %v5021 = vsel %vm4989, %v4973, %v5005
    %v5022 = vsel %vm4990, %v4974, %v5006
    %v5023 = vmul.f32 %v5007, %v1729
    %v5024 = vmul.f32 %v5008, %v1730
    %v5025 = vmul.f32 %v5009, %v1731
    %v5026 = vmul.f32 %v5010, %v1732
    %v5027 = vmul.f32 %v5011, %v1733
    %v5028 = vmul.f32 %v5012, %v1734
    %v5029 = vmul.f32 %v5013, %v1735
    %v5030 = vmul.f32 %v5014, %v1736
    %v5031 = vmul.f32 %v5015, %v1737
    %v5032 = vmul.f32 %v5016, %v1738
    %v5033 = vmul.f32 %v5017, %v1739
    %v5034 = vmul.f32 %v5018, %v1740
    %v5035 = vmul.f32 %v5019, %v1741
    %v5036 = vmul.f32 %v5020, %v1742
    %v5037 = vmul.f32 %v5021, %v1743
    %v5038 = vmul.f32 %v5022, %v1744
    %v5039 = vadd.f32 %v5023, %v5027
    %v5040 = vadd.f32 %v5039, %v5031
    %v5041 = vadd.f32 %v5040, %v5035
    %v5042 = vrot.slane %v5041, 4
    %v5043 = vadd.f32 %v5041, %v5042
    %v5044 = vrot.slane %v5043, 2
    %v5045 = vadd.f32 %v5043, %v5044
    %v5046 = vrot.slane %v5045, 1
    %v5047 = vadd.f32 %v5045, %v5046
    %v5048 = vadd.f32 %v5024, %v5028
    %v5049 = vadd.f32 %v5048, %v5032
    %v5050 = vadd.f32 %v5049, %v5036
    %v5051 = vrot.slane %v5050, 4
    %v5052 = vadd.f32 %v5050, %v5051
    %v5053 = vrot.slane %v5052, 2
    %v5054 = vadd.f32 %v5052, %v5053
    %v5055 = vrot.slane %v5054, 1
    %v5056 = vadd.f32 %v5054, %v5055
    %v5057 = vadd.f32 %v5025, %v5029
    %v5058 = vadd.f32 %v5057, %v5033
    %v5059 = vadd.f32 %v5058, %v5037
    %v5060 = vrot.slane %v5059, 4
    %v5061 = vadd.f32 %v5059, %v5060
    %v5062 = vrot.slane %v5061, 2
    %v5063 = vadd.f32 %v5061, %v5062
    %v5064 = vrot.slane %v5063, 1
    %v5065 = vadd.f32 %v5063, %v5064
    %v5066 = vadd.f32 %v5026, %v5030
    %v5067 = vadd.f32 %v5066, %v5034
    %v5068 = vadd.f32 %v5067, %v5038
    %v5069 = vrot.slane %v5068, 4
    %v5070 = vadd.f32 %v5068, %v5069
    %v5071 = vrot.slane %v5070, 2
    %v5072 = vadd.f32 %v5070, %v5071
    %v5073 = vrot.slane %v5072, 1
    %v5074 = vadd.f32 %v5072, %v5073
    %v5075 = vsel %vm2076, %v2620, %v3429
    %v5076 = vsel %vm2076, %v2629, %v3438
    %v5077 = vsel %vm2076, %v2638, %v3447
    %v5078 = vsel %vm2076, %v2647, %v3456
    %vm5079 = vcmask 1041408
    %v5080 = vsel %vm5079, %v5075, %v4238
    %v5081 = vsel %vm5079, %v5076, %v4247
    %v5082 = vsel %vm5079, %v5077, %v4256
    %v5083 = vsel %vm5079, %v5078, %v4265
    %vm5084 = vcmask 1042432
    %v5085 = vsel %vm5084, %v5080, %v5047
    %v5086 = vsel %vm5084, %v5081, %v5056
    %v5087 = vsel %vm5084, %v5082, %v5065
    %v5088 = vsel %vm5084, %v5083, %v5074
    %v5089 = vsel %vm2012, %v5085, 0.0
    %v5090 = vrot.slane %v5089, 4
    %v5091 = vadd.f32 %v5089, %v5090
    %v5092 = vrot.slane %v5091, 2
    %v5093 = vadd.f32 %v5091, %v5092
    %v5094 = vrot.slane %v5093, 1
    %v5095 = vadd.f32 %v5093, %v5094
    %v5096 = vsel %vm2012, %v5086, 0.0
    %v5097 = vrot.slane %v5096, 4
    %v5098 = vadd.f32 %v5096, %v5097
    %v5099 = vrot.slane %v5098, 2
    %v5100 = vadd.f32 %v5098, %v5099
    %v5101 = vrot.slane %v5100, 1
    %v5102 = vadd.f32 %v5100, %v5101
    %v5103 = vsel %vm2012, %v5087, 0.0
    %v5104 = vrot.slane %v5103, 4
    %v5105 = vadd.f32 %v5103, %v5104
    %v5106 = vrot.slane %v5105, 2
    %v5107 = vadd.f32 %v5105, %v5106
    %v5108 = vrot.slane %v5107, 1
    %v5109 = vadd.f32 %v5107, %v5108
    %v5110 = vsel %vm2012, %v5088, 0.0
    %v5111 = vrot.slane %v5110, 4
    %v5112 = vadd.f32 %v5110, %v5111
    %v5113 = vrot.slane %v5112, 2
    %v5114 = vadd.f32 %v5112, %v5113
    %v5115 = vrot.slane %v5114, 1
    %v5116 = vadd.f32 %v5114, %v5115
    %v5117 = vsel %vm2012, %v5085, -inf
    %v5118 = vrot.slane %v5117, 4
    %v5119 = vmax.f32 %v5117, %v5118
    %v5120 = vrot.slane %v5119, 2
    %v5121 = vmax.f32 %v5119, %v5120
    %v5122 = vrot.slane %v5121, 1
    %v5123 = vmax.f32 %v5121, %v5122
    %v5124 = vsel %vm2012, %v5086, -inf
    %v5125 = vrot.slane %v5124, 4
    %v5126 = vmax.f32 %v5124, %v5125
    %v5127 = vrot.slane %v5126, 2
    %v5128 = vmax.f32 %v5126, %v5127
    %v5129 = vrot.slane %v5128, 1
    %v5130 = vmax.f32 %v5128, %v5129
    %v5131 = vsel %vm2012, %v5087, -inf
    %v5132 = vrot.slane %v5131, 4
    %v5133 = vmax.f32 %v5131, %v5132
    %v5134 = vrot.slane %v5133, 2
    %v5135 = vmax.f32 %v5133, %v5134
    %v5136 = vrot.slane %v5135, 1
    %v5137 = vmax.f32 %v5135, %v5136
    %v5138 = vsel %vm2012, %v5088, -inf
    %v5139 = vrot.slane %v5138, 4
    %v5140 = vmax.f32 %v5138, %v5139
    %v5141 = vrot.slane %v5140, 2
    %v5142 = vmax.f32 %v5140, %v5141
    %v5143 = vrot.slane %v5142, 1
    %v5144 = vmax.f32 %v5142, %v5143
    %v5145 = vsub.f32 %v5085, %v5123
    %v5146 = vsub.f32 %v5086, %v5130
    %v5147 = vsub.f32 %v5087, %v5137
    %v5148 = vsub.f32 %v5088, %v5144
    %v5149 = vmul.f32 %v5145, 1.442695
    %v5150 = vpow.pop %v5149
    %v5151 = vmul.f32 %v5146, 1.442695
    %v5152 = vpow.pop %v5151
    %v5153 = vmul.f32 %v5147, 1.442695
    %v5154 = vpow.pop %v5153
    %v5155 = vmul.f32 %v5148, 1.442695
    %v5156 = vpow.pop %v5155
    %v5157 = vsel %vm2012, %v5150, 0.0
    %v5158 = vrot.slane %v5157, 4
    %v5159 = vadd.f32 %v5157, %v5158
    %v5160 = vrot.slane %v5159, 2
    %v5161 = vadd.f32 %v5159, %v5160
    %v5162 = vrot.slane %v5161, 1
    %v5163 = vadd.f32 %v5161, %v5162
    %v5164 = vsel %vm2012, %v5152, 0.0
    %v5165 = vrot.slane %v5164, 4
    %v5166 = vadd.f32 %v5164, %v5165
    %v5167 = vrot.slane %v5166, 2
    %v5168 = vadd.f32 %v5166, %v5167
    %v5169 = vrot.slane %v5168, 1
    %v5170 = vadd.f32 %v5168, %v5169
    %v5171 = vsel %vm2012, %v5154, 0.0
    %v5172 = vrot.slane %v5171, 4
    %v5173 = vadd.f32 %v5171, %v5172
    %v5174 = vrot.slane %v5173, 2
    %v5175 = vadd.f32 %v5173, %v5174
    %v5176 = vrot.slane %v5175, 1
    %v5177 = vadd.f32 %v5175, %v5176
    %v5178 = vsel %vm2012, %v5156, 0.0
    %v5179 = vrot.slane %v5178, 4
    %v5180 = vadd.f32 %v5178, %v5179
    %v5181 = vrot.slane %v5180, 2
    %v5182 = vadd.f32 %v5180, %v5181
    %v5183 = vrot.slane %v5182, 1
    %v5184 = vadd.f32 %v5182, %v5183
    %v5185 = vrcp.pop %v5163
    %v5186 = vmul.f32 %v5163, %v5185
    %v5187 = vsub.f32 1.0, %v5186
    %v5188 = vmul.f32 %v5185, %v5187
    %v5189 = vadd.f32 %v5185, %v5188
    %vm5190 = vweird.f32 %v5163
    %vm5191 = vweird.f32 %v5185
    %vm5192 = vmor %vm5190, %vm5191
    %v5193 = vsel %vm5192, %v5185, %v5189
    %v5194 = vand.u32 2147483647, %v5163
    %vm5195 = vcmp.eq.f32.partialorder %v5194, 8.507059e+37
    %v5196 = vand.u32 %v5163, 2147483648
    %v5197 = vor.u32 1.1754944e-38, %v5196
    %v5198 = vsel %vm5195, %v5197, %v5193
    %v5199 = vmul.f32 1.0, %v5198
    %v5200 = vrcp.pop %v5170
    %v5201 = vmul.f32 %v5170, %v5200
    %v5202 = vsub.f32 1.0, %v5201
    %v5203 = vmul.f32 %v5200, %v5202
    %v5204 = vadd.f32 %v5200, %v5203
    %vm5205 = vweird.f32 %v5170
    %vm5206 = vweird.f32 %v5200
    %vm5207 = vmor %vm5205, %vm5206
    %v5208 = vsel %vm5207, %v5200, %v5204
    %v5209 = vand.u32 2147483647, %v5170
    %vm5210 = vcmp.eq.f32.partialorder %v5209, 8.507059e+37
    %v5211 = vand.u32 %v5170, 2147483648
    %v5212 = vor.u32 1.1754944e-38, %v5211
    %v5213 = vsel %vm5210, %v5212, %v5208
    %v5214 = vmul.f32 1.0, %v5213
    %v5215 = vrcp.pop %v5177
    %v5216 = vmul.f32 %v5177, %v5215
    %v5217 = vsub.f32 1.0, %v5216
    %v5218 = vmul.f32 %v5215, %v5217
    %v5219 = vadd.f32 %v5215, %v5218
    %vm5220 = vweird.f32 %v5177
    %vm5221 = vweird.f32 %v5215
    %vm5222 = vmor %vm5220, %vm5221
    %v5223 = vsel %vm5222, %v5215, %v5219
    %v5224 = vand.u32 2147483647, %v5177
    %vm5225 = vcmp.eq.f32.partialorder %v5224, 8.507059e+37
    %v5226 = vand.u32 %v5177, 2147483648
    %v5227 = vor.u32 1.1754944e-38, %v5226
    %v5228 = vsel %vm5225, %v5227, %v5223
    %v5229 = vmul.f32 1.0, %v5228
    %v5230 = vrcp.pop %v5184
    %v5231 = vmul.f32 %v5184, %v5230
    %v5232 = vsub.f32 1.0, %v5231
    %v5233 = vmul.f32 %v5230, %v5232
    %v5234 = vadd.f32 %v5230, %v5233
    %vm5235 = vweird.f32 %v5184
    %vm5236 = vweird.f32 %v5230
    %vm5237 = vmor %vm5235, %vm5236
    %v5238 = vsel %vm5237, %v5230, %v5234
    %v5239 = vand.u32 2147483647, %v5184
    %vm5240 = vcmp.eq.f32.partialorder %v5239, 8.507059e+37
    %v5241 = vand.u32 %v5184, 2147483648
    %v5242 = vor.u32 1.1754944e-38, %v5241
    %v5243 = vsel %vm5240, %v5242, %v5238
    %v5244 = vmul.f32 1.0, %v5243
    %v5245 = vmul.f32 %v5150, %v5199
    %v5246 = vmul.f32 %v5152, %v5214
    %v5247 = vmul.f32 %v5154, %v5229
    %v5248 = vmul.f32 %v5156, %v5244
    %v5249 = vadd.f32 %v5095, %v1828
    %v5250 = vadd.f32 %v5102, %v1829
    %v5251 = vadd.f32 %v5109, %v1830
    %v5252 = vadd.f32 %v5116, %v1831
    %v5254 = vperm.slane %v70, 0
    %v5255 = vperm.slane %v70, 1
    %v5256 = vperm.slane %v70, 2
    %v5257 = vperm.slane %v70, 3
    %v5262 = vmul.f32 %v5245, %v5254
    %v5263 = vmul.f32 %v5246, %v5255
    %v5264 = vmul.f32 %v5247, %v5256
    %v5265 = vmul.f32 %v5248, %v5257
    %v5270 = vrot.slane %v5262, 7
    %v5271 = vrot.slane %v5263, 7
    %v5272 = vrot.slane %v5264, 7
    %v5273 = vrot.slane %v5265, 7
    %v5278 = vsel %vm2076, %v5249, %v5270
    %v5279 = vsel %vm2076, %v5250, %v5271
    %v5280 = vsel %vm2076, %v5251, %v5272
    %v5281 = vsel %vm2076, %v5252, %v5273
    %5282 = vst [vmem:[#allocation3] sm:$0x1f] %v5278
    %5283 = vst [vmem:[#allocation3 + $0x8] sm:$0x1f] %v5279
    %5284 = vst [vmem:[#allocation3 + $0x10] sm:$0x1f] %v5280
    %5285 = vst [vmem:[#allocation3 + $0x18] sm:$0x1f] %v5281
    // Predicated region
    $region58: #{tpu_custom_call.1} parent=1 // pred_check
      _
    $region59: #{tpu_custom_call.1} parent=1 // pred_check_branch
      %5287 = sbr.rel (0) target = $region61
    $region60: #{tpu_custom_call.1} parent=1 // pred_region
      %5289 = vsyncadd [#allocation4], 0
      %s5291 = sshll.u32 [#allocation3], 4
      %s5292 = int_to_ptr.vmem [resolvable:$true] %s5291
      %s5293 = sshll.u32 %s14, 4
      %s5294 = int_to_ptr.hbm [resolvable:$true] %s5293
      %5296 = dma.vmem_to_hbm [thread:$0]  %s5292, 512, %s5294, [#allocation4]
    $region61: #{tpu_custom_call.1} parent=1 // pred_fallthru
      _
    // Predicated region
    $region62: #{tpu_custom_call.1} parent=1 // pred_check
      _
    $region63: #{tpu_custom_call.1} parent=1 // pred_check_branch
      %5298 = sbr.rel (0) target = $region65
    $region64: #{tpu_custom_call.1} parent=1 // pred_region
      %5300 = dma.done [#allocation4], 512
    $region65: #{tpu_custom_call.1} parent=1 // pred_fallthru
      _
    %5301 = vsyncpa [#allocation4], 1

</llo_original>
